<compile_context>
chip_gen: v7x
topology: tpu7x:2x2x1
jax: 0.10.0
libtpu: 0.0.40
codegen_flags: <defaults>
</compile_context>

<pallas_src>
import math

import jax
import jax.numpy as jnp
from jax import lax
from jax.experimental import pallas as pl
from jax.experimental.pallas import tpu as pltpu

# ---------------- small synthetic config (consistent with the module) -------------
B = 2                      # batch
PATCH_SIZE = 4             # image_patch_size
GRID = 4                   # patches per side (image_num_pos = GRID*GRID)
N = GRID * GRID            # num patches per image = 16
BN = B * N                 # batch folded into rows = 32
P = PATCH_SIZE * PATCH_SIZE * 3   # pixels per patch = 48
E = 64                     # image_emb_dim
H = 2                      # image_num_heads (== image_num_key_value_heads)
HD = E // H                # image_head_dim = 32
MLP = 128                  # image_mlp_dim
NLAYERS = 2                # image_num_layers
EPS = 1e-6                 # image_norm_eps
INIT_RANGE = 0.02          # initializer_range

_SQRT_2_OVER_PI = 0.7978845608028654
_NEG_INF = -1e30


# ------------------------------- kernel --------------------------------------------
def _layernorm(h, g, b):
    mu = jnp.mean(h, axis=-1, keepdims=True)
    var = jnp.mean((h - mu) * (h - mu), axis=-1, keepdims=True)
    return (h - mu) * lax.rsqrt(var + EPS) * g + b


def fused_vit_kernel(
    # constant (re-used every grid step)
    x_ref, pw_ref, pb_ref, pos_ref, bias_ref,
    # per-layer streamed weights (layer dim squeezed by the BlockSpec)
    g1_ref, b1_ref, wq_ref, bq_ref, wk_ref, bk_ref, wv_ref, bv_ref,
    wo_ref, bo_ref, g2_ref, b2_ref, w1_ref, bb1_ref, w2_ref, bb2_ref,
    # output + persistent hidden-state scratch
    out_ref, hid_ref,
):
    """One residual block per grid step; layer 0 also does the patch embedding."""
    layer = pl.program_id(0)

    # ---- patch embedding + positional embedding (only once, before layer 0) ------
    @pl.when(layer == 0)
    def _():
        h0 = jnp.dot(x_ref[...], pw_ref[...], preferred_element_type=jnp.float32)
        hid_ref[...] = h0 + pb_ref[...] + pos_ref[...]

    hid = hid_ref[...]                      # (BN, E) f32, carried across layers
    bias = bias_ref[...]                    # (BN, BN) additive block-diagonal mask

    # ---- attention branch ---------------------------------------------------------
    hn = _layernorm(hid, g1_ref[...], b1_ref[...])
    hn_b = hn.astype(jnp.bfloat16)          # cast only at the dot boundary

    attn = jnp.zeros((BN, E), jnp.float32)
    for h in range(H):
        # per-head weights: lane offset 0, no unaligned slices of a fused qkv.
        q = jnp.dot(hn_b, wq_ref[h], preferred_element_type=jnp.float32) + bq_ref[h]
        k = jnp.dot(hn_b, wk_ref[h], preferred_element_type=jnp.float32) + bk_ref[h]
        v = jnp.dot(hn_b, wv_ref[h], preferred_element_type=jnp.float32) + bv_ref[h]
        # scores for the whole folded batch; cross-batch entries killed by the
        # additive bias *before* the row max (float32_attention semantics).
        s = lax.dot_general(q, k, (((1,), (1,)), ((), ())),
                            preferred_element_type=jnp.float32) + bias   # (BN, BN)
        s = s - jnp.max(s, axis=-1, keepdims=True)
        p = jnp.exp(s)
        p = p * pl.reciprocal(jnp.sum(p, axis=-1, keepdims=True), approx=True)
        ctx = jnp.dot(p, v, preferred_element_type=jnp.float32)          # (BN, HD)
        # per-head output projection accumulated straight into (BN, E)
        attn = attn + jnp.dot(ctx.astype(jnp.bfloat16), wo_ref[h],
                              preferred_element_type=jnp.float32)
    hid = hid + attn + bo_ref[...]                                       # residual

    # ---- MLP branch ----------------------------------------------------------------
    hn2 = _layernorm(hid, g2_ref[...], b2_ref[...])
    m = jnp.dot(hn2.astype(jnp.bfloat16), w1_ref[...],
                preferred_element_type=jnp.float32) + bb1_ref[...]
    # gelu_pytorch_tanh (f32 on the VPU/EUP)
    m = 0.5 * m * (1.0 + jnp.tanh(_SQRT_2_OVER_PI * (m + 0.044715 * m * m * m)))
    hid = hid + jnp.dot(m.astype(jnp.bfloat16), w2_ref[...],
                        preferred_element_type=jnp.float32) + bb2_ref[...]  # fc2 bias!

    hid_ref[...] = hid                      # carry to next layer
    out_ref[...] = hid                      # per-layer hidden state


# ------------------------------- wrapper --------------------------------------------
def _batch_attn_bias():
    """Additive block-diagonal mask: 0 within a batch element, -1e30 across."""
    bid = jnp.arange(BN, dtype=jnp.int32) // N
    same = bid[:, None] == bid[None, :]
    return jnp.where(same, 0.0, _NEG_INF).astype(jnp.float32)


def _prepare_kernel_inputs(x, params):
    """Host-side layout prep: per-head (in,out) weights, bf16 weights, stacked layers."""
    scale = 1.0 / math.sqrt(HD)
    bf16 = jnp.bfloat16

    def per_head_w(w):      # (H*HD, E) torch [out,in] -> (H, E, HD)
        return jnp.stack([w[h * HD:(h + 1) * HD, :].T for h in range(H)], axis=0)

    def per_head_b(b):      # (1, H*HD) -> (H, 1, HD)
        return jnp.stack([b[:, h * HD:(h + 1) * HD] for h in range(H)], axis=0)

    def per_head_wo(w):     # (E, H*HD) torch [out,in] -> (H, HD, E)
        return jnp.stack([w[:, h * HD:(h + 1) * HD].T for h in range(H)], axis=0)

    layers = params["layers"]
    stk = lambda f: jnp.stack([f(l) for l in layers], axis=0)

    return [
        x.reshape(BN, P).astype(bf16),                   # (BN, P)
        params["patch_w"].T.astype(bf16),                # (P, E)
        params["patch_b"],                               # (1, E)
        jnp.tile(params["pos_emb"], (B, 1)),             # (BN, E) pos-emb pre-tiled
        _batch_attn_bias(),                              # (BN, BN)
        stk(lambda l: l[0]),                             # ln1 gamma (NLAYERS,1,E)
        stk(lambda l: l[1]),                             # ln1 beta
        stk(lambda l: per_head_w(l[2]) * scale).astype(bf16),   # wq  (NLAYERS,H,E,HD)
        stk(lambda l: per_head_b(l[3]) * scale),                # bq  (NLAYERS,H,1,HD)
        stk(lambda l: per_head_w(l[4])).astype(bf16),           # wk
        stk(lambda l: per_head_b(l[5])),                        # bk
        stk(lambda l: per_head_w(l[6])).astype(bf16),           # wv
        stk(lambda l: per_head_b(l[7])),                        # bv
        stk(lambda l: per_head_wo(l[8])).astype(bf16),          # wo  (NLAYERS,H,HD,E)
        stk(lambda l: l[9]),                             # bo   (NLAYERS,1,E)
        stk(lambda l: l[10]),                            # ln2 gamma
        stk(lambda l: l[11]),                            # ln2 beta
        stk(lambda l: l[12].T).astype(bf16),             # w1   (NLAYERS,E,MLP)
        stk(lambda l: l[13]),                            # b1   (NLAYERS,1,MLP)
        stk(lambda l: l[14].T).astype(bf16),             # w2   (NLAYERS,MLP,E)
        stk(lambda l: l[15]),                            # b2   (NLAYERS,1,E)
    ]


def siglip_vit_forward(x, params):
    """Returns a list of per-layer hidden states, like BlockCollection.forward."""
    # TODO(synk): bicubic antialiased pos-emb interpolation (add_pos_emb resize path)
    # is not implemented; patch_num matches the stored 4x4 grid so it is never taken.
    inputs = _prepare_kernel_inputs(x, params)

    const = lambda shape: pl.BlockSpec(shape, lambda l: (0,) * len(shape))
    layer3 = lambda d1, d2: pl.BlockSpec((None, d1, d2), lambda l: (l, 0, 0))
    layer4 = lambda d1, d2, d3: pl.BlockSpec((None, d1, d2, d3), lambda l: (l, 0, 0, 0))

    in_specs = [
        const((BN, P)),                      # x (layer 0 only, tiny, kept resident)
        const((P, E)),                       # patch_w
        const((1, E)),                       # patch_b
        const((BN, E)),                      # pos emb
        const((BN, BN)),                     # additive batch mask
        layer3(1, E), layer3(1, E),          # ln1 gamma / beta
        layer4(H, E, HD), layer4(H, 1, HD),  # wq, bq
        layer4(H, E, HD), layer4(H, 1, HD),  # wk, bk
        layer4(H, E, HD), layer4(H, 1, HD),  # wv, bv
        layer4(H, HD, E), layer3(1, E),      # wo, bo
        layer3(1, E), layer3(1, E),          # ln2 gamma / beta
        layer3(E, MLP), layer3(1, MLP),      # w1, b1
        layer3(MLP, E), layer3(1, E),        # w2, b2
    ]
    out_spec = pl.BlockSpec((None, BN, E), lambda l: (l, 0, 0))

    stacked = pl.pallas_call(
        fused_vit_kernel,
        out_shape=jax.ShapeDtypeStruct((NLAYERS, BN, E), jnp.float32),
        grid_spec=pltpu.PrefetchScalarGridSpec(
            num_scalar_prefetch=0,
            grid=(NLAYERS,),
            in_specs=in_specs,
            out_specs=out_spec,
            scratch_shapes=[pltpu.VMEM((BN, E), jnp.float32)],  # persistent hidden state
        ),
        compiler_params=pltpu.CompilerParams(
            # layer axis carries the hidden state -> sequential
            dimension_semantics=("arbitrary",),
            # explicit budget: stays within the 32 MiB default scoped limit and
            # well under v7x's 64 MiB physical VMEM.
            vmem_limit_bytes=32 * 1024 * 1024,
        ),
    )(*inputs)
    return [stacked[l].reshape(B, N, E) for l in range(NLAYERS)]


# ------------------------------- parameter init -------------------------------------
def init_params(key):
    keys = iter(jax.random.split(key, 64))
    f32 = jnp.float32

    def nrm(shape, std):
        return jax.random.normal(next(keys), shape, dtype=f32) * std

    params = {
        "pos_emb": nrm((N, E), E ** -0.5),
        "patch_w": nrm((E, P), 0.02),
        "patch_b": jnp.zeros((1, E), f32),
        "layers": [],
    }
    for _ in range(NLAYERS):
        layer = (
            jnp.ones((1, E), f32), jnp.zeros((1, E), f32),               # ln1 gamma/beta
            nrm((H * HD, E), INIT_RANGE), jnp.zeros((1, H * HD), f32),   # wq, bq
            nrm((H * HD, E), INIT_RANGE), jnp.zeros((1, H * HD), f32),   # wk, bk
            nrm((H * HD, E), INIT_RANGE), jnp.zeros((1, H * HD), f32),   # wv, bv
            nrm((E, H * HD), INIT_RANGE), jnp.zeros((1, E), f32),        # wo, bo
            jnp.ones((1, E), f32), jnp.zeros((1, E), f32),               # ln2 gamma/beta
            nrm((MLP, E), math.sqrt(1.0 / E)), jnp.zeros((1, MLP), f32),   # w1, b1
            nrm((E, MLP), math.sqrt(1.0 / MLP)), jnp.zeros((1, E), f32),   # w2, b2
        )
        params["layers"].append(layer)
    return params


# ------------------------------- pure-JAX reference ---------------------------------
def reference_forward(x, params):
    def ln(h, g, b):
        mu = h.mean(-1, keepdims=True)
        var = ((h - mu) ** 2).mean(-1, keepdims=True)
        return (h - mu) / jnp.sqrt(var + EPS) * g + b

    h = jnp.einsum("bnp,ep->bne", x, params["patch_w"]) + params["patch_b"] \
        + params["pos_emb"][None]
    outs = []
    for (g1, b1, wq, bq, wk, bk, wv, bv, wo, bo, g2, b2, w1, bb1, w2, bb2) in params["layers"]:
        hn = ln(h, g1, b1)
        q = (hn @ wq.T + bq).reshape(B, N, H, HD)
        k = (hn @ wk.T + bk).reshape(B, N, H, HD)
        v = (hn @ wv.T + bv).reshape(B, N, H, HD)
        s = jnp.einsum("bqhd,bkhd->bhqk", q / math.sqrt(HD), k)
        p = jax.nn.softmax(s, axis=-1)
        a = jnp.einsum("bhqk,bkhd->bqhd", p, v).reshape(B, N, E)
        h = h + a @ wo.T + bo
        hn2 = ln(h, g2, b2)
        m = hn2 @ w1.T + bb1
        m = 0.5 * m * (1.0 + jnp.tanh(_SQRT_2_OVER_PI * (m + 0.044715 * m ** 3)))
        h = h + m @ w2.T + bb2
        outs.append(h)
    return outs


# ------------------------------- main -----------------------------------------------
if __name__ == "__main__":
    key = jax.random.PRNGKey(0)
    kx, kp = jax.random.split(key)
    x = jax.random.normal(kx, (B, N, P), dtype=jnp.float32)
    params = init_params(kp)

    hidden_states = siglip_vit_forward(x, params)
    hidden_states = [jax.block_until_ready(h) for h in hidden_states]

    ref_outs = reference_forward(x, params)
    for hs, rf in zip(hidden_states, ref_outs):
        assert hs.shape == (B, N, E)
        # 5e-2 tolerance: projection matmuls take bf16 operands (f32 accumulation),
        # everything elementwise + attention score/prob matmuls stay f32.
        assert jnp.allclose(hs, rf, rtol=5e-2, atol=5e-2), "mismatch vs reference"

    print("KERNEL_OK")
</pallas_src>

<mosaic_0001>
module attributes {stable_mosaic.version = 11 : i64} {
  func.func @fused_vit_kernel(%arg0: i32, %arg1: memref<32x48xbf16, #tpu.memory_space<vmem>>, %arg2: memref<48x64xbf16, #tpu.memory_space<vmem>>, %arg3: memref<1x64xf32, #tpu.memory_space<vmem>>, %arg4: memref<32x64xf32, #tpu.memory_space<vmem>>, %arg5: memref<32x32xf32, #tpu.memory_space<vmem>>, %arg6: memref<1x1x64xf32, #tpu.memory_space<vmem>>, %arg7: memref<1x1x64xf32, #tpu.memory_space<vmem>>, %arg8: memref<1x2x64x32xbf16, #tpu.memory_space<vmem>>, %arg9: memref<1x2x1x32xf32, #tpu.memory_space<vmem>>, %arg10: memref<1x2x64x32xbf16, #tpu.memory_space<vmem>>, %arg11: memref<1x2x1x32xf32, #tpu.memory_space<vmem>>, %arg12: memref<1x2x64x32xbf16, #tpu.memory_space<vmem>>, %arg13: memref<1x2x1x32xf32, #tpu.memory_space<vmem>>, %arg14: memref<1x2x32x64xbf16, #tpu.memory_space<vmem>>, %arg15: memref<1x1x64xf32, #tpu.memory_space<vmem>>, %arg16: memref<1x1x64xf32, #tpu.memory_space<vmem>>, %arg17: memref<1x1x64xf32, #tpu.memory_space<vmem>>, %arg18: memref<1x64x128xbf16, #tpu.memory_space<vmem>>, %arg19: memref<1x1x128xf32, #tpu.memory_space<vmem>>, %arg20: memref<1x128x64xbf16, #tpu.memory_space<vmem>>, %arg21: memref<1x1x64xf32, #tpu.memory_space<vmem>>, %arg22: memref<1x32x64xf32, #tpu.memory_space<vmem>>, %arg23: memref<32x64xf32, #tpu.memory_space<vmem>>) attributes {dimension_semantics = [#tpu.dimension_semantics<arbitrary>], iteration_bounds = array<i64: 2>, scalar_prefetch = 0 : i64, scratch_operands = 1 : i64, tpu.core_type = #tpu.core_type<tc>, window_params = [{pipeline_mode = #tpu.pipeline_mode<synchronous>, transform_indices = @transform_0, window_bounds = array<i64: 32, 48>}, {pipeline_mode = #tpu.pipeline_mode<synchronous>, transform_indices = @transform_1, window_bounds = array<i64: 48, 64>}, {pipeline_mode = #tpu.pipeline_mode<synchronous>, transform_indices = @transform_2, window_bounds = array<i64: 1, 64>}, {pipeline_mode = #tpu.pipeline_mode<synchronous>, transform_indices = @transform_3, window_bounds = array<i64: 32, 64>}, {pipeline_mode = #tpu.pipeline_mode<synchronous>, transform_indices = @transform_4, window_bounds = array<i64: 32, 32>}, {transform_indices = @transform_5, window_bounds = array<i64: 1, 1, 64>}, {transform_indices = @transform_6, window_bounds = array<i64: 1, 1, 64>}, {transform_indices = @transform_7, window_bounds = array<i64: 1, 2, 64, 32>}, {transform_indices = @transform_8, window_bounds = array<i64: 1, 2, 1, 32>}, {transform_indices = @transform_9, window_bounds = array<i64: 1, 2, 64, 32>}, {transform_indices = @transform_10, window_bounds = array<i64: 1, 2, 1, 32>}, {transform_indices = @transform_11, window_bounds = array<i64: 1, 2, 64, 32>}, {transform_indices = @transform_12, window_bounds = array<i64: 1, 2, 1, 32>}, {transform_indices = @transform_13, window_bounds = array<i64: 1, 2, 32, 64>}, {transform_indices = @transform_14, window_bounds = array<i64: 1, 1, 64>}, {transform_indices = @transform_15, window_bounds = array<i64: 1, 1, 64>}, {transform_indices = @transform_16, window_bounds = array<i64: 1, 1, 64>}, {transform_indices = @transform_17, window_bounds = array<i64: 1, 64, 128>}, {transform_indices = @transform_18, window_bounds = array<i64: 1, 1, 128>}, {transform_indices = @transform_19, window_bounds = array<i64: 1, 128, 64>}, {transform_indices = @transform_20, window_bounds = array<i64: 1, 1, 64>}, {transform_indices = @transform_21, window_bounds = array<i64: 1, 32, 64>}]} {
    %c0_i32 = arith.constant 0 : i32
    %0 = arith.cmpi eq, %arg0, %c0_i32 : i32
    %1 = arith.extui %0 : i1 to i32
    %c0_i32_0 = arith.constant 0 : i32
    %2 = arith.cmpi ne, %1, %c0_i32_0 : i32
    scf.if %2 {
      %c0_123 = arith.constant 0 : index
      %c0_124 = arith.constant 0 : index
      %180 = vector.load %arg1[%c0_123, %c0_124] : memref<32x48xbf16, #tpu.memory_space<vmem>>, vector<32x48xbf16>
      %c0_125 = arith.constant 0 : index
      %c0_126 = arith.constant 0 : index
      %181 = vector.load %arg2[%c0_125, %c0_126] : memref<48x64xbf16, #tpu.memory_space<vmem>>, vector<48x64xbf16>
      %cst_127 = arith.constant dense<0.000000e+00> : vector<32x64xf32>
      %182 = tpu.matmul %180, %181, %cst_127 {dimension_numbers = #tpu.dot_dimension_numbers<[1], [0], [0], [1], [0, 0, 1, 1], [], []>} : vector<32x48xbf16>, vector<48x64xbf16>, vector<32x64xf32> -> vector<32x64xf32>
      %c0_128 = arith.constant 0 : index
      %c0_129 = arith.constant 0 : index
      %183 = vector.load %arg3[%c0_128, %c0_129] : memref<1x64xf32, #tpu.memory_space<vmem>>, vector<1x64xf32>
      %184 = vector.broadcast %183 : vector<1x64xf32> to vector<32x64xf32>
      %185 = arith.addf %182, %184 : vector<32x64xf32>
      %c0_130 = arith.constant 0 : index
      %c0_131 = arith.constant 0 : index
      %186 = vector.load %arg4[%c0_130, %c0_131] : memref<32x64xf32, #tpu.memory_space<vmem>>, vector<32x64xf32>
      %187 = arith.addf %185, %186 : vector<32x64xf32>
      %c0_132 = arith.constant 0 : index
      %c0_133 = arith.constant 0 : index
      %188 = vector.load %arg23[%c0_132, %c0_133] : memref<32x64xf32, #tpu.memory_space<vmem>>, vector<32x64xf32>
      tpu.vector_store %arg23[%c0_132, %c0_133], %187 {strides = array<i32>} : memref<32x64xf32, #tpu.memory_space<vmem>>, vector<32x64xf32>,
    } else {
    }
    %c0 = arith.constant 0 : index
    %c0_1 = arith.constant 0 : index
    %3 = vector.load %arg23[%c0, %c0_1] : memref<32x64xf32, #tpu.memory_space<vmem>>, vector<32x64xf32>
    %c0_2 = arith.constant 0 : index
    %c0_3 = arith.constant 0 : index
    %4 = vector.load %arg5[%c0_2, %c0_3] : memref<32x32xf32, #tpu.memory_space<vmem>>, vector<32x32xf32>
    %c0_4 = arith.constant 0 : index
    %c0_5 = arith.constant 0 : index
    %c0_6 = arith.constant 0 : index
    %5 = vector.load %arg6[%c0_4, %c0_5, %c0_6] : memref<1x1x64xf32, #tpu.memory_space<vmem>>, vector<1x1x64xf32>
    %6 = vector.shape_cast %5 : vector<1x1x64xf32> to vector<1x64xf32>
    %c0_7 = arith.constant 0 : index
    %c0_8 = arith.constant 0 : index
    %c0_9 = arith.constant 0 : index
    %7 = vector.load %arg7[%c0_7, %c0_8, %c0_9] : memref<1x1x64xf32, #tpu.memory_space<vmem>>, vector<1x1x64xf32>
    %8 = vector.shape_cast %7 : vector<1x1x64xf32> to vector<1x64xf32>
    %cst = arith.constant dense<0.000000e+00> : vector<32xf32>
    %9 = vector.multi_reduction <add>, %3, %cst [1] : vector<32x64xf32> to vector<32xf32>
    %10 = vector.shape_cast %9 : vector<32xf32> to vector<32x1xf32>
    %cst_10 = arith.constant 6.400000e+01 : f32
    %11 = vector.broadcast %cst_10 : f32 to vector<32x1xf32>
    %12 = arith.divf %10, %11 : vector<32x1xf32>
    %13 = vector.broadcast %12 : vector<32x1xf32> to vector<32x64xf32>
    %14 = arith.subf %3, %13 : vector<32x64xf32>
    %15 = vector.broadcast %12 : vector<32x1xf32> to vector<32x64xf32>
    %16 = arith.subf %3, %15 : vector<32x64xf32>
    %17 = arith.mulf %14, %16 : vector<32x64xf32>
    %cst_11 = arith.constant dense<0.000000e+00> : vector<32xf32>
    %18 = vector.multi_reduction <add>, %17, %cst_11 [1] : vector<32x64xf32> to vector<32xf32>
    %19 = vector.shape_cast %18 : vector<32xf32> to vector<32x1xf32>
    %cst_12 = arith.constant 6.400000e+01 : f32
    %20 = vector.broadcast %cst_12 : f32 to vector<32x1xf32>
    %21 = arith.divf %19, %20 : vector<32x1xf32>
    %22 = vector.broadcast %12 : vector<32x1xf32> to vector<32x64xf32>
    %23 = arith.subf %3, %22 : vector<32x64xf32>
    %cst_13 = arith.constant 9.99999997E-7 : f32
    %24 = vector.broadcast %cst_13 : f32 to vector<32x1xf32>
    %25 = arith.addf %21, %24 : vector<32x1xf32>
    %26 = math.rsqrt %25 : vector<32x1xf32>
    %27 = vector.broadcast %26 : vector<32x1xf32> to vector<32x64xf32>
    %28 = arith.mulf %23, %27 : vector<32x64xf32>
    %29 = vector.broadcast %6 : vector<1x64xf32> to vector<32x64xf32>
    %30 = arith.mulf %28, %29 : vector<32x64xf32>
    %31 = vector.broadcast %8 : vector<1x64xf32> to vector<32x64xf32>
    %32 = arith.addf %30, %31 : vector<32x64xf32>
    %33 = arith.truncf %32 : vector<32x64xf32> to vector<32x64xbf16>
    %cst_14 = arith.constant 0.000000e+00 : f32
    %34 = vector.broadcast %cst_14 : f32 to vector<32x64xf32>
    %c0_15 = arith.constant 0 : index
    %c0_16 = arith.constant 0 : index
    %c0_17 = arith.constant 0 : index
    %c0_18 = arith.constant 0 : index
    %35 = vector.load %arg8[%c0_15, %c0_16, %c0_17, %c0_18] : memref<1x2x64x32xbf16, #tpu.memory_space<vmem>>, vector<1x1x64x32xbf16>
    %36 = vector.shape_cast %35 : vector<1x1x64x32xbf16> to vector<64x32xbf16>
    %cst_19 = arith.constant dense<0.000000e+00> : vector<32x32xf32>
    %37 = tpu.matmul %33, %36, %cst_19 {dimension_numbers = #tpu.dot_dimension_numbers<[1], [0], [0], [1], [0, 0, 1, 1], [], []>} : vector<32x64xbf16>, vector<64x32xbf16>, vector<32x32xf32> -> vector<32x32xf32>
    %c0_20 = arith.constant 0 : index
    %c0_21 = arith.constant 0 : index
    %c0_22 = arith.constant 0 : index
    %c0_23 = arith.constant 0 : index
    %38 = vector.load %arg9[%c0_20, %c0_21, %c0_22, %c0_23] : memref<1x2x1x32xf32, #tpu.memory_space<vmem>>, vector<1x1x1x32xf32>
    %39 = vector.shape_cast %38 : vector<1x1x1x32xf32> to vector<1x32xf32>
    %40 = vector.broadcast %39 : vector<1x32xf32> to vector<32x32xf32>
    %41 = arith.addf %37, %40 : vector<32x32xf32>
    %c0_24 = arith.constant 0 : index
    %c0_25 = arith.constant 0 : index
    %c0_26 = arith.constant 0 : index
    %c0_27 = arith.constant 0 : index
    %42 = vector.load %arg10[%c0_24, %c0_25, %c0_26, %c0_27] : memref<1x2x64x32xbf16, #tpu.memory_space<vmem>>, vector<1x1x64x32xbf16>
    %43 = vector.shape_cast %42 : vector<1x1x64x32xbf16> to vector<64x32xbf16>
    %cst_28 = arith.constant dense<0.000000e+00> : vector<32x32xf32>
    %44 = tpu.matmul %33, %43, %cst_28 {dimension_numbers = #tpu.dot_dimension_numbers<[1], [0], [0], [1], [0, 0, 1, 1], [], []>} : vector<32x64xbf16>, vector<64x32xbf16>, vector<32x32xf32> -> vector<32x32xf32>
    %c0_29 = arith.constant 0 : index
    %c0_30 = arith.constant 0 : index
    %c0_31 = arith.constant 0 : index
    %c0_32 = arith.constant 0 : index
    %45 = vector.load %arg11[%c0_29, %c0_30, %c0_31, %c0_32] : memref<1x2x1x32xf32, #tpu.memory_space<vmem>>, vector<1x1x1x32xf32>
    %46 = vector.shape_cast %45 : vector<1x1x1x32xf32> to vector<1x32xf32>
    %47 = vector.broadcast %46 : vector<1x32xf32> to vector<32x32xf32>
    %48 = arith.addf %44, %47 : vector<32x32xf32>
    %c0_33 = arith.constant 0 : index
    %c0_34 = arith.constant 0 : index
    %c0_35 = arith.constant 0 : index
    %c0_36 = arith.constant 0 : index
    %49 = vector.load %arg12[%c0_33, %c0_34, %c0_35, %c0_36] : memref<1x2x64x32xbf16, #tpu.memory_space<vmem>>, vector<1x1x64x32xbf16>
    %50 = vector.shape_cast %49 : vector<1x1x64x32xbf16> to vector<64x32xbf16>
    %cst_37 = arith.constant dense<0.000000e+00> : vector<32x32xf32>
    %51 = tpu.matmul %33, %50, %cst_37 {dimension_numbers = #tpu.dot_dimension_numbers<[1], [0], [0], [1], [0, 0, 1, 1], [], []>} : vector<32x64xbf16>, vector<64x32xbf16>, vector<32x32xf32> -> vector<32x32xf32>
    %c0_38 = arith.constant 0 : index
    %c0_39 = arith.constant 0 : index
    %c0_40 = arith.constant 0 : index
    %c0_41 = arith.constant 0 : index
    %52 = vector.load %arg13[%c0_38, %c0_39, %c0_40, %c0_41] : memref<1x2x1x32xf32, #tpu.memory_space<vmem>>, vector<1x1x1x32xf32>
    %53 = vector.shape_cast %52 : vector<1x1x1x32xf32> to vector<1x32xf32>
    %54 = vector.broadcast %53 : vector<1x32xf32> to vector<32x32xf32>
    %55 = arith.addf %51, %54 : vector<32x32xf32>
    %cst_42 = arith.constant dense<0.000000e+00> : vector<32x32xf32>
    %56 = tpu.matmul %41, %48, %cst_42 {dimension_numbers = #tpu.dot_dimension_numbers<[1], [1], [0], [0], [0, 0, 1, 0], [], []>} : vector<32x32xf32>, vector<32x32xf32>, vector<32x32xf32> -> vector<32x32xf32>
    %57 = arith.addf %56, %4 : vector<32x32xf32>
    %cst_43 = arith.constant dense<0xFF800000> : vector<32xf32>
    %58 = vector.multi_reduction <maximumf>, %57, %cst_43 [1] : vector<32x32xf32> to vector<32xf32>
    %59 = vector.shape_cast %58 : vector<32xf32> to vector<32x1xf32>
    %60 = vector.broadcast %59 : vector<32x1xf32> to vector<32x32xf32>
    %61 = arith.subf %57, %60 : vector<32x32xf32>
    %62 = math.exp %61 : vector<32x32xf32>
    %cst_44 = arith.constant dense<0.000000e+00> : vector<32xf32>
    %63 = vector.multi_reduction <add>, %62, %cst_44 [1] : vector<32x32xf32> to vector<32xf32>
    %64 = vector.shape_cast %63 : vector<32xf32> to vector<32x1xf32>
    %65 = tpu.reciprocal %64 {approx = true} : vector<32x1xf32> -> vector<32x1xf32>
    %66 = vector.broadcast %65 : vector<32x1xf32> to vector<32x32xf32>
    %67 = arith.mulf %62, %66 : vector<32x32xf32>
    %cst_45 = arith.constant dense<0.000000e+00> : vector<32x32xf32>
    %68 = tpu.matmul %67, %55, %cst_45 {dimension_numbers = #tpu.dot_dimension_numbers<[1], [0], [0], [1], [0, 0, 1, 1], [], []>} : vector<32x32xf32>, vector<32x32xf32>, vector<32x32xf32> -> vector<32x32xf32>
    %69 = arith.truncf %68 : vector<32x32xf32> to vector<32x32xbf16>
    %c0_46 = arith.constant 0 : index
    %c0_47 = arith.constant 0 : index
    %c0_48 = arith.constant 0 : index
    %c0_49 = arith.constant 0 : index
    %70 = vector.load %arg14[%c0_46, %c0_47, %c0_48, %c0_49] : memref<1x2x32x64xbf16, #tpu.memory_space<vmem>>, vector<1x1x32x64xbf16>
    %71 = vector.shape_cast %70 : vector<1x1x32x64xbf16> to vector<32x64xbf16>
    %cst_50 = arith.constant dense<0.000000e+00> : vector<32x64xf32>
    %72 = tpu.matmul %69, %71, %cst_50 {dimension_numbers = #tpu.dot_dimension_numbers<[1], [0], [0], [1], [0, 0, 1, 1], [], []>} : vector<32x32xbf16>, vector<32x64xbf16>, vector<32x64xf32> -> vector<32x64xf32>
    %73 = arith.addf %34, %72 : vector<32x64xf32>
    %c0_51 = arith.constant 0 : index
    %c1 = arith.constant 1 : index
    %c0_52 = arith.constant 0 : index
    %c0_53 = arith.constant 0 : index
    %74 = vector.load %arg8[%c0_51, %c1, %c0_52, %c0_53] : memref<1x2x64x32xbf16, #tpu.memory_space<vmem>>, vector<1x1x64x32xbf16>
    %75 = vector.shape_cast %74 : vector<1x1x64x32xbf16> to vector<64x32xbf16>
    %cst_54 = arith.constant dense<0.000000e+00> : vector<32x32xf32>
    %76 = tpu.matmul %33, %75, %cst_54 {dimension_numbers = #tpu.dot_dimension_numbers<[1], [0], [0], [1], [0, 0, 1, 1], [], []>} : vector<32x64xbf16>, vector<64x32xbf16>, vector<32x32xf32> -> vector<32x32xf32>
    %c0_55 = arith.constant 0 : index
    %c1_56 = arith.constant 1 : index
    %c0_57 = arith.constant 0 : index
    %c0_58 = arith.constant 0 : index
    %77 = vector.load %arg9[%c0_55, %c1_56, %c0_57, %c0_58] : memref<1x2x1x32xf32, #tpu.memory_space<vmem>>, vector<1x1x1x32xf32>
    %78 = vector.shape_cast %77 : vector<1x1x1x32xf32> to vector<1x32xf32>
    %79 = vector.broadcast %78 : vector<1x32xf32> to vector<32x32xf32>
    %80 = arith.addf %76, %79 : vector<32x32xf32>
    %c0_59 = arith.constant 0 : index
    %c1_60 = arith.constant 1 : index
    %c0_61 = arith.constant 0 : index
    %c0_62 = arith.constant 0 : index
    %81 = vector.load %arg10[%c0_59, %c1_60, %c0_61, %c0_62] : memref<1x2x64x32xbf16, #tpu.memory_space<vmem>>, vector<1x1x64x32xbf16>
    %82 = vector.shape_cast %81 : vector<1x1x64x32xbf16> to vector<64x32xbf16>
    %cst_63 = arith.constant dense<0.000000e+00> : vector<32x32xf32>
    %83 = tpu.matmul %33, %82, %cst_63 {dimension_numbers = #tpu.dot_dimension_numbers<[1], [0], [0], [1], [0, 0, 1, 1], [], []>} : vector<32x64xbf16>, vector<64x32xbf16>, vector<32x32xf32> -> vector<32x32xf32>
    %c0_64 = arith.constant 0 : index
    %c1_65 = arith.constant 1 : index
    %c0_66 = arith.constant 0 : index
    %c0_67 = arith.constant 0 : index
    %84 = vector.load %arg11[%c0_64, %c1_65, %c0_66, %c0_67] : memref<1x2x1x32xf32, #tpu.memory_space<vmem>>, vector<1x1x1x32xf32>
    %85 = vector.shape_cast %84 : vector<1x1x1x32xf32> to vector<1x32xf32>
    %86 = vector.broadcast %85 : vector<1x32xf32> to vector<32x32xf32>
    %87 = arith.addf %83, %86 : vector<32x32xf32>
    %c0_68 = arith.constant 0 : index
    %c1_69 = arith.constant 1 : index
    %c0_70 = arith.constant 0 : index
    %c0_71 = arith.constant 0 : index
    %88 = vector.load %arg12[%c0_68, %c1_69, %c0_70, %c0_71] : memref<1x2x64x32xbf16, #tpu.memory_space<vmem>>, vector<1x1x64x32xbf16>
    %89 = vector.shape_cast %88 : vector<1x1x64x32xbf16> to vector<64x32xbf16>
    %cst_72 = arith.constant dense<0.000000e+00> : vector<32x32xf32>
    %90 = tpu.matmul %33, %89, %cst_72 {dimension_numbers = #tpu.dot_dimension_numbers<[1], [0], [0], [1], [0, 0, 1, 1], [], []>} : vector<32x64xbf16>, vector<64x32xbf16>, vector<32x32xf32> -> vector<32x32xf32>
    %c0_73 = arith.constant 0 : index
    %c1_74 = arith.constant 1 : index
    %c0_75 = arith.constant 0 : index
    %c0_76 = arith.constant 0 : index
    %91 = vector.load %arg13[%c0_73, %c1_74, %c0_75, %c0_76] : memref<1x2x1x32xf32, #tpu.memory_space<vmem>>, vector<1x1x1x32xf32>
    %92 = vector.shape_cast %91 : vector<1x1x1x32xf32> to vector<1x32xf32>
    %93 = vector.broadcast %92 : vector<1x32xf32> to vector<32x32xf32>
    %94 = arith.addf %90, %93 : vector<32x32xf32>
    %cst_77 = arith.constant dense<0.000000e+00> : vector<32x32xf32>
    %95 = tpu.matmul %80, %87, %cst_77 {dimension_numbers = #tpu.dot_dimension_numbers<[1], [1], [0], [0], [0, 0, 1, 0], [], []>} : vector<32x32xf32>, vector<32x32xf32>, vector<32x32xf32> -> vector<32x32xf32>
    %96 = arith.addf %95, %4 : vector<32x32xf32>
    %cst_78 = arith.constant dense<0xFF800000> : vector<32xf32>
    %97 = vector.multi_reduction <maximumf>, %96, %cst_78 [1] : vector<32x32xf32> to vector<32xf32>
    %98 = vector.shape_cast %97 : vector<32xf32> to vector<32x1xf32>
    %99 = vector.broadcast %98 : vector<32x1xf32> to vector<32x32xf32>
    %100 = arith.subf %96, %99 : vector<32x32xf32>
    %101 = math.exp %100 : vector<32x32xf32>
    %cst_79 = arith.constant dense<0.000000e+00> : vector<32xf32>
    %102 = vector.multi_reduction <add>, %101, %cst_79 [1] : vector<32x32xf32> to vector<32xf32>
    %103 = vector.shape_cast %102 : vector<32xf32> to vector<32x1xf32>
    %104 = tpu.reciprocal %103 {approx = true} : vector<32x1xf32> -> vector<32x1xf32>
    %105 = vector.broadcast %104 : vector<32x1xf32> to vector<32x32xf32>
    %106 = arith.mulf %101, %105 : vector<32x32xf32>
    %cst_80 = arith.constant dense<0.000000e+00> : vector<32x32xf32>
    %107 = tpu.matmul %106, %94, %cst_80 {dimension_numbers = #tpu.dot_dimension_numbers<[1], [0], [0], [1], [0, 0, 1, 1], [], []>} : vector<32x32xf32>, vector<32x32xf32>, vector<32x32xf32> -> vector<32x32xf32>
    %108 = arith.truncf %107 : vector<32x32xf32> to vector<32x32xbf16>
    %c0_81 = arith.constant 0 : index
    %c1_82 = arith.constant 1 : index
    %c0_83 = arith.constant 0 : index
    %c0_84 = arith.constant 0 : index
    %109 = vector.load %arg14[%c0_81, %c1_82, %c0_83, %c0_84] : memref<1x2x32x64xbf16, #tpu.memory_space<vmem>>, vector<1x1x32x64xbf16>
    %110 = vector.shape_cast %109 : vector<1x1x32x64xbf16> to vector<32x64xbf16>
    %cst_85 = arith.constant dense<0.000000e+00> : vector<32x64xf32>
    %111 = tpu.matmul %108, %110, %cst_85 {dimension_numbers = #tpu.dot_dimension_numbers<[1], [0], [0], [1], [0, 0, 1, 1], [], []>} : vector<32x32xbf16>, vector<32x64xbf16>, vector<32x64xf32> -> vector<32x64xf32>
    %112 = arith.addf %73, %111 : vector<32x64xf32>
    %113 = arith.addf %3, %112 : vector<32x64xf32>
    %c0_86 = arith.constant 0 : index
    %c0_87 = arith.constant 0 : index
    %c0_88 = arith.constant 0 : index
    %114 = vector.load %arg15[%c0_86, %c0_87, %c0_88] : memref<1x1x64xf32, #tpu.memory_space<vmem>>, vector<1x1x64xf32>
    %115 = vector.shape_cast %114 : vector<1x1x64xf32> to vector<1x64xf32>
    %116 = vector.broadcast %115 : vector<1x64xf32> to vector<32x64xf32>
    %117 = arith.addf %113, %116 : vector<32x64xf32>
    %c0_89 = arith.constant 0 : index
    %c0_90 = arith.constant 0 : index
    %c0_91 = arith.constant 0 : index
    %118 = vector.load %arg16[%c0_89, %c0_90, %c0_91] : memref<1x1x64xf32, #tpu.memory_space<vmem>>, vector<1x1x64xf32>
    %119 = vector.shape_cast %118 : vector<1x1x64xf32> to vector<1x64xf32>
    %c0_92 = arith.constant 0 : index
    %c0_93 = arith.constant 0 : index
    %c0_94 = arith.constant 0 : index
    %120 = vector.load %arg17[%c0_92, %c0_93, %c0_94] : memref<1x1x64xf32, #tpu.memory_space<vmem>>, vector<1x1x64xf32>
    %121 = vector.shape_cast %120 : vector<1x1x64xf32> to vector<1x64xf32>
    %cst_95 = arith.constant dense<0.000000e+00> : vector<32xf32>
    %122 = vector.multi_reduction <add>, %117, %cst_95 [1] : vector<32x64xf32> to vector<32xf32>
    %123 = vector.shape_cast %122 : vector<32xf32> to vector<32x1xf32>
    %cst_96 = arith.constant 6.400000e+01 : f32
    %124 = vector.broadcast %cst_96 : f32 to vector<32x1xf32>
    %125 = arith.divf %123, %124 : vector<32x1xf32>
    %126 = vector.broadcast %125 : vector<32x1xf32> to vector<32x64xf32>
    %127 = arith.subf %117, %126 : vector<32x64xf32>
    %128 = vector.broadcast %125 : vector<32x1xf32> to vector<32x64xf32>
    %129 = arith.subf %117, %128 : vector<32x64xf32>
    %130 = arith.mulf %127, %129 : vector<32x64xf32>
    %cst_97 = arith.constant dense<0.000000e+00> : vector<32xf32>
    %131 = vector.multi_reduction <add>, %130, %cst_97 [1] : vector<32x64xf32> to vector<32xf32>
    %132 = vector.shape_cast %131 : vector<32xf32> to vector<32x1xf32>
    %cst_98 = arith.constant 6.400000e+01 : f32
    %133 = vector.broadcast %cst_98 : f32 to vector<32x1xf32>
    %134 = arith.divf %132, %133 : vector<32x1xf32>
    %135 = vector.broadcast %125 : vector<32x1xf32> to vector<32x64xf32>
    %136 = arith.subf %117, %135 : vector<32x64xf32>
    %cst_99 = arith.constant 9.99999997E-7 : f32
    %137 = vector.broadcast %cst_99 : f32 to vector<32x1xf32>
    %138 = arith.addf %134, %137 : vector<32x1xf32>
    %139 = math.rsqrt %138 : vector<32x1xf32>
    %140 = vector.broadcast %139 : vector<32x1xf32> to vector<32x64xf32>
    %141 = arith.mulf %136, %140 : vector<32x64xf32>
    %142 = vector.broadcast %119 : vector<1x64xf32> to vector<32x64xf32>
    %143 = arith.mulf %141, %142 : vector<32x64xf32>
    %144 = vector.broadcast %121 : vector<1x64xf32> to vector<32x64xf32>
    %145 = arith.addf %143, %144 : vector<32x64xf32>
    %146 = arith.truncf %145 : vector<32x64xf32> to vector<32x64xbf16>
    %c0_100 = arith.constant 0 : index
    %c0_101 = arith.constant 0 : index
    %c0_102 = arith.constant 0 : index
    %147 = vector.load %arg18[%c0_100, %c0_101, %c0_102] : memref<1x64x128xbf16, #tpu.memory_space<vmem>>, vector<1x64x128xbf16>
    %148 = vector.shape_cast %147 : vector<1x64x128xbf16> to vector<64x128xbf16>
    %cst_103 = arith.constant dense<0.000000e+00> : vector<32x128xf32>
    %149 = tpu.matmul %146, %148, %cst_103 {dimension_numbers = #tpu.dot_dimension_numbers<[1], [0], [0], [1], [0, 0, 1, 1], [], []>} : vector<32x64xbf16>, vector<64x128xbf16>, vector<32x128xf32> -> vector<32x128xf32>
    %c0_104 = arith.constant 0 : index
    %c0_105 = arith.constant 0 : index
    %c0_106 = arith.constant 0 : index
    %150 = vector.load %arg19[%c0_104, %c0_105, %c0_106] : memref<1x1x128xf32, #tpu.memory_space<vmem>>, vector<1x1x128xf32>
    %151 = vector.shape_cast %150 : vector<1x1x128xf32> to vector<1x128xf32>
    %152 = vector.broadcast %151 : vector<1x128xf32> to vector<32x128xf32>
    %153 = arith.addf %149, %152 : vector<32x128xf32>
    %cst_107 = arith.constant 5.000000e-01 : f32
    %154 = vector.broadcast %cst_107 : f32 to vector<32x128xf32>
    %155 = arith.mulf %154, %153 : vector<32x128xf32>
    %cst_108 = arith.constant 4.471500e-02 : f32
    %156 = vector.broadcast %cst_108 : f32 to vector<32x128xf32>
    %157 = arith.mulf %156, %153 : vector<32x128xf32>
    %158 = arith.mulf %157, %153 : vector<32x128xf32>
    %159 = arith.mulf %158, %153 : vector<32x128xf32>
    %160 = arith.addf %153, %159 : vector<32x128xf32>
    %cst_109 = arith.constant 0.797884583 : f32
    %161 = vector.broadcast %cst_109 : f32 to vector<32x128xf32>
    %162 = arith.mulf %161, %160 : vector<32x128xf32>
    %163 = math.tanh %162 : vector<32x128xf32>
    %cst_110 = arith.constant 1.000000e+00 : f32
    %164 = vector.broadcast %cst_110 : f32 to vector<32x128xf32>
    %165 = arith.addf %164, %163 : vector<32x128xf32>
    %166 = arith.mulf %155, %165 : vector<32x128xf32>
    %167 = arith.truncf %166 : vector<32x128xf32> to vector<32x128xbf16>
    %c0_111 = arith.constant 0 : index
    %c0_112 = arith.constant 0 : index
    %c0_113 = arith.constant 0 : index
    %168 = vector.load %arg20[%c0_111, %c0_112, %c0_113] : memref<1x128x64xbf16, #tpu.memory_space<vmem>>, vector<1x128x64xbf16>
    %169 = vector.shape_cast %168 : vector<1x128x64xbf16> to vector<128x64xbf16>
    %cst_114 = arith.constant dense<0.000000e+00> : vector<32x64xf32>
    %170 = tpu.matmul %167, %169, %cst_114 {dimension_numbers = #tpu.dot_dimension_numbers<[1], [0], [0], [1], [0, 0, 1, 1], [], []>} : vector<32x128xbf16>, vector<128x64xbf16>, vector<32x64xf32> -> vector<32x64xf32>
    %171 = arith.addf %117, %170 : vector<32x64xf32>
    %c0_115 = arith.constant 0 : index
    %c0_116 = arith.constant 0 : index
    %c0_117 = arith.constant 0 : index
    %172 = vector.load %arg21[%c0_115, %c0_116, %c0_117] : memref<1x1x64xf32, #tpu.memory_space<vmem>>, vector<1x1x64xf32>
    %173 = vector.shape_cast %172 : vector<1x1x64xf32> to vector<1x64xf32>
    %174 = vector.broadcast %173 : vector<1x64xf32> to vector<32x64xf32>
    %175 = arith.addf %171, %174 : vector<32x64xf32>
    %c0_118 = arith.constant 0 : index
    %c0_119 = arith.constant 0 : index
    %176 = vector.load %arg23[%c0_118, %c0_119] : memref<32x64xf32, #tpu.memory_space<vmem>>, vector<32x64xf32>
    tpu.vector_store %arg23[%c0_118, %c0_119], %175 {strides = array<i32>} : memref<32x64xf32, #tpu.memory_space<vmem>>, vector<32x64xf32>,
    %c0_120 = arith.constant 0 : index
    %c0_121 = arith.constant 0 : index
    %c0_122 = arith.constant 0 : index
    %177 = vector.load %arg22[%c0_120, %c0_121, %c0_122] : memref<1x32x64xf32, #tpu.memory_space<vmem>>, vector<1x32x64xf32>
    %178 = vector.shape_cast %177 : vector<1x32x64xf32> to vector<32x64xf32>
    %179 = vector.shape_cast %175 : vector<32x64xf32> to vector<1x32x64xf32>
    tpu.vector_store %arg22[%c0_120, %c0_121, %c0_122], %179 {strides = array<i32>} : memref<1x32x64xf32, #tpu.memory_space<vmem>>, vector<1x32x64xf32>,
    return
  }
  func.func @transform_0(%arg0: i32) -> (i32, i32) {
    %c0_i32 = arith.constant 0 : i32
    %c0_i32_0 = arith.constant 0 : i32
    %c0_i32_1 = arith.constant 0 : i32
    return %c0_i32, %c0_i32_0 : i32, i32
  }
  func.func @transform_1(%arg0: i32) -> (i32, i32) {
    %c0_i32 = arith.constant 0 : i32
    %c0_i32_0 = arith.constant 0 : i32
    %c0_i32_1 = arith.constant 0 : i32
    return %c0_i32, %c0_i32_0 : i32, i32
  }
  func.func @transform_2(%arg0: i32) -> (i32, i32) {
    %c0_i32 = arith.constant 0 : i32
    %c0_i32_0 = arith.constant 0 : i32
    %c0_i32_1 = arith.constant 0 : i32
    return %c0_i32, %c0_i32_0 : i32, i32
  }
  func.func @transform_3(%arg0: i32) -> (i32, i32) {
    %c0_i32 = arith.constant 0 : i32
    %c0_i32_0 = arith.constant 0 : i32
    %c0_i32_1 = arith.constant 0 : i32
    return %c0_i32, %c0_i32_0 : i32, i32
  }
  func.func @transform_4(%arg0: i32) -> (i32, i32) {
    %c0_i32 = arith.constant 0 : i32
    %c0_i32_0 = arith.constant 0 : i32
    %c0_i32_1 = arith.constant 0 : i32
    return %c0_i32, %c0_i32_0 : i32, i32
  }
  func.func @transform_5(%arg0: i32) -> (i32, i32, i32) {
    %c0_i32 = arith.constant 0 : i32
    %c0_i32_0 = arith.constant 0 : i32
    %c0_i32_1 = arith.constant 0 : i32
    return %arg0, %c0_i32, %c0_i32_0 : i32, i32, i32
  }
  func.func @transform_6(%arg0: i32) -> (i32, i32, i32) {
    %c0_i32 = arith.constant 0 : i32
    %c0_i32_0 = arith.constant 0 : i32
    %c0_i32_1 = arith.constant 0 : i32
    return %arg0, %c0_i32, %c0_i32_0 : i32, i32, i32
  }
  func.func @transform_7(%arg0: i32) -> (i32, i32, i32, i32) {
    %c0_i32 = arith.constant 0 : i32
    %c0_i32_0 = arith.constant 0 : i32
    %c0_i32_1 = arith.constant 0 : i32
    %c0_i32_2 = arith.constant 0 : i32
    return %arg0, %c0_i32, %c0_i32_0, %c0_i32_1 : i32, i32, i32, i32
  }
  func.func @transform_8(%arg0: i32) -> (i32, i32, i32, i32) {
    %c0_i32 = arith.constant 0 : i32
    %c0_i32_0 = arith.constant 0 : i32
    %c0_i32_1 = arith.constant 0 : i32
    %c0_i32_2 = arith.constant 0 : i32
    return %arg0, %c0_i32, %c0_i32_0, %c0_i32_1 : i32, i32, i32, i32
  }
  func.func @transform_9(%arg0: i32) -> (i32, i32, i32, i32) {
    %c0_i32 = arith.constant 0 : i32
    %c0_i32_0 = arith.constant 0 : i32
    %c0_i32_1 = arith.constant 0 : i32
    %c0_i32_2 = arith.constant 0 : i32
    return %arg0, %c0_i32, %c0_i32_0, %c0_i32_1 : i32, i32, i32, i32
  }
  func.func @transform_10(%arg0: i32) -> (i32, i32, i32, i32) {
    %c0_i32 = arith.constant 0 : i32
    %c0_i32_0 = arith.constant 0 : i32
    %c0_i32_1 = arith.constant 0 : i32
    %c0_i32_2 = arith.constant 0 : i32
    return %arg0, %c0_i32, %c0_i32_0, %c0_i32_1 : i32, i32, i32, i32
  }
  func.func @transform_11(%arg0: i32) -> (i32, i32, i32, i32) {
    %c0_i32 = arith.constant 0 : i32
    %c0_i32_0 = arith.constant 0 : i32
    %c0_i32_1 = arith.constant 0 : i32
    %c0_i32_2 = arith.constant 0 : i32
    return %arg0, %c0_i32, %c0_i32_0, %c0_i32_1 : i32, i32, i32, i32
  }
  func.func @transform_12(%arg0: i32) -> (i32, i32, i32, i32) {
    %c0_i32 = arith.constant 0 : i32
    %c0_i32_0 = arith.constant 0 : i32
    %c0_i32_1 = arith.constant 0 : i32
    %c0_i32_2 = arith.constant 0 : i32
    return %arg0, %c0_i32, %c0_i32_0, %c0_i32_1 : i32, i32, i32, i32
  }
  func.func @transform_13(%arg0: i32) -> (i32, i32, i32, i32) {
    %c0_i32 = arith.constant 0 : i32
    %c0_i32_0 = arith.constant 0 : i32
    %c0_i32_1 = arith.constant 0 : i32
    %c0_i32_2 = arith.constant 0 : i32
    return %arg0, %c0_i32, %c0_i32_0, %c0_i32_1 : i32, i32, i32, i32
  }
  func.func @transform_14(%arg0: i32) -> (i32, i32, i32) {
    %c0_i32 = arith.constant 0 : i32
    %c0_i32_0 = arith.constant 0 : i32
    %c0_i32_1 = arith.constant 0 : i32
    return %arg0, %c0_i32, %c0_i32_0 : i32, i32, i32
  }
  func.func @transform_15(%arg0: i32) -> (i32, i32, i32) {
    %c0_i32 = arith.constant 0 : i32
    %c0_i32_0 = arith.constant 0 : i32
    %c0_i32_1 = arith.constant 0 : i32
    return %arg0, %c0_i32, %c0_i32_0 : i32, i32, i32
  }
  func.func @transform_16(%arg0: i32) -> (i32, i32, i32) {
    %c0_i32 = arith.constant 0 : i32
    %c0_i32_0 = arith.constant 0 : i32
    %c0_i32_1 = arith.constant 0 : i32
    return %arg0, %c0_i32, %c0_i32_0 : i32, i32, i32
  }
  func.func @transform_17(%arg0: i32) -> (i32, i32, i32) {
    %c0_i32 = arith.constant 0 : i32
    %c0_i32_0 = arith.constant 0 : i32
    %c0_i32_1 = arith.constant 0 : i32
    return %arg0, %c0_i32, %c0_i32_0 : i32, i32, i32
  }
  func.func @transform_18(%arg0: i32) -> (i32, i32, i32) {
    %c0_i32 = arith.constant 0 : i32
    %c0_i32_0 = arith.constant 0 : i32
    %c0_i32_1 = arith.constant 0 : i32
    return %arg0, %c0_i32, %c0_i32_0 : i32, i32, i32
  }
  func.func @transform_19(%arg0: i32) -> (i32, i32, i32) {
    %c0_i32 = arith.constant 0 : i32
    %c0_i32_0 = arith.constant 0 : i32
    %c0_i32_1 = arith.constant 0 : i32
    return %arg0, %c0_i32, %c0_i32_0 : i32, i32, i32
  }
  func.func @transform_20(%arg0: i32) -> (i32, i32, i32) {
    %c0_i32 = arith.constant 0 : i32
    %c0_i32_0 = arith.constant 0 : i32
    %c0_i32_1 = arith.constant 0 : i32
    return %arg0, %c0_i32, %c0_i32_0 : i32, i32, i32
  }
  func.func @transform_21(%arg0: i32) -> (i32, i32, i32) {
    %c0_i32 = arith.constant 0 : i32
    %c0_i32_0 = arith.constant 0 : i32
    %c0_i32_1 = arith.constant 0 : i32
    return %arg0, %c0_i32, %c0_i32_0 : i32, i32, i32
  }
}

</mosaic_0001>

<llo_original>
// kernel: tpu_custom_call.1
$region0: #{tpu_custom_call.1}
  #allocation0 [shape = 'u32[]', space=smem, size = 0x4, offset = 0x4, fixed_abs, tag = 'smem constant byte address 0x4 - core index']
  #allocation1 [shape = 'u32[144,128]{1,0:T(1,128)}', space=vmem, size = 0x12000, scoped, tag = 'internal scratch']
  #allocation2 [shape = 'f32[32,64]{1,0:T(8,128)}', space=vmem, size = 0x4000, scoped, tag = 'scratch operand']
  %s0 = inlined_call_operand.vmem [shape: bf16[32,48], index: 0, kind: input, shape index: {}]
  %s1 = inlined_call_operand.vmem [shape: bf16[48,64], index: 1, kind: input, shape index: {}]
  %s2 = inlined_call_operand.vmem [shape: f32[1,64], index: 2, kind: input, shape index: {}]
  %s3 = inlined_call_operand.vmem [shape: f32[32,64], index: 3, kind: input, shape index: {}]
  %s4 = inlined_call_operand.vmem [shape: f32[32,32], index: 4, kind: input, shape index: {}]
  %s5 = inlined_call_operand.vmem [shape: f32[2,1,64], index: 5, kind: input, shape index: {}]
  %s6 = inlined_call_operand.vmem [shape: f32[2,1,64], index: 6, kind: input, shape index: {}]
  %s7 = inlined_call_operand.vmem [shape: bf16[2,2,64,32], index: 7, kind: input, shape index: {}]
  %s8 = inlined_call_operand.vmem [shape: f32[2,2,1,32], index: 8, kind: input, shape index: {}]
  %s9 = inlined_call_operand.vmem [shape: bf16[2,2,64,32], index: 9, kind: input, shape index: {}]
  %s10 = inlined_call_operand.vmem [shape: f32[2,2,1,32], index: 10, kind: input, shape index: {}]
  %s11 = inlined_call_operand.vmem [shape: bf16[2,2,64,32], index: 11, kind: input, shape index: {}]
  %s12 = inlined_call_operand.vmem [shape: f32[2,2,1,32], index: 12, kind: input, shape index: {}]
  %s13 = inlined_call_operand.vmem [shape: bf16[2,2,32,64], index: 13, kind: input, shape index: {}]
  %s14 = inlined_call_operand.vmem [shape: f32[2,1,64], index: 14, kind: input, shape index: {}]
  %s15 = inlined_call_operand.vmem [shape: f32[2,1,64], index: 15, kind: input, shape index: {}]
  %s16 = inlined_call_operand.vmem [shape: f32[2,1,64], index: 16, kind: input, shape index: {}]
  %s17 = inlined_call_operand.vmem [shape: bf16[2,64,128], index: 17, kind: input, shape index: {}]
  %s18 = inlined_call_operand.vmem [shape: f32[2,1,128], index: 18, kind: input, shape index: {}]
  %s19 = inlined_call_operand.vmem [shape: bf16[2,128,64], index: 19, kind: input, shape index: {}]
  %s20 = inlined_call_operand.vmem [shape: f32[2,1,64], index: 20, kind: input, shape index: {}]
  %s21 = inlined_call_operand.hbm [shape: f32[2,32,64], index: 21, kind: output, shape index: {}]
  %s22 = sld [smem:[#allocation0]]
  $region121: #{tpu_custom_call.1} parent=0
    _
  %s24 = ssub.s32 1, %s22
  %s25 = scalar_select 0, %s24, %s22
  $region1: #{tpu_custom_call.1} parent=0
    #allocation3 [shape = 'u8[32768]{0}', space=vmem, size = 0x8000, scoped, tag = 'output window, operand 0']
    #allocation4 [shape = 's32[2]{0}', space=sflag, size = 0x8, scoped, tag = 'scoped memory for tpu_custom_call.1']
    %26 = vsyncpa [#allocation4], 0
    %s27 = scalar_lea.sflag [#allocation4], 1
    %28 = vsyncpa %s27, 0
    loop: start=0, step=1, limit=4
    $region2: #{tpu_custom_call.1} parent=1 // loop_pre_header
      _
    $region3: #{tpu_custom_call.1} parent=1 // loop_header
      %s30 = sphi 0, %s34
      %p31 = scmp.ge.s32.totalorder %s30, 4
      %s38 = sphi 0, %s38
      %s40 = sphi 0, %s38
      %s41 = sphi 0, %s40
      %s55 = sphi 0, %s41
      %s59 = sphi 0, %s59
      %s61 = sphi 0, %s59
      %s62 = sphi 0, %s61
      %s76 = sphi 0, %s62
      %s80 = sphi 0, %s80
      %s82 = sphi 0, %s80
      %s83 = sphi 0, %s82
      %s97 = sphi 0, %s83
      %s101 = sphi 0, %s101
      %s103 = sphi 0, %s101
      %s104 = sphi 0, %s103
      %s118 = sphi 0, %s104
      %s122 = sphi 0, %s122
      %s124 = sphi 0, %s122
      %s125 = sphi 0, %s124
      %s139 = sphi 0, %s125
      %s145 = sphi 0, %s147
      %s148 = sphi 0, %s145
      %s149 = sphi 0, %s148
      %s165 = sphi 0, %s149
      %s171 = sphi 0, %s173
      %s174 = sphi 0, %s171
      %s175 = sphi 0, %s174
      %s191 = sphi 0, %s175
      %s197 = sphi 0, %s199
      %s200 = sphi 0, %s197
      %s201 = sphi 0, %s200
      %s217 = sphi 0, %s201
      %s223 = sphi 0, %s225
      %s226 = sphi 0, %s223
      %s227 = sphi 0, %s226
      %s243 = sphi 0, %s227
      %s249 = sphi 0, %s251
      %s252 = sphi 0, %s249
      %s253 = sphi 0, %s252
      %s269 = sphi 0, %s253
      %s275 = sphi 0, %s277
      %s278 = sphi 0, %s275
      %s279 = sphi 0, %s278
      %s295 = sphi 0, %s279
      %s301 = sphi 0, %s303
      %s304 = sphi 0, %s301
      %s305 = sphi 0, %s304
      %s321 = sphi 0, %s305
      %s327 = sphi 0, %s329
      %s330 = sphi 0, %s327
      %s331 = sphi 0, %s330
      %s347 = sphi 0, %s331
      %s353 = sphi 0, %s355
      %s356 = sphi 0, %s353
      %s357 = sphi 0, %s356
      %s373 = sphi 0, %s357
      %s379 = sphi 0, %s381
      %s382 = sphi 0, %s379
      %s383 = sphi 0, %s382
      %s399 = sphi 0, %s383
      %s405 = sphi 0, %s407
      %s408 = sphi 0, %s405
      %s409 = sphi 0, %s408
      %s425 = sphi 0, %s409
      %s431 = sphi 0, %s433
      %s434 = sphi 0, %s431
      %s435 = sphi 0, %s434
      %s451 = sphi 0, %s435
      %s457 = sphi 0, %s459
      %s460 = sphi 0, %s457
      %s461 = sphi 0, %s460
      %s477 = sphi 0, %s461
      %s483 = sphi 0, %s485
      %s486 = sphi 0, %s483
      %s487 = sphi 0, %s486
      %s503 = sphi 0, %s487
      %s509 = sphi 0, %s511
      %s512 = sphi 0, %s509
      %s513 = sphi 0, %s512
      %s529 = sphi 0, %s513
      %s535 = sphi 0, %s537
      %s538 = sphi 0, %s535
      %s539 = sphi 0, %s538
      %s555 = sphi 0, %s539
      %s561 = sphi 0, %s563
      %s564 = sphi 0, %s561
      %s565 = sphi 0, %s564
      %s581 = sphi 0, %s565
    $region4: #{tpu_custom_call.1} parent=1 // loop_header_branch
      %33 = sbr.rel (%p31) target = $region8
    $region5: #{tpu_custom_call.1} parent=1 // loop_body
      %s35 = ssub.s32 %s30, 1
      %s36 = ssub.s32 %s30, 2
      %s37 = sadd.s32 %s30, 1
      %s39 = sadd.s32 %s38, 1
      %p42 = scmp.eq.s32.totalorder %s30, 1
      %p43 = scmp.ne.s32.totalorder %s38, %s40
      %p44 = scmp.eq.s32.totalorder %s30, 0
      %p45 = por %p43, %p44
      %p46 = scmp.ne.s32.totalorder %s38, %s40
      %p47 = scmp.eq.s32.totalorder %s35, 1
      %p48 = por %p46, %p47
      %p49 = scmp.ne.s32.totalorder %s40, %s41
      %p50 = scmp.eq.s32.totalorder %s35, 0
      %p51 = por %p49, %p50
      %p52 = scmp.ne.s32.totalorder %s40, %s41
      %p53 = scmp.eq.s32.totalorder %s36, 1
      %p54 = por %p52, %p53
      %p56 = scmp.ne.s32.totalorder %s41, %s55
      %p57 = scmp.eq.s32.totalorder %s36, 0
      %p58 = por %p56, %p57
      %s60 = sadd.s32 %s59, 1
      %p63 = scmp.eq.s32.totalorder %s30, 1
      %p64 = scmp.ne.s32.totalorder %s59, %s61
      %p65 = scmp.eq.s32.totalorder %s30, 0
      %p66 = por %p64, %p65
      %p67 = scmp.ne.s32.totalorder %s59, %s61
      %p68 = scmp.eq.s32.totalorder %s35, 1
      %p69 = por %p67, %p68
      %p70 = scmp.ne.s32.totalorder %s61, %s62
      %p71 = scmp.eq.s32.totalorder %s35, 0
      %p72 = por %p70, %p71
      %p73 = scmp.ne.s32.totalorder %s61, %s62
      %p74 = scmp.eq.s32.totalorder %s36, 1
      %p75 = por %p73, %p74
      %p77 = scmp.ne.s32.totalorder %s62, %s76
      %p78 = scmp.eq.s32.totalorder %s36, 0
      %p79 = por %p77, %p78
      %s81 = sadd.s32 %s80, 1
      %p84 = scmp.eq.s32.totalorder %s30, 1
      %p85 = scmp.ne.s32.totalorder %s80, %s82
      %p86 = scmp.eq.s32.totalorder %s30, 0
      %p87 = por %p85, %p86
      %p88 = scmp.ne.s32.totalorder %s80, %s82
      %p89 = scmp.eq.s32.totalorder %s35, 1
      %p90 = por %p88, %p89
      %p91 = scmp.ne.s32.totalorder %s82, %s83
      %p92 = scmp.eq.s32.totalorder %s35, 0
      %p93 = por %p91, %p92
      %p94 = scmp.ne.s32.totalorder %s82, %s83
      %p95 = scmp.eq.s32.totalorder %s36, 1
      %p96 = por %p94, %p95
      %p98 = scmp.ne.s32.totalorder %s83, %s97
      %p99 = scmp.eq.s32.totalorder %s36, 0
      %p100 = por %p98, %p99
      %s102 = sadd.s32 %s101, 1
      %p105 = scmp.eq.s32.totalorder %s30, 1
      %p106 = scmp.ne.s32.totalorder %s101, %s103
      %p107 = scmp.eq.s32.totalorder %s30, 0
      %p108 = por %p106, %p107
      %p109 = scmp.ne.s32.totalorder %s101, %s103
      %p110 = scmp.eq.s32.totalorder %s35, 1
      %p111 = por %p109, %p110
      %p112 = scmp.ne.s32.totalorder %s103, %s104
      %p113 = scmp.eq.s32.totalorder %s35, 0
      %p114 = por %p112, %p113
      %p115 = scmp.ne.s32.totalorder %s103, %s104
      %p116 = scmp.eq.s32.totalorder %s36, 1
      %p117 = por %p115, %p116
      %p119 = scmp.ne.s32.totalorder %s104, %s118
      %p120 = scmp.eq.s32.totalorder %s36, 0
      %p121 = por %p119, %p120
      %s123 = sadd.s32 %s122, 1
      %p126 = scmp.eq.s32.totalorder %s30, 1
      %p127 = scmp.ne.s32.totalorder %s122, %s124
      %p128 = scmp.eq.s32.totalorder %s30, 0
      %p129 = por %p127, %p128
      %p130 = scmp.ne.s32.totalorder %s122, %s124
      %p131 = scmp.eq.s32.totalorder %s35, 1
      %p132 = por %p130, %p131
      %p133 = scmp.ne.s32.totalorder %s124, %s125
      %p134 = scmp.eq.s32.totalorder %s35, 0
      %p135 = por %p133, %p134
      %p136 = scmp.ne.s32.totalorder %s124, %s125
      %p137 = scmp.eq.s32.totalorder %s36, 1
      %p138 = por %p136, %p137
      %p140 = scmp.ne.s32.totalorder %s125, %s139
      %p141 = scmp.eq.s32.totalorder %s36, 0
      %p142 = por %p140, %p141
      %s143 = ssub.s32 %s30, %s37
      %p144 = scmp.eq.s32.totalorder %s143, 0
      %s146 = sadd.s32 %s145, 1
      %s147 = scalar_select %p144, %s145, %s146
      %p150 = pneg %p144
      %p151 = scmp.eq.s32.totalorder %s30, 1
      %p152 = por %p150, %p151
      %p153 = scmp.ne.s32.totalorder %s145, %s148
      %p154 = scmp.eq.s32.totalorder %s30, 0
      %p155 = por %p153, %p154
      %p156 = scmp.ne.s32.totalorder %s145, %s148
      %p157 = scmp.eq.s32.totalorder %s35, 1
      %p158 = por %p156, %p157
      %p159 = scmp.ne.s32.totalorder %s148, %s149
      %p160 = scmp.eq.s32.totalorder %s35, 0
      %p161 = por %p159, %p160
      %p162 = scmp.ne.s32.totalorder %s148, %s149
      %p163 = scmp.eq.s32.totalorder %s36, 1
      %p164 = por %p162, %p163
      %p166 = scmp.ne.s32.totalorder %s149, %s165
      %p167 = scmp.eq.s32.totalorder %s36, 0
      %p168 = por %p166, %p167
      %s169 = ssub.s32 %s30, %s37
      %p170 = scmp.eq.s32.totalorder %s169, 0
      %s172 = sadd.s32 %s171, 1
      %s173 = scalar_select %p170, %s171, %s172
      %p176 = pneg %p170
      %p177 = scmp.eq.s32.totalorder %s30, 1
      %p178 = por %p176, %p177
      %p179 = scmp.ne.s32.totalorder %s171, %s174
      %p180 = scmp.eq.s32.totalorder %s30, 0
      %p181 = por %p179, %p180
      %p182 = scmp.ne.s32.totalorder %s171, %s174
      %p183 = scmp.eq.s32.totalorder %s35, 1
      %p184 = por %p182, %p183
      %p185 = scmp.ne.s32.totalorder %s174, %s175
      %p186 = scmp.eq.s32.totalorder %s35, 0
      %p187 = por %p185, %p186
      %p188 = scmp.ne.s32.totalorder %s174, %s175
      %p189 = scmp.eq.s32.totalorder %s36, 1
      %p190 = por %p188, %p189
      %p192 = scmp.ne.s32.totalorder %s175, %s191
      %p193 = scmp.eq.s32.totalorder %s36, 0
      %p194 = por %p192, %p193
      %s195 = ssub.s32 %s30, %s37
      %p196 = scmp.eq.s32.totalorder %s195, 0
      %s198 = sadd.s32 %s197, 1
      %s199 = scalar_select %p196, %s197, %s198
      %p202 = pneg %p196
      %p203 = scmp.eq.s32.totalorder %s30, 1
      %p204 = por %p202, %p203
      %p205 = scmp.ne.s32.totalorder %s197, %s200
      %p206 = scmp.eq.s32.totalorder %s30, 0
      %p207 = por %p205, %p206
      %p208 = scmp.ne.s32.totalorder %s197, %s200
      %p209 = scmp.eq.s32.totalorder %s35, 1
      %p210 = por %p208, %p209
      %p211 = scmp.ne.s32.totalorder %s200, %s201
      %p212 = scmp.eq.s32.totalorder %s35, 0
      %p213 = por %p211, %p212
      %p214 = scmp.ne.s32.totalorder %s200, %s201
      %p215 = scmp.eq.s32.totalorder %s36, 1
      %p216 = por %p214, %p215
      %p218 = scmp.ne.s32.totalorder %s201, %s217
      %p219 = scmp.eq.s32.totalorder %s36, 0
      %p220 = por %p218, %p219
      %s221 = ssub.s32 %s30, %s37
      %p222 = scmp.eq.s32.totalorder %s221, 0
      %s224 = sadd.s32 %s223, 1
      %s225 = scalar_select %p222, %s223, %s224
      %p228 = pneg %p222
      %p229 = scmp.eq.s32.totalorder %s30, 1
      %p230 = por %p228, %p229
      %p231 = scmp.ne.s32.totalorder %s223, %s226
      %p232 = scmp.eq.s32.totalorder %s30, 0
      %p233 = por %p231, %p232
      %p234 = scmp.ne.s32.totalorder %s223, %s226
      %p235 = scmp.eq.s32.totalorder %s35, 1
      %p236 = por %p234, %p235
      %p237 = scmp.ne.s32.totalorder %s226, %s227
      %p238 = scmp.eq.s32.totalorder %s35, 0
      %p239 = por %p237, %p238
      %p240 = scmp.ne.s32.totalorder %s226, %s227
      %p241 = scmp.eq.s32.totalorder %s36, 1
      %p242 = por %p240, %p241
      %p244 = scmp.ne.s32.totalorder %s227, %s243
      %p245 = scmp.eq.s32.totalorder %s36, 0
      %p246 = por %p244, %p245
      %s247 = ssub.s32 %s30, %s37
      %p248 = scmp.eq.s32.totalorder %s247, 0
      %s250 = sadd.s32 %s249, 1
      %s251 = scalar_select %p248, %s249, %s250
      %p254 = pneg %p248
      %p255 = scmp.eq.s32.totalorder %s30, 1
      %p256 = por %p254, %p255
      %p257 = scmp.ne.s32.totalorder %s249, %s252
      %p258 = scmp.eq.s32.totalorder %s30, 0
      %p259 = por %p257, %p258
      %p260 = scmp.ne.s32.totalorder %s249, %s252
      %p261 = scmp.eq.s32.totalorder %s35, 1
      %p262 = por %p260, %p261
      %p263 = scmp.ne.s32.totalorder %s252, %s253
      %p264 = scmp.eq.s32.totalorder %s35, 0
      %p265 = por %p263, %p264
      %p266 = scmp.ne.s32.totalorder %s252, %s253
      %p267 = scmp.eq.s32.totalorder %s36, 1
      %p268 = por %p266, %p267
      %p270 = scmp.ne.s32.totalorder %s253, %s269
      %p271 = scmp.eq.s32.totalorder %s36, 0
      %p272 = por %p270, %p271
      %s273 = ssub.s32 %s30, %s37
      %p274 = scmp.eq.s32.totalorder %s273, 0
      %s276 = sadd.s32 %s275, 1
      %s277 = scalar_select %p274, %s275, %s276
      %p280 = pneg %p274
      %p281 = scmp.eq.s32.totalorder %s30, 1
      %p282 = por %p280, %p281
      %p283 = scmp.ne.s32.totalorder %s275, %s278
      %p284 = scmp.eq.s32.totalorder %s30, 0
      %p285 = por %p283, %p284
      %p286 = scmp.ne.s32.totalorder %s275, %s278
      %p287 = scmp.eq.s32.totalorder %s35, 1
      %p288 = por %p286, %p287
      %p289 = scmp.ne.s32.totalorder %s278, %s279
      %p290 = scmp.eq.s32.totalorder %s35, 0
      %p291 = por %p289, %p290
      %p292 = scmp.ne.s32.totalorder %s278, %s279
      %p293 = scmp.eq.s32.totalorder %s36, 1
      %p294 = por %p292, %p293
      %p296 = scmp.ne.s32.totalorder %s279, %s295
      %p297 = scmp.eq.s32.totalorder %s36, 0
      %p298 = por %p296, %p297
      %s299 = ssub.s32 %s30, %s37
      %p300 = scmp.eq.s32.totalorder %s299, 0
      %s302 = sadd.s32 %s301, 1
      %s303 = scalar_select %p300, %s301, %s302
      %p306 = pneg %p300
      %p307 = scmp.eq.s32.totalorder %s30, 1
      %p308 = por %p306, %p307
      %p309 = scmp.ne.s32.totalorder %s301, %s304
      %p310 = scmp.eq.s32.totalorder %s30, 0
      %p311 = por %p309, %p310
      %p312 = scmp.ne.s32.totalorder %s301, %s304
      %p313 = scmp.eq.s32.totalorder %s35, 1
      %p314 = por %p312, %p313
      %p315 = scmp.ne.s32.totalorder %s304, %s305
      %p316 = scmp.eq.s32.totalorder %s35, 0
      %p317 = por %p315, %p316
      %p318 = scmp.ne.s32.totalorder %s304, %s305
      %p319 = scmp.eq.s32.totalorder %s36, 1
      %p320 = por %p318, %p319
      %p322 = scmp.ne.s32.totalorder %s305, %s321
      %p323 = scmp.eq.s32.totalorder %s36, 0
      %p324 = por %p322, %p323
      %s325 = ssub.s32 %s30, %s37
      %p326 = scmp.eq.s32.totalorder %s325, 0
      %s328 = sadd.s32 %s327, 1
      %s329 = scalar_select %p326, %s327, %s328
      %p332 = pneg %p326
      %p333 = scmp.eq.s32.totalorder %s30, 1
      %p334 = por %p332, %p333
      %p335 = scmp.ne.s32.totalorder %s327, %s330
      %p336 = scmp.eq.s32.totalorder %s30, 0
      %p337 = por %p335, %p336
      %p338 = scmp.ne.s32.totalorder %s327, %s330
      %p339 = scmp.eq.s32.totalorder %s35, 1
      %p340 = por %p338, %p339
      %p341 = scmp.ne.s32.totalorder %s330, %s331
      %p342 = scmp.eq.s32.totalorder %s35, 0
      %p343 = por %p341, %p342
      %p344 = scmp.ne.s32.totalorder %s330, %s331
      %p345 = scmp.eq.s32.totalorder %s36, 1
      %p346 = por %p344, %p345
      %p348 = scmp.ne.s32.totalorder %s331, %s347
      %p349 = scmp.eq.s32.totalorder %s36, 0
      %p350 = por %p348, %p349
      %s351 = ssub.s32 %s30, %s37
      %p352 = scmp.eq.s32.totalorder %s351, 0
      %s354 = sadd.s32 %s353, 1
      %s355 = scalar_select %p352, %s353, %s354
      %p358 = pneg %p352
      %p359 = scmp.eq.s32.totalorder %s30, 1
      %p360 = por %p358, %p359
      %p361 = scmp.ne.s32.totalorder %s353, %s356
      %p362 = scmp.eq.s32.totalorder %s30, 0
      %p363 = por %p361, %p362
      %p364 = scmp.ne.s32.totalorder %s353, %s356
      %p365 = scmp.eq.s32.totalorder %s35, 1
      %p366 = por %p364, %p365
      %p367 = scmp.ne.s32.totalorder %s356, %s357
      %p368 = scmp.eq.s32.totalorder %s35, 0
      %p369 = por %p367, %p368
      %p370 = scmp.ne.s32.totalorder %s356, %s357
      %p371 = scmp.eq.s32.totalorder %s36, 1
      %p372 = por %p370, %p371
      %p374 = scmp.ne.s32.totalorder %s357, %s373
      %p375 = scmp.eq.s32.totalorder %s36, 0
      %p376 = por %p374, %p375
      %s377 = ssub.s32 %s30, %s37
      %p378 = scmp.eq.s32.totalorder %s377, 0
      %s380 = sadd.s32 %s379, 1
      %s381 = scalar_select %p378, %s379, %s380
      %p384 = pneg %p378
      %p385 = scmp.eq.s32.totalorder %s30, 1
      %p386 = por %p384, %p385
      %p387 = scmp.ne.s32.totalorder %s379, %s382
      %p388 = scmp.eq.s32.totalorder %s30, 0
      %p389 = por %p387, %p388
      %p390 = scmp.ne.s32.totalorder %s379, %s382
      %p391 = scmp.eq.s32.totalorder %s35, 1
      %p392 = por %p390, %p391
      %p393 = scmp.ne.s32.totalorder %s382, %s383
      %p394 = scmp.eq.s32.totalorder %s35, 0
      %p395 = por %p393, %p394
      %p396 = scmp.ne.s32.totalorder %s382, %s383
      %p397 = scmp.eq.s32.totalorder %s36, 1
      %p398 = por %p396, %p397
      %p400 = scmp.ne.s32.totalorder %s383, %s399
      %p401 = scmp.eq.s32.totalorder %s36, 0
      %p402 = por %p400, %p401
      %s403 = ssub.s32 %s30, %s37
      %p404 = scmp.eq.s32.totalorder %s403, 0
      %s406 = sadd.s32 %s405, 1
      %s407 = scalar_select %p404, %s405, %s406
      %p410 = pneg %p404
      %p411 = scmp.eq.s32.totalorder %s30, 1
      %p412 = por %p410, %p411
      %p413 = scmp.ne.s32.totalorder %s405, %s408
      %p414 = scmp.eq.s32.totalorder %s30, 0
      %p415 = por %p413, %p414
      %p416 = scmp.ne.s32.totalorder %s405, %s408
      %p417 = scmp.eq.s32.totalorder %s35, 1
      %p418 = por %p416, %p417
      %p419 = scmp.ne.s32.totalorder %s408, %s409
      %p420 = scmp.eq.s32.totalorder %s35, 0
      %p421 = por %p419, %p420
      %p422 = scmp.ne.s32.totalorder %s408, %s409
      %p423 = scmp.eq.s32.totalorder %s36, 1
      %p424 = por %p422, %p423
      %p426 = scmp.ne.s32.totalorder %s409, %s425
      %p427 = scmp.eq.s32.totalorder %s36, 0
      %p428 = por %p426, %p427
      %s429 = ssub.s32 %s30, %s37
      %p430 = scmp.eq.s32.totalorder %s429, 0
      %s432 = sadd.s32 %s431, 1
      %s433 = scalar_select %p430, %s431, %s432
      %p436 = pneg %p430
      %p437 = scmp.eq.s32.totalorder %s30, 1
      %p438 = por %p436, %p437
      %p439 = scmp.ne.s32.totalorder %s431, %s434
      %p440 = scmp.eq.s32.totalorder %s30, 0
      %p441 = por %p439, %p440
      %p442 = scmp.ne.s32.totalorder %s431, %s434
      %p443 = scmp.eq.s32.totalorder %s35, 1
      %p444 = por %p442, %p443
      %p445 = scmp.ne.s32.totalorder %s434, %s435
      %p446 = scmp.eq.s32.totalorder %s35, 0
      %p447 = por %p445, %p446
      %p448 = scmp.ne.s32.totalorder %s434, %s435
      %p449 = scmp.eq.s32.totalorder %s36, 1
      %p450 = por %p448, %p449
      %p452 = scmp.ne.s32.totalorder %s435, %s451
      %p453 = scmp.eq.s32.totalorder %s36, 0
      %p454 = por %p452, %p453
      %s455 = ssub.s32 %s30, %s37
      %p456 = scmp.eq.s32.totalorder %s455, 0
      %s458 = sadd.s32 %s457, 1
      %s459 = scalar_select %p456, %s457, %s458
      %p462 = pneg %p456
      %p463 = scmp.eq.s32.totalorder %s30, 1
      %p464 = por %p462, %p463
      %p465 = scmp.ne.s32.totalorder %s457, %s460
      %p466 = scmp.eq.s32.totalorder %s30, 0
      %p467 = por %p465, %p466
      %p468 = scmp.ne.s32.totalorder %s457, %s460
      %p469 = scmp.eq.s32.totalorder %s35, 1
      %p470 = por %p468, %p469
      %p471 = scmp.ne.s32.totalorder %s460, %s461
      %p472 = scmp.eq.s32.totalorder %s35, 0
      %p473 = por %p471, %p472
      %p474 = scmp.ne.s32.totalorder %s460, %s461
      %p475 = scmp.eq.s32.totalorder %s36, 1
      %p476 = por %p474, %p475
      %p478 = scmp.ne.s32.totalorder %s461, %s477
      %p479 = scmp.eq.s32.totalorder %s36, 0
      %p480 = por %p478, %p479
      %s481 = ssub.s32 %s30, %s37
      %p482 = scmp.eq.s32.totalorder %s481, 0
      %s484 = sadd.s32 %s483, 1
      %s485 = scalar_select %p482, %s483, %s484
      %p488 = pneg %p482
      %p489 = scmp.eq.s32.totalorder %s30, 1
      %p490 = por %p488, %p489
      %p491 = scmp.ne.s32.totalorder %s483, %s486
      %p492 = scmp.eq.s32.totalorder %s30, 0
      %p493 = por %p491, %p492
      %p494 = scmp.ne.s32.totalorder %s483, %s486
      %p495 = scmp.eq.s32.totalorder %s35, 1
      %p496 = por %p494, %p495
      %p497 = scmp.ne.s32.totalorder %s486, %s487
      %p498 = scmp.eq.s32.totalorder %s35, 0
      %p499 = por %p497, %p498
      %p500 = scmp.ne.s32.totalorder %s486, %s487
      %p501 = scmp.eq.s32.totalorder %s36, 1
      %p502 = por %p500, %p501
      %p504 = scmp.ne.s32.totalorder %s487, %s503
      %p505 = scmp.eq.s32.totalorder %s36, 0
      %p506 = por %p504, %p505
      %s507 = ssub.s32 %s30, %s37
      %p508 = scmp.eq.s32.totalorder %s507, 0
      %s510 = sadd.s32 %s509, 1
      %s511 = scalar_select %p508, %s509, %s510
      %p514 = pneg %p508
      %p515 = scmp.eq.s32.totalorder %s30, 1
      %p516 = por %p514, %p515
      %p517 = scmp.ne.s32.totalorder %s509, %s512
      %p518 = scmp.eq.s32.totalorder %s30, 0
      %p519 = por %p517, %p518
      %p520 = scmp.ne.s32.totalorder %s509, %s512
      %p521 = scmp.eq.s32.totalorder %s35, 1
      %p522 = por %p520, %p521
      %p523 = scmp.ne.s32.totalorder %s512, %s513
      %p524 = scmp.eq.s32.totalorder %s35, 0
      %p525 = por %p523, %p524
      %p526 = scmp.ne.s32.totalorder %s512, %s513
      %p527 = scmp.eq.s32.totalorder %s36, 1
      %p528 = por %p526, %p527
      %p530 = scmp.ne.s32.totalorder %s513, %s529
      %p531 = scmp.eq.s32.totalorder %s36, 0
      %p532 = por %p530, %p531
      %s533 = ssub.s32 %s30, %s37
      %p534 = scmp.eq.s32.totalorder %s533, 0
      %s536 = sadd.s32 %s535, 1
      %s537 = scalar_select %p534, %s535, %s536
      %p540 = pneg %p534
      %p541 = scmp.eq.s32.totalorder %s30, 1
      %p542 = por %p540, %p541
      %p543 = scmp.ne.s32.totalorder %s535, %s538
      %p544 = scmp.eq.s32.totalorder %s30, 0
      %p545 = por %p543, %p544
      %p546 = scmp.ne.s32.totalorder %s535, %s538
      %p547 = scmp.eq.s32.totalorder %s35, 1
      %p548 = por %p546, %p547
      %p549 = scmp.ne.s32.totalorder %s538, %s539
      %p550 = scmp.eq.s32.totalorder %s35, 0
      %p551 = por %p549, %p550
      %p552 = scmp.ne.s32.totalorder %s538, %s539
      %p553 = scmp.eq.s32.totalorder %s36, 1
      %p554 = por %p552, %p553
      %p556 = scmp.ne.s32.totalorder %s539, %s555
      %p557 = scmp.eq.s32.totalorder %s36, 0
      %p558 = por %p556, %p557
      %s559 = ssub.s32 %s30, %s37
      %p560 = scmp.eq.s32.totalorder %s559, 0
      %s562 = sadd.s32 %s561, 1
      %s563 = scalar_select %p560, %s561, %s562
      %p566 = pneg %p560
      %p567 = scmp.eq.s32.totalorder %s30, 1
      %p568 = por %p566, %p567
      %p569 = scmp.ne.s32.totalorder %s561, %s564
      %p570 = scmp.eq.s32.totalorder %s30, 0
      %p571 = por %p569, %p570
      %p572 = scmp.ne.s32.totalorder %s561, %s564
      %p573 = scmp.eq.s32.totalorder %s35, 1
      %p574 = por %p572, %p573
      %p575 = scmp.ne.s32.totalorder %s564, %s565
      %p576 = scmp.eq.s32.totalorder %s35, 0
      %p577 = por %p575, %p576
      %p578 = scmp.ne.s32.totalorder %s564, %s565
      %p579 = scmp.eq.s32.totalorder %s36, 1
      %p580 = por %p578, %p579
      %p582 = scmp.ne.s32.totalorder %s565, %s581
      %p583 = scmp.eq.s32.totalorder %s36, 0
      %p584 = por %p582, %p583
      %p585 = scmp.le.s32.totalorder 1, %s30
      %p586 = scmp.lt.s32.totalorder %s30, 3
      %p587 = pnand %p585, %p586
      %p588 = pneg %p587
      // Predicated region
      $region9: #{tpu_custom_call.1} parent=5 // pred_check
        _
      $region10: #{tpu_custom_call.1} parent=5 // pred_check_branch
        %590 = sbr.rel (%p587) target = $region12
      $region11: #{tpu_custom_call.1} parent=5 // pred_region
        %s591 = ssub.s32 %s30, 1
        // Predicated region
        $region13: #{tpu_custom_call.1} parent=11 // pred_check
          %p592 = pneg %p51
        $region14: #{tpu_custom_call.1} parent=11 // pred_check_branch
          %594 = sbr.rel (%p592) target = $region16
        $region15: #{tpu_custom_call.1} parent=11 // pred_region
          _
        $region16: #{tpu_custom_call.1} parent=11 // pred_fallthru
          _
        // Predicated region
        $region17: #{tpu_custom_call.1} parent=11 // pred_check
          %p595 = pneg %p72
        $region18: #{tpu_custom_call.1} parent=11 // pred_check_branch
          %597 = sbr.rel (%p595) target = $region20
        $region19: #{tpu_custom_call.1} parent=11 // pred_region
          _
        $region20: #{tpu_custom_call.1} parent=11 // pred_fallthru
          _
        // Predicated region
        $region21: #{tpu_custom_call.1} parent=11 // pred_check
          %p598 = pneg %p93
        $region22: #{tpu_custom_call.1} parent=11 // pred_check_branch
          %600 = sbr.rel (%p598) target = $region24
        $region23: #{tpu_custom_call.1} parent=11 // pred_region
          _
        $region24: #{tpu_custom_call.1} parent=11 // pred_fallthru
          _
        // Predicated region
        $region25: #{tpu_custom_call.1} parent=11 // pred_check
          %p601 = pneg %p114
        $region26: #{tpu_custom_call.1} parent=11 // pred_check_branch
          %603 = sbr.rel (%p601) target = $region28
        $region27: #{tpu_custom_call.1} parent=11 // pred_region
          _
        $region28: #{tpu_custom_call.1} parent=11 // pred_fallthru
          _
        // Predicated region
        $region29: #{tpu_custom_call.1} parent=11 // pred_check
          %p604 = pneg %p135
        $region30: #{tpu_custom_call.1} parent=11 // pred_check_branch
          %606 = sbr.rel (%p604) target = $region32
        $region31: #{tpu_custom_call.1} parent=11 // pred_region
          _
        $region32: #{tpu_custom_call.1} parent=11 // pred_fallthru
          _
      $region12: #{tpu_custom_call.1} parent=5 // pred_fallthru
        _
      %p607 = scmp.lt.s32.totalorder %s30, 2
      // Predicated region
      $region33: #{tpu_custom_call.1} parent=5 // pred_check
        %p608 = pneg %p607
      $region34: #{tpu_custom_call.1} parent=5 // pred_check_branch
        %610 = sbr.rel (%p608) target = $region36
      $region35: #{tpu_custom_call.1} parent=5 // pred_region
        // Predicated region
        $region37: #{tpu_custom_call.1} parent=35 // pred_check
          %p611 = pneg %p155
        $region38: #{tpu_custom_call.1} parent=35 // pred_check_branch
          %613 = sbr.rel (%p611) target = $region40
        $region39: #{tpu_custom_call.1} parent=35 // pred_region
          %p614 = scmp.lt.s32.totalorder %s30, 1
          %s615 = scalar_select %p614, %s30, 1
          %s616 = scalar_lea.vmem %s5, %s615
        $region40: #{tpu_custom_call.1} parent=35 // pred_fallthru
          _
        // Predicated region
        $region41: #{tpu_custom_call.1} parent=35 // pred_check
          %p617 = pneg %p181
        $region42: #{tpu_custom_call.1} parent=35 // pred_check_branch
          %619 = sbr.rel (%p617) target = $region44
        $region43: #{tpu_custom_call.1} parent=35 // pred_region
          %p620 = scmp.lt.s32.totalorder %s30, 1
          %s621 = scalar_select %p620, %s30, 1
          %s622 = scalar_lea.vmem %s6, %s621
        $region44: #{tpu_custom_call.1} parent=35 // pred_fallthru
          _
        // Predicated region
        $region45: #{tpu_custom_call.1} parent=35 // pred_check
          %p623 = pneg %p207
        $region46: #{tpu_custom_call.1} parent=35 // pred_check_branch
          %625 = sbr.rel (%p623) target = $region48
        $region47: #{tpu_custom_call.1} parent=35 // pred_region
          %p626 = scmp.lt.s32.totalorder %s30, 1
          %s627 = scalar_select %p626, %s30, 1
          %s628 = smul.addr %s627, 16
          %s629 = smul.addr %s628, 4
          %s630 = scalar_lea.vmem %s7, %s629
        $region48: #{tpu_custom_call.1} parent=35 // pred_fallthru
          _
        // Predicated region
        $region49: #{tpu_custom_call.1} parent=35 // pred_check
          %p631 = pneg %p233
        $region50: #{tpu_custom_call.1} parent=35 // pred_check_branch
          %633 = sbr.rel (%p631) target = $region52
        $region51: #{tpu_custom_call.1} parent=35 // pred_region
          %p634 = scmp.lt.s32.totalorder %s30, 1
          %s635 = scalar_select %p634, %s30, 1
          %s636 = smul.addr %s635, 2
          %s637 = scalar_lea.vmem %s8, %s636
        $region52: #{tpu_custom_call.1} parent=35 // pred_fallthru
          _
        // Predicated region
        $region53: #{tpu_custom_call.1} parent=35 // pred_check
          %p638 = pneg %p259
        $region54: #{tpu_custom_call.1} parent=35 // pred_check_branch
          %640 = sbr.rel (%p638) target = $region56
        $region55: #{tpu_custom_call.1} parent=35 // pred_region
          %p641 = scmp.lt.s32.totalorder %s30, 1
          %s642 = scalar_select %p641, %s30, 1
          %s643 = smul.addr %s642, 16
          %s644 = smul.addr %s643, 4
          %s645 = scalar_lea.vmem %s9, %s644
        $region56: #{tpu_custom_call.1} parent=35 // pred_fallthru
          _
        // Predicated region
        $region57: #{tpu_custom_call.1} parent=35 // pred_check
          %p646 = pneg %p285
        $region58: #{tpu_custom_call.1} parent=35 // pred_check_branch
          %648 = sbr.rel (%p646) target = $region60
        $region59: #{tpu_custom_call.1} parent=35 // pred_region
          %p649 = scmp.lt.s32.totalorder %s30, 1
          %s650 = scalar_select %p649, %s30, 1
          %s651 = smul.addr %s650, 2
          %s652 = scalar_lea.vmem %s10, %s651
        $region60: #{tpu_custom_call.1} parent=35 // pred_fallthru
          _
        // Predicated region
        $region61: #{tpu_custom_call.1} parent=35 // pred_check
          %p653 = pneg %p311
        $region62: #{tpu_custom_call.1} parent=35 // pred_check_branch
          %655 = sbr.rel (%p653) target = $region64
        $region63: #{tpu_custom_call.1} parent=35 // pred_region
          %p656 = scmp.lt.s32.totalorder %s30, 1
          %s657 = scalar_select %p656, %s30, 1
          %s658 = smul.addr %s657, 16
          %s659 = smul.addr %s658, 4
          %s660 = scalar_lea.vmem %s11, %s659
        $region64: #{tpu_custom_call.1} parent=35 // pred_fallthru
          _
        // Predicated region
        $region65: #{tpu_custom_call.1} parent=35 // pred_check
          %p661 = pneg %p337
        $region66: #{tpu_custom_call.1} parent=35 // pred_check_branch
          %663 = sbr.rel (%p661) target = $region68
        $region67: #{tpu_custom_call.1} parent=35 // pred_region
          %p664 = scmp.lt.s32.totalorder %s30, 1
          %s665 = scalar_select %p664, %s30, 1
          %s666 = smul.addr %s665, 2
          %s667 = scalar_lea.vmem %s12, %s666
        $region68: #{tpu_custom_call.1} parent=35 // pred_fallthru
          _
        // Predicated region
        $region69: #{tpu_custom_call.1} parent=35 // pred_check
          %p668 = pneg %p363
        $region70: #{tpu_custom_call.1} parent=35 // pred_check_branch
          %670 = sbr.rel (%p668) target = $region72
        $region71: #{tpu_custom_call.1} parent=35 // pred_region
          %p671 = scmp.lt.s32.totalorder %s30, 1
          %s672 = scalar_select %p671, %s30, 1
          %s673 = smul.addr %s672, 8
          %s674 = smul.addr %s673, 4
          %s675 = scalar_lea.vmem %s13, %s674
        $region72: #{tpu_custom_call.1} parent=35 // pred_fallthru
          _
        // Predicated region
        $region73: #{tpu_custom_call.1} parent=35 // pred_check
          %p676 = pneg %p389
        $region74: #{tpu_custom_call.1} parent=35 // pred_check_branch
          %678 = sbr.rel (%p676) target = $region76
        $region75: #{tpu_custom_call.1} parent=35 // pred_region
          %p679 = scmp.lt.s32.totalorder %s30, 1
          %s680 = scalar_select %p679, %s30, 1
          %s681 = scalar_lea.vmem %s14, %s680
        $region76: #{tpu_custom_call.1} parent=35 // pred_fallthru
          _
        // Predicated region
        $region77: #{tpu_custom_call.1} parent=35 // pred_check
          %p682 = pneg %p415
        $region78: #{tpu_custom_call.1} parent=35 // pred_check_branch
          %684 = sbr.rel (%p682) target = $region80
        $region79: #{tpu_custom_call.1} parent=35 // pred_region
          %p685 = scmp.lt.s32.totalorder %s30, 1
          %s686 = scalar_select %p685, %s30, 1
          %s687 = scalar_lea.vmem %s15, %s686
        $region80: #{tpu_custom_call.1} parent=35 // pred_fallthru
          _
        // Predicated region
        $region81: #{tpu_custom_call.1} parent=35 // pred_check
          %p688 = pneg %p441
        $region82: #{tpu_custom_call.1} parent=35 // pred_check_branch
          %690 = sbr.rel (%p688) target = $region84
        $region83: #{tpu_custom_call.1} parent=35 // pred_region
          %p691 = scmp.lt.s32.totalorder %s30, 1
          %s692 = scalar_select %p691, %s30, 1
          %s693 = scalar_lea.vmem %s16, %s692
        $region84: #{tpu_custom_call.1} parent=35 // pred_fallthru
          _
        // Predicated region
        $region85: #{tpu_custom_call.1} parent=35 // pred_check
          %p694 = pneg %p467
        $region86: #{tpu_custom_call.1} parent=35 // pred_check_branch
          %696 = sbr.rel (%p694) target = $region88
        $region87: #{tpu_custom_call.1} parent=35 // pred_region
          %p697 = scmp.lt.s32.totalorder %s30, 1
          %s698 = scalar_select %p697, %s30, 1
          %s699 = smul.addr %s698, 8
          %s700 = smul.addr %s699, 4
          %s701 = scalar_lea.vmem %s17, %s700
        $region88: #{tpu_custom_call.1} parent=35 // pred_fallthru
          _
        // Predicated region
        $region89: #{tpu_custom_call.1} parent=35 // pred_check
          %p702 = pneg %p493
        $region90: #{tpu_custom_call.1} parent=35 // pred_check_branch
          %704 = sbr.rel (%p702) target = $region92
        $region91: #{tpu_custom_call.1} parent=35 // pred_region
          %p705 = scmp.lt.s32.totalorder %s30, 1
          %s706 = scalar_select %p705, %s30, 1
          %s707 = scalar_lea.vmem %s18, %s706
        $region92: #{tpu_custom_call.1} parent=35 // pred_fallthru
          _
        // Predicated region
        $region93: #{tpu_custom_call.1} parent=35 // pred_check
          %p708 = pneg %p519
        $region94: #{tpu_custom_call.1} parent=35 // pred_check_branch
          %710 = sbr.rel (%p708) target = $region96
        $region95: #{tpu_custom_call.1} parent=35 // pred_region
          %p711 = scmp.lt.s32.totalorder %s30, 1
          %s712 = scalar_select %p711, %s30, 1
          %s713 = smul.addr %s712, 16
          %s714 = smul.addr %s713, 4
          %s715 = scalar_lea.vmem %s19, %s714
        $region96: #{tpu_custom_call.1} parent=35 // pred_fallthru
          _
        // Predicated region
        $region97: #{tpu_custom_call.1} parent=35 // pred_check
          %p716 = pneg %p545
        $region98: #{tpu_custom_call.1} parent=35 // pred_check_branch
          %718 = sbr.rel (%p716) target = $region100
        $region99: #{tpu_custom_call.1} parent=35 // pred_region
          %p719 = scmp.lt.s32.totalorder %s30, 1
          %s720 = scalar_select %p719, %s30, 1
          %s721 = scalar_lea.vmem %s20, %s720
        $region100: #{tpu_custom_call.1} parent=35 // pred_fallthru
          _
      $region36: #{tpu_custom_call.1} parent=5 // pred_fallthru
        _
      %p722 = scmp.le.s32.totalorder 1, %s30
      %p723 = scmp.lt.s32.totalorder %s30, 3
      %p724 = pnand %p722, %p723
      %p725 = pneg %p724
      // Predicated region
      $region101: #{tpu_custom_call.1} parent=5 // pred_check
        _
      $region102: #{tpu_custom_call.1} parent=5 // pred_check_branch
        %727 = sbr.rel (%p724) target = $region104
      $region103: #{tpu_custom_call.1} parent=5 // pred_region
        %s728 = ssub.s32 %s30, 1
        %p729 = pneg %p51
        %p730 = pneg %p48
        %p731 = pneg %p72
        %p732 = pneg %p69
        %p733 = pneg %p93
        %p734 = pneg %p90
        %p735 = pneg %p114
        %p736 = pneg %p111
        %p737 = pneg %p135
        %p738 = pneg %p132
        %p739 = scmp.lt.s32.totalorder %s35, 1
        %s740 = scalar_select %p739, %s35, 1
        %s741 = scalar_lea.vmem %s5, %s740
        %p742 = pneg %p161
        %p743 = pneg %p158
        %p744 = scmp.lt.s32.totalorder %s35, 1
        %s745 = scalar_select %p744, %s35, 1
        %s746 = scalar_lea.vmem %s6, %s745
        %p747 = pneg %p187
        %p748 = pneg %p184
        %p749 = scmp.lt.s32.totalorder %s35, 1
        %s750 = scalar_select %p749, %s35, 1
        %s751 = smul.addr %s750, 16
        %s752 = smul.addr %s751, 4
        %s753 = scalar_lea.vmem %s7, %s752
        %p754 = pneg %p213
        %p755 = pneg %p210
        %p756 = scmp.lt.s32.totalorder %s35, 1
        %s757 = scalar_select %p756, %s35, 1
        %s758 = smul.addr %s757, 2
        %s759 = scalar_lea.vmem %s8, %s758
        %p760 = pneg %p239
        %p761 = pneg %p236
        %p762 = scmp.lt.s32.totalorder %s35, 1
        %s763 = scalar_select %p762, %s35, 1
        %s764 = smul.addr %s763, 16
        %s765 = smul.addr %s764, 4
        %s766 = scalar_lea.vmem %s9, %s765
        %p767 = pneg %p265
        %p768 = pneg %p262
        %p769 = scmp.lt.s32.totalorder %s35, 1
        %s770 = scalar_select %p769, %s35, 1
        %s771 = smul.addr %s770, 2
        %s772 = scalar_lea.vmem %s10, %s771
        %p773 = pneg %p291
        %p774 = pneg %p288
        %p775 = scmp.lt.s32.totalorder %s35, 1
        %s776 = scalar_select %p775, %s35, 1
        %s777 = smul.addr %s776, 16
        %s778 = smul.addr %s777, 4
        %s779 = scalar_lea.vmem %s11, %s778
        %p780 = pneg %p317
        %p781 = pneg %p314
        %p782 = scmp.lt.s32.totalorder %s35, 1
        %s783 = scalar_select %p782, %s35, 1
        %s784 = smul.addr %s783, 2
        %s785 = scalar_lea.vmem %s12, %s784
        %p786 = pneg %p343
        %p787 = pneg %p340
        %p788 = scmp.lt.s32.totalorder %s35, 1
        %s789 = scalar_select %p788, %s35, 1
        %s790 = smul.addr %s789, 8
        %s791 = smul.addr %s790, 4
        %s792 = scalar_lea.vmem %s13, %s791
        %p793 = pneg %p369
        %p794 = pneg %p366
        %p795 = scmp.lt.s32.totalorder %s35, 1
        %s796 = scalar_select %p795, %s35, 1
        %s797 = scalar_lea.vmem %s14, %s796
        %p798 = pneg %p395
        %p799 = pneg %p392
        %p800 = scmp.lt.s32.totalorder %s35, 1
        %s801 = scalar_select %p800, %s35, 1
        %s802 = scalar_lea.vmem %s15, %s801
        %p803 = pneg %p421
        %p804 = pneg %p418
        %p805 = scmp.lt.s32.totalorder %s35, 1
        %s806 = scalar_select %p805, %s35, 1
        %s807 = scalar_lea.vmem %s16, %s806
        %p808 = pneg %p447
        %p809 = pneg %p444
        %p810 = scmp.lt.s32.totalorder %s35, 1
        %s811 = scalar_select %p810, %s35, 1
        %s812 = smul.addr %s811, 8
        %s813 = smul.addr %s812, 4
        %s814 = scalar_lea.vmem %s17, %s813
        %p815 = pneg %p473
        %p816 = pneg %p470
        %p817 = scmp.lt.s32.totalorder %s35, 1
        %s818 = scalar_select %p817, %s35, 1
        %s819 = scalar_lea.vmem %s18, %s818
        %p820 = pneg %p499
        %p821 = pneg %p496
        %p822 = scmp.lt.s32.totalorder %s35, 1
        %s823 = scalar_select %p822, %s35, 1
        %s824 = smul.addr %s823, 16
        %s825 = smul.addr %s824, 4
        %s826 = scalar_lea.vmem %s19, %s825
        %p827 = pneg %p525
        %p828 = pneg %p522
        %p829 = scmp.lt.s32.totalorder %s35, 1
        %s830 = scalar_select %p829, %s35, 1
        %s831 = scalar_lea.vmem %s20, %s830
        %p832 = pneg %p551
        %p833 = pneg %p548
        %p834 = pneg %p577
        %p835 = pneg %p574
        %s836 = sand.u32 %s564, 1
        %s837 = scalar_lea.sflag [#allocation4], %s836
        %s838 = sand.u32 %s564, 1
        %s839 = smul.addr %s838, 32
        %s840 = scalar_lea.vmem [#allocation3], %s839
        %p841 = scmp.lt.s32.totalorder %s35, 1
        %s842 = scalar_select %p841, %s35, 1
        %s843 = scalar_lea.vmem %s5, %s842
        %p844 = scmp.lt.s32.totalorder %s35, 1
        %s845 = scalar_select %p844, %s35, 1
        %s846 = scalar_lea.vmem %s6, %s845
        %p847 = scmp.lt.s32.totalorder %s35, 1
        %s848 = scalar_select %p847, %s35, 1
        %s849 = smul.addr %s848, 16
        %s850 = smul.addr %s849, 4
        %s851 = scalar_lea.vmem %s7, %s850
        %p852 = scmp.lt.s32.totalorder %s35, 1
        %s853 = scalar_select %p852, %s35, 1
        %s854 = smul.addr %s853, 2
        %s855 = scalar_lea.vmem %s8, %s854
        %p856 = scmp.lt.s32.totalorder %s35, 1
        %s857 = scalar_select %p856, %s35, 1
        %s858 = smul.addr %s857, 16
        %s859 = smul.addr %s858, 4
        %s860 = scalar_lea.vmem %s9, %s859
        %p861 = scmp.lt.s32.totalorder %s35, 1
        %s862 = scalar_select %p861, %s35, 1
        %s863 = smul.addr %s862, 2
        %s864 = scalar_lea.vmem %s10, %s863
        %p865 = scmp.lt.s32.totalorder %s35, 1
        %s866 = scalar_select %p865, %s35, 1
        %s867 = smul.addr %s866, 16
        %s868 = smul.addr %s867, 4
        %s869 = scalar_lea.vmem %s11, %s868
        %p870 = scmp.lt.s32.totalorder %s35, 1
        %s871 = scalar_select %p870, %s35, 1
        %s872 = smul.addr %s871, 2
        %s873 = scalar_lea.vmem %s12, %s872
        %p874 = scmp.lt.s32.totalorder %s35, 1
        %s875 = scalar_select %p874, %s35, 1
        %s876 = smul.addr %s875, 8
        %s877 = smul.addr %s876, 4
        %s878 = scalar_lea.vmem %s13, %s877
        %p879 = scmp.lt.s32.totalorder %s35, 1
        %s880 = scalar_select %p879, %s35, 1
        %s881 = scalar_lea.vmem %s14, %s880
        %p882 = scmp.lt.s32.totalorder %s35, 1
        %s883 = scalar_select %p882, %s35, 1
        %s884 = scalar_lea.vmem %s15, %s883
        %p885 = scmp.lt.s32.totalorder %s35, 1
        %s886 = scalar_select %p885, %s35, 1
        %s887 = scalar_lea.vmem %s16, %s886
        %p888 = scmp.lt.s32.totalorder %s35, 1
        %s889 = scalar_select %p888, %s35, 1
        %s890 = smul.addr %s889, 8
        %s891 = smul.addr %s890, 4
        %s892 = scalar_lea.vmem %s17, %s891
        %p893 = scmp.lt.s32.totalorder %s35, 1
        %s894 = scalar_select %p893, %s35, 1
        %s895 = scalar_lea.vmem %s18, %s894
        %p896 = scmp.lt.s32.totalorder %s35, 1
        %s897 = scalar_select %p896, %s35, 1
        %s898 = smul.addr %s897, 16
        %s899 = smul.addr %s898, 4
        %s900 = scalar_lea.vmem %s19, %s899
        %p901 = scmp.lt.s32.totalorder %s35, 1
        %s902 = scalar_select %p901, %s35, 1
        %s903 = scalar_lea.vmem %s20, %s902
        %p905 = scmp.eq.s32.totalorder %s35, 0
        // Predicated region
        $region105: #{tpu_custom_call.1} parent=103 // pred_check
          %p906 = pneg %p905
        $region106: #{tpu_custom_call.1} parent=103 // pred_check_branch
          %908 = sbr.rel (%p906) target = $region108
        $region107: #{tpu_custom_call.1} parent=103 // pred_region
          %v909 = vld [vmem:[%s0] sm:$0xf]
          %v910 = vld [vmem:[%s0 + $0x4] sm:$0xf]
          %v911 = vld [vmem:[%s0 + $0x8] sm:$0xf]
          %v912 = vld [vmem:[%s0 + $0xc] sm:$0xf]
          %v913 = vld [vmem:[%s1] sm:$0xf]
          %v914 = vld [vmem:[%s1 + $0x4] sm:$0xf]
          %v915 = vld [vmem:[%s1 + $0x8] sm:$0xf]
          %v916 = vld [vmem:[%s1 + $0xc] sm:$0xf]
          %v917 = vld [vmem:[%s1 + $0x10] sm:$0xf]
          %v918 = vld [vmem:[%s1 + $0x14] sm:$0xf]
          %v919 = vld [vmem:[%s2] sm:$0x1]
          %v921 = vlaneseq
          %v922 = vshrl.u32 %v921, 7
          %v923 = vsub.s32 0, %v922
          %v924 = vrot.slane %v919, %v923
          %v930 = vunpack.c.l.b16 %v909
          %v931 = vunpack.c.l.b16 %v910
          %v932 = vunpack.c.l.b16 %v911
          %v933 = vunpack.c.l.b16 %v912
          %v934 = vpack.c.b16 %v931, %v930
          %v935 = vpack.c.b16 %v933, %v932
          %v942 = vunpack.c.l.b16 %v913
          %v943 = vunpack.c.l.b16 %v914
          %v944 = vunpack.c.l.b16 %v915
          %v945 = vunpack.c.l.b16 %v916
          %v946 = vunpack.c.l.b16 %v917
          %v947 = vunpack.c.l.b16 %v918
          %v948 = vpack.c.b16 %v943, %v942
          %v949 = vpack.c.b16 %v945, %v944
          %v950 = vpack.c.b16 %v947, %v946
          %vm954 = vcmask 392192
          %v956 = vsel %vm954, %v934, 0
          %v959 = vsel %vm954, %v935, 0
          %961 = vmatprep.subr.bf16.mxu0 0
          %962 = vmatpush1.bf16.msra.mxu0 %v948
          %963 = vmatprep.subr.bf16.mxu0 0
          %964 = vmatpush1.bf16.msra.mxu0 %v949
          %965 = vmatprep.subr.bf16.mxu0 0
          %966 = vmatpush1.bf16.msra.mxu0 %v950
          %967 = vmatprep.subr.bf16.mxu0 0
          %968 = vmatpush1.bf16.msra.mxu0 0
          %969 = vmatprep.subr.bf16.mxu0 0
          %970 = vmatpush1.bf16.msra.mxu0 0
          %971 = vmatprep.subr.bf16.mxu0 0
          %972 = vmatpush1.bf16.msra.mxu0 0
          %973 = vmatprep.subr.bf16.mxu0 0
          %974 = vmatpush1.bf16.msra.mxu0 0
          %975 = vmatprep.subr.bf16.mxu0 0
          %976 = vmatpush1.bf16.msra.mxu0 0
          %977 = vmatprep.subr.bf16.mxu0 0
          %978 = vmatpush1.bf16.msra.mxu0 0
          %979 = vmatprep.subr.bf16.mxu0 0
          %980 = vmatpush1.bf16.msra.mxu0 0
          %981 = vmatprep.subr.bf16.mxu0 0
          %982 = vmatpush1.bf16.msra.mxu0 0
          %983 = vmatprep.subr.bf16.mxu0 0
          %984 = vmatpush1.bf16.msra.mxu0 0
          %985 = vmatprep.subr.bf16.mxu0 0
          %986 = vmatpush1.bf16.msra.mxu0 0
          %987 = vmatprep.subr.bf16.mxu0 0
          %988 = vmatpush1.bf16.msra.mxu0 0
          %989 = vmatprep.subr.bf16.mxu0 0
          %990 = vmatpush1.bf16.msra.mxu0 0
          %991 = vmatprep.subr.bf16.mxu0 0
          %992 = vmatpush1.bf16.msra.mxu0 0
          %993 = vmatprep.mubr.bf16.mxu0 0
          %994 = vmatmul.mubr.bf16.gmra.mrb[0].mxu0 %v956
          %v995 = vpop.f32.mrb[0].mxu0
          %v996 = vadd.f32 %v924, %v995
          %v997 = vpop.f32.mrb[0].mxu0
          %v998 = vpop.f32.mrb[0].mxu0
          %v999 = vadd.f32 %v924, %v998
          %v1000 = vpop.f32.mrb[0].mxu0
          %1001 = vmatprep.mubr.bf16.mxu0 0
          %1002 = vmatmul.mubr.bf16.gmra.mrb[0].mxu0 %v959
          %v1003 = vpop.f32.mrb[0].mxu0
          %v1004 = vadd.f32 %v924, %v1003
          %v1005 = vpop.f32.mrb[0].mxu0
          %v1006 = vpop.f32.mrb[0].mxu0
          %v1007 = vadd.f32 %v924, %v1006
          %v1008 = vpop.f32.mrb[0].mxu0
          %1009 = vdwg.mxu0
          %v1010 = vld [vmem:[%s3] sm:$0xff]
          %v1011 = vld [vmem:[%s3 + $0x8] sm:$0xff]
          %v1012 = vld [vmem:[%s3 + $0x10] sm:$0xff]
          %v1013 = vld [vmem:[%s3 + $0x18] sm:$0xff]
          %v1014 = vadd.f32 %v996, %v1010
          %v1015 = vadd.f32 %v999, %v1011
          %v1016 = vadd.f32 %v1004, %v1012
          %v1017 = vadd.f32 %v1007, %v1013
          %vm1018 = vcmask 523264
          %1019 = vst.msk [vmem:[#allocation2] sm:$0xff] %vm1018, %v1014
          %1020 = vst.msk [vmem:[#allocation2 + $0x8] sm:$0xff] %vm1018, %v1015
          %1021 = vst.msk [vmem:[#allocation2 + $0x10] sm:$0xff] %vm1018, %v1016
          %1022 = vst.msk [vmem:[#allocation2 + $0x18] sm:$0xff] %vm1018, %v1017
        $region108: #{tpu_custom_call.1} parent=103 // pred_fallthru
          _
        %v1023 = vld [vmem:[#allocation2] sm:$0xff]
        %v1024 = vld [vmem:[#allocation2 + $0x8] sm:$0xff]
        %v1025 = vld [vmem:[#allocation2 + $0x10] sm:$0xff]
        %v1026 = vld [vmem:[#allocation2 + $0x18] sm:$0xff]
        %v1027 = vld [vmem:[%s4] sm:$0xff]
        %v1028 = vld [vmem:[%s4 + $0x8] sm:$0xff]
        %v1029 = vld [vmem:[%s4 + $0x10] sm:$0xff]
        %v1030 = vld [vmem:[%s4 + $0x18] sm:$0xff]
        %v1031 = vld [vmem:[%s843] sm:$0x1]
        %v1032 = vld [vmem:[%s846] sm:$0x1]
        %vm1033 = vcmask 523264
        %v1034 = vsel %vm1033, %v1023, 0.0
        %1035 = vadd.xlane.f32.xlu0 %v1034
        %v1036 = vpop.xlane.xlu0 %1035
        %v1037 = vsel %vm1033, %v1024, 0.0
        %1038 = vadd.xlane.f32.xlu0 %v1037
        %v1039 = vpop.xlane.xlu0 %1038
        %v1040 = vsel %vm1033, %v1025, 0.0
        %1041 = vadd.xlane.f32.xlu0 %v1040
        %v1042 = vpop.xlane.xlu0 %1041
        %v1043 = vsel %vm1033, %v1026, 0.0
        %1044 = vadd.xlane.f32.xlu0 %v1043
        %v1045 = vpop.xlane.xlu0 %1044
        %v1046 = vrcp.pop 64.0
        %v1047 = vmul.f32 %v1036, %v1046
        %v1048 = vmul.f32 %v1039, %v1046
        %v1049 = vmul.f32 %v1042, %v1046
        %v1050 = vmul.f32 %v1045, %v1046
        %v1051 = vsub.f32 %v1023, %v1047
        %v1052 = vsub.f32 %v1024, %v1048
        %v1053 = vsub.f32 %v1025, %v1049
        %v1054 = vsub.f32 %v1026, %v1050
        %v1055 = vmul.f32 %v1051, %v1051
        %v1056 = vmul.f32 %v1052, %v1052
        %v1057 = vmul.f32 %v1053, %v1053
        %v1058 = vmul.f32 %v1054, %v1054
        %v1059 = vsel %vm1033, %v1055, 0.0
        %1060 = vadd.xlane.f32.xlu0 %v1059
        %v1061 = vpop.xlane.xlu0 %1060
        %v1062 = vsel %vm1033, %v1056, 0.0
        %1063 = vadd.xlane.f32.xlu0 %v1062
        %v1064 = vpop.xlane.xlu0 %1063
        %v1065 = vsel %vm1033, %v1057, 0.0
        %1066 = vadd.xlane.f32.xlu0 %v1065
        %v1067 = vpop.xlane.xlu0 %1066
        %v1068 = vsel %vm1033, %v1058, 0.0
        %1069 = vadd.xlane.f32.xlu0 %v1068
        %v1070 = vpop.xlane.xlu0 %1069
        %v1071 = vmul.f32 %v1061, %v1046
        %v1072 = vmul.f32 %v1064, %v1046
        %v1073 = vmul.f32 %v1067, %v1046
        %v1074 = vmul.f32 %v1070, %v1046
        %v1075 = vadd.f32 %v1071, 1e-06
        %v1076 = vadd.f32 %v1072, 1e-06
        %v1077 = vadd.f32 %v1073, 1e-06
        %v1078 = vadd.f32 %v1074, 1e-06
        %v1079 = vrsqrt.pop %v1075
        %v1080 = vrsqrt.pop %v1076
        %v1081 = vrsqrt.pop %v1077
        %v1082 = vrsqrt.pop %v1078
        %v1083 = vmul.f32 %v1051, %v1079
        %v1084 = vmul.f32 %v1052, %v1080
        %v1085 = vmul.f32 %v1053, %v1081
        %v1086 = vmul.f32 %v1054, %v1082
        %v1088 = vlaneseq
        %v1089 = vshrl.u32 %v1088, 7
        %v1090 = vsub.s32 0, %v1089
        %v1091 = vrot.slane %v1031, %v1090
        %v1093 = vmul.f32 %v1083, %v1091
        %v1094 = vmul.f32 %v1084, %v1091
        %v1095 = vmul.f32 %v1085, %v1091
        %v1096 = vmul.f32 %v1086, %v1091
        %v1098 = vlaneseq
        %v1099 = vshrl.u32 %v1098, 7
        %v1100 = vsub.s32 0, %v1099
        %v1101 = vrot.slane %v1032, %v1100
        %v1103 = vadd.f32 %v1093, %v1101
        %v1104 = vadd.f32 %v1094, %v1101
        %v1105 = vadd.f32 %v1095, %v1101
        %v1106 = vadd.f32 %v1096, %v1101
        %v1107 = vpack.c.bf16 %v1104, %v1103
        %v1108 = vpack.c.bf16 %v1106, %v1105
        %v1109 = vld [vmem:[%s851] sm:$0xf]
        %v1110 = vld [vmem:[%s851 + $0x4] sm:$0xf]
        %v1111 = vld [vmem:[%s851 + $0x8] sm:$0xf]
        %v1112 = vld [vmem:[%s851 + $0xc] sm:$0xf]
        %v1113 = vld [vmem:[%s851 + $0x10] sm:$0xf]
        %v1114 = vld [vmem:[%s851 + $0x14] sm:$0xf]
        %v1115 = vld [vmem:[%s851 + $0x18] sm:$0xf]
        %v1116 = vld [vmem:[%s851 + $0x1c] sm:$0xf]
        %v1117 = vld [vmem:[%s855] sm:$0x1]
        %v1119 = vlaneseq
        %v1120 = vshrl.u32 %v1119, 7
        %v1121 = vsub.s32 0, %v1120
        %v1122 = vrot.slane %v1117, %v1121
        %v1132 = vunpack.c.l.b16 %v1109
        %v1133 = vunpack.c.l.b16 %v1110
        %v1134 = vunpack.c.l.b16 %v1111
        %v1135 = vunpack.c.l.b16 %v1112
        %v1136 = vunpack.c.l.b16 %v1113
        %v1137 = vunpack.c.l.b16 %v1114
        %v1138 = vunpack.c.l.b16 %v1115
        %v1139 = vunpack.c.l.b16 %v1116
        %v1140 = vpack.c.b16 %v1133, %v1132
        %v1141 = vpack.c.b16 %v1135, %v1134
        %v1142 = vpack.c.b16 %v1137, %v1136
        %v1143 = vpack.c.b16 %v1139, %v1138
        %v1149 = vsel %vm1033, %v1107, 0
        %v1152 = vsel %vm1033, %v1108, 0
        %1154 = vmatprep.subr.bf16.mxu0 0
        %1155 = vmatpush1.bf16.msra.mxu0 %v1140
        %1156 = vmatprep.subr.bf16.mxu0 0
        %1157 = vmatpush1.bf16.msra.mxu0 %v1141
        %1158 = vmatprep.subr.bf16.mxu0 0
        %1159 = vmatpush1.bf16.msra.mxu0 %v1142
        %1160 = vmatprep.subr.bf16.mxu0 0
        %1161 = vmatpush1.bf16.msra.mxu0 %v1143
        %1162 = vmatprep.subr.bf16.mxu0 0
        %1163 = vmatpush1.bf16.msra.mxu0 0
        %1164 = vmatprep.subr.bf16.mxu0 0
        %1165 = vmatpush1.bf16.msra.mxu0 0
        %1166 = vmatprep.subr.bf16.mxu0 0
        %1167 = vmatpush1.bf16.msra.mxu0 0
        %1168 = vmatprep.subr.bf16.mxu0 0
        %1169 = vmatpush1.bf16.msra.mxu0 0
        %1170 = vmatprep.subr.bf16.mxu0 0
        %1171 = vmatpush1.bf16.msra.mxu0 0
        %1172 = vmatprep.subr.bf16.mxu0 0
        %1173 = vmatpush1.bf16.msra.mxu0 0
        %1174 = vmatprep.subr.bf16.mxu0 0
        %1175 = vmatpush1.bf16.msra.mxu0 0
        %1176 = vmatprep.subr.bf16.mxu0 0
        %1177 = vmatpush1.bf16.msra.mxu0 0
        %1178 = vmatprep.subr.bf16.mxu0 0
        %1179 = vmatpush1.bf16.msra.mxu0 0
        %1180 = vmatprep.subr.bf16.mxu0 0
        %1181 = vmatpush1.bf16.msra.mxu0 0
        %1182 = vmatprep.subr.bf16.mxu0 0
        %1183 = vmatpush1.bf16.msra.mxu0 0
        %1184 = vmatprep.subr.bf16.mxu0 0
        %1185 = vmatpush1.bf16.msra.mxu0 0
        %1186 = vmatprep.mubr.bf16.mxu0 0
        %1187 = vmatmul.mubr.bf16.gmra.mrb[0].mxu0 %v1149
        %v1188 = vpop.f32.mrb[0].mxu0
        %v1189 = vadd.f32 %v1122, %v1188
        %v1190 = vpop.f32.mrb[0].mxu0
        %v1191 = vpop.f32.mrb[0].mxu0
        %v1192 = vadd.f32 %v1122, %v1191
        %v1193 = vpop.f32.mrb[0].mxu0
        %1194 = vmatprep.mubr.bf16.mxu0 0
        %1195 = vmatmul.mubr.bf16.gmra.mrb[0].mxu0 %v1152
        %v1196 = vpop.f32.mrb[0].mxu0
        %v1197 = vadd.f32 %v1122, %v1196
        %v1198 = vpop.f32.mrb[0].mxu0
        %v1199 = vpop.f32.mrb[0].mxu0
        %v1200 = vadd.f32 %v1122, %v1199
        %v1201 = vpop.f32.mrb[0].mxu0
        %1202 = vdwg.mxu0
        %v1203 = vld [vmem:[%s860] sm:$0xf]
        %v1204 = vld [vmem:[%s860 + $0x4] sm:$0xf]
        %v1205 = vld [vmem:[%s860 + $0x8] sm:$0xf]
        %v1206 = vld [vmem:[%s860 + $0xc] sm:$0xf]
        %v1207 = vld [vmem:[%s860 + $0x10] sm:$0xf]
        %v1208 = vld [vmem:[%s860 + $0x14] sm:$0xf]
        %v1209 = vld [vmem:[%s860 + $0x18] sm:$0xf]
        %v1210 = vld [vmem:[%s860 + $0x1c] sm:$0xf]
        %v1211 = vld [vmem:[%s864] sm:$0x1]
        %v1213 = vlaneseq
        %v1214 = vshrl.u32 %v1213, 7
        %v1215 = vsub.s32 0, %v1214
        %v1216 = vrot.slane %v1211, %v1215
        %v1226 = vunpack.c.l.b16 %v1203
        %v1227 = vunpack.c.l.b16 %v1204
        %v1228 = vunpack.c.l.b16 %v1205
        %v1229 = vunpack.c.l.b16 %v1206
        %v1230 = vunpack.c.l.b16 %v1207
        %v1231 = vunpack.c.l.b16 %v1208
        %v1232 = vunpack.c.l.b16 %v1209
        %v1233 = vunpack.c.l.b16 %v1210
        %v1234 = vpack.c.b16 %v1227, %v1226
        %v1235 = vpack.c.b16 %v1229, %v1228
        %v1236 = vpack.c.b16 %v1231, %v1230
        %v1237 = vpack.c.b16 %v1233, %v1232
        %1242 = vmatprep.subr.bf16.mxu0 0
        %1243 = vmatpush1.bf16.msra.mxu0 %v1234
        %1244 = vmatprep.subr.bf16.mxu0 0
        %1245 = vmatpush1.bf16.msra.mxu0 %v1235
        %1246 = vmatprep.subr.bf16.mxu0 0
        %1247 = vmatpush1.bf16.msra.mxu0 %v1236
        %1248 = vmatprep.subr.bf16.mxu0 0
        %1249 = vmatpush1.bf16.msra.mxu0 %v1237
        %1250 = vmatprep.subr.bf16.mxu0 0
        %1251 = vmatpush1.bf16.msra.mxu0 0
        %1252 = vmatprep.subr.bf16.mxu0 0
        %1253 = vmatpush1.bf16.msra.mxu0 0
        %1254 = vmatprep.subr.bf16.mxu0 0
        %1255 = vmatpush1.bf16.msra.mxu0 0
        %1256 = vmatprep.subr.bf16.mxu0 0
        %1257 = vmatpush1.bf16.msra.mxu0 0
        %1258 = vmatprep.subr.bf16.mxu0 0
        %1259 = vmatpush1.bf16.msra.mxu0 0
        %1260 = vmatprep.subr.bf16.mxu0 0
        %1261 = vmatpush1.bf16.msra.mxu0 0
        %1262 = vmatprep.subr.bf16.mxu0 0
        %1263 = vmatpush1.bf16.msra.mxu0 0
        %1264 = vmatprep.subr.bf16.mxu0 0
        %1265 = vmatpush1.bf16.msra.mxu0 0
        %1266 = vmatprep.subr.bf16.mxu0 0
        %1267 = vmatpush1.bf16.msra.mxu0 0
        %1268 = vmatprep.subr.bf16.mxu0 0
        %1269 = vmatpush1.bf16.msra.mxu0 0
        %1270 = vmatprep.subr.bf16.mxu0 0
        %1271 = vmatpush1.bf16.msra.mxu0 0
        %1272 = vmatprep.subr.bf16.mxu0 0
        %1273 = vmatpush1.bf16.msra.mxu0 0
        %1274 = vmatprep.mubr.bf16.mxu0 0
        %1275 = vmatmul.mubr.bf16.gmra.mrb[0].mxu0 %v1149
        %v1276 = vpop.f32.mrb[0].mxu0
        %v1277 = vadd.f32 %v1216, %v1276
        %v1278 = vpop.f32.mrb[0].mxu0
        %v1279 = vpop.f32.mrb[0].mxu0
        %v1280 = vadd.f32 %v1216, %v1279
        %v1281 = vpop.f32.mrb[0].mxu0
        %1282 = vmatprep.mubr.bf16.mxu0 0
        %1283 = vmatmul.mubr.bf16.gmra.mrb[0].mxu0 %v1152
        %v1284 = vpop.f32.mrb[0].mxu0
        %v1285 = vadd.f32 %v1216, %v1284
        %v1286 = vpop.f32.mrb[0].mxu0
        %v1287 = vpop.f32.mrb[0].mxu0
        %v1288 = vadd.f32 %v1216, %v1287
        %v1289 = vpop.f32.mrb[0].mxu0
        %1290 = vdwg.mxu0
        %v1291 = vld [vmem:[%s869] sm:$0xf]
        %v1292 = vld [vmem:[%s869 + $0x4] sm:$0xf]
        %v1293 = vld [vmem:[%s869 + $0x8] sm:$0xf]
        %v1294 = vld [vmem:[%s869 + $0xc] sm:$0xf]
        %v1295 = vld [vmem:[%s869 + $0x10] sm:$0xf]
        %v1296 = vld [vmem:[%s869 + $0x14] sm:$0xf]
        %v1297 = vld [vmem:[%s869 + $0x18] sm:$0xf]
        %v1298 = vld [vmem:[%s869 + $0x1c] sm:$0xf]
        %v1299 = vld [vmem:[%s873] sm:$0x1]
        %v1301 = vlaneseq
        %v1302 = vshrl.u32 %v1301, 7
        %v1303 = vsub.s32 0, %v1302
        %v1304 = vrot.slane %v1299, %v1303
        %v1314 = vunpack.c.l.b16 %v1291
        %v1315 = vunpack.c.l.b16 %v1292
        %v1316 = vunpack.c.l.b16 %v1293
        %v1317 = vunpack.c.l.b16 %v1294
        %v1318 = vunpack.c.l.b16 %v1295
        %v1319 = vunpack.c.l.b16 %v1296
        %v1320 = vunpack.c.l.b16 %v1297
        %v1321 = vunpack.c.l.b16 %v1298
        %v1322 = vpack.c.b16 %v1315, %v1314
        %v1323 = vpack.c.b16 %v1317, %v1316
        %v1324 = vpack.c.b16 %v1319, %v1318
        %v1325 = vpack.c.b16 %v1321, %v1320
        %1330 = vmatprep.subr.bf16.mxu0 0
        %1331 = vmatpush1.bf16.msra.mxu0 %v1322
        %1332 = vmatprep.subr.bf16.mxu0 0
        %1333 = vmatpush1.bf16.msra.mxu0 %v1323
        %1334 = vmatprep.subr.bf16.mxu0 0
        %1335 = vmatpush1.bf16.msra.mxu0 %v1324
        %1336 = vmatprep.subr.bf16.mxu0 0
        %1337 = vmatpush1.bf16.msra.mxu0 %v1325
        %1338 = vmatprep.subr.bf16.mxu0 0
        %1339 = vmatpush1.bf16.msra.mxu0 0
        %1340 = vmatprep.subr.bf16.mxu0 0
        %1341 = vmatpush1.bf16.msra.mxu0 0
        %1342 = vmatprep.subr.bf16.mxu0 0
        %1343 = vmatpush1.bf16.msra.mxu0 0
        %1344 = vmatprep.subr.bf16.mxu0 0
        %1345 = vmatpush1.bf16.msra.mxu0 0
        %1346 = vmatprep.subr.bf16.mxu0 0
        %1347 = vmatpush1.bf16.msra.mxu0 0
        %1348 = vmatprep.subr.bf16.mxu0 0
        %1349 = vmatpush1.bf16.msra.mxu0 0
        %1350 = vmatprep.subr.bf16.mxu0 0
        %1351 = vmatpush1.bf16.msra.mxu0 0
        %1352 = vmatprep.subr.bf16.mxu0 0
        %1353 = vmatpush1.bf16.msra.mxu0 0
        %1354 = vmatprep.subr.bf16.mxu0 0
        %1355 = vmatpush1.bf16.msra.mxu0 0
        %1356 = vmatprep.subr.bf16.mxu0 0
        %1357 = vmatpush1.bf16.msra.mxu0 0
        %1358 = vmatprep.subr.bf16.mxu0 0
        %1359 = vmatpush1.bf16.msra.mxu0 0
        %1360 = vmatprep.subr.bf16.mxu0 0
        %1361 = vmatpush1.bf16.msra.mxu0 0
        %1362 = vmatprep.mubr.bf16.mxu0 0
        %1363 = vmatmul.mubr.bf16.gmra.mrb[0].mxu0 %v1149
        %v1364 = vpop.f32.mrb[0].mxu0
        %v1365 = vadd.f32 %v1304, %v1364
        %v1366 = vpop.f32.mrb[0].mxu0
        %v1367 = vpop.f32.mrb[0].mxu0
        %v1368 = vadd.f32 %v1304, %v1367
        %v1369 = vpop.f32.mrb[0].mxu0
        %1370 = vmatprep.mubr.bf16.mxu0 0
        %1371 = vmatmul.mubr.bf16.gmra.mrb[0].mxu0 %v1152
        %v1372 = vpop.f32.mrb[0].mxu0
        %v1373 = vadd.f32 %v1304, %v1372
        %v1374 = vpop.f32.mrb[0].mxu0
        %v1375 = vpop.f32.mrb[0].mxu0
        %v1376 = vadd.f32 %v1304, %v1375
        %v1377 = vpop.f32.mrb[0].mxu0
        %1378 = vdwg.mxu0
        %vm1379 = vcmask 261120
        %v1381 = vsel %vm1379, %v1189, 0
        %v1384 = vsel %vm1379, %v1192, 0
        %v1387 = vsel %vm1379, %v1197, 0
        %v1390 = vsel %vm1379, %v1200, 0
        %v1393 = vsel %vm1379, %v1277, 0
        %v1396 = vsel %vm1379, %v1280, 0
        %v1399 = vsel %vm1379, %v1285, 0
        %v1402 = vsel %vm1379, %v1288, 0
        %1404 = vmatprep.subr.mxu0 0.0
        %1405 = vmatpush1.xpose.msra.mxu0 %v1393
        %1406 = vmatprep.subr.mxu0 0.0
        %1407 = vmatpush1.xpose.msra.mxu0 %v1396
        %1408 = vmatprep.subr.mxu0 0.0
        %1409 = vmatpush1.xpose.msra.mxu0 %v1399
        %1410 = vmatprep.subr.mxu0 0.0
        %1411 = vmatpush1.xpose.msra.mxu0 %v1402
        %1412 = vmatprep.subr.mxu0 0.0
        %1413 = vmatpush1.xpose.msra.mxu0 0.0
        %1414 = vmatprep.subr.mxu0 0.0
        %1415 = vmatpush1.xpose.msra.mxu0 0.0
        %1416 = vmatprep.subr.mxu0 0.0
        %1417 = vmatpush1.xpose.msra.mxu0 0.0
        %1418 = vmatprep.subr.mxu0 0.0
        %1419 = vmatpush1.xpose.msra.mxu0 0.0
        %1420 = vmatprep.subr.mxu0 0.0
        %1421 = vmatpush1.xpose.msra.mxu0 0.0
        %1422 = vmatprep.subr.mxu0 0.0
        %1423 = vmatpush1.xpose.msra.mxu0 0.0
        %1424 = vmatprep.subr.mxu0 0.0
        %1425 = vmatpush1.xpose.msra.mxu0 0.0
        %1426 = vmatprep.subr.mxu0 0.0
        %1427 = vmatpush1.xpose.msra.mxu0 0.0
        %1428 = vmatprep.subr.mxu0 0.0
        %1429 = vmatpush1.xpose.msra.mxu0 0.0
        %1430 = vmatprep.subr.mxu0 0.0
        %1431 = vmatpush1.xpose.msra.mxu0 0.0
        %1432 = vmatprep.subr.mxu0 0.0
        %1433 = vmatpush1.xpose.msra.mxu0 0.0
        %1434 = vmatprep.subr.mxu0 0.0
        %1435 = vmatpush1.xpose.msra.mxu0 0.0
        %1436 = vmatprep.subr.mxu0 0.0
        %1437 = vmatpush1.xpose.msra.mxu0 0.0
        %1438 = vmatprep.subr.mxu0 0.0
        %1439 = vmatpush1.xpose.msra.mxu0 0.0
        %1440 = vmatprep.subr.mxu0 0.0
        %1441 = vmatpush1.xpose.msra.mxu0 0.0
        %1442 = vmatprep.subr.mxu0 0.0
        %1443 = vmatpush1.xpose.msra.mxu0 0.0
        %1444 = vmatprep.subr.mxu0 0.0
        %1445 = vmatpush1.xpose.msra.mxu0 0.0
        %1446 = vmatprep.subr.mxu0 0.0
        %1447 = vmatpush1.xpose.msra.mxu0 0.0
        %1448 = vmatprep.subr.mxu0 0.0
        %1449 = vmatpush1.xpose.msra.mxu0 0.0
        %1450 = vmatprep.subr.mxu0 0.0
        %1451 = vmatpush1.xpose.msra.mxu0 0.0
        %1452 = vmatprep.subr.mxu0 0.0
        %1453 = vmatpush1.xpose.msra.mxu0 0.0
        %1454 = vmatprep.subr.mxu0 0.0
        %1455 = vmatpush1.xpose.msra.mxu0 0.0
        %1456 = vmatprep.subr.mxu0 0.0
        %1457 = vmatpush1.xpose.msra.mxu0 0.0
        %1458 = vmatprep.subr.mxu0 0.0
        %1459 = vmatpush1.xpose.msra.mxu0 0.0
        %1460 = vmatprep.subr.mxu0 0.0
        %1461 = vmatpush1.xpose.msra.mxu0 0.0
        %1462 = vmatprep.subr.mxu0 0.0
        %1463 = vmatpush1.xpose.msra.mxu0 0.0
        %1464 = vmatprep.subr.mxu0 0.0
        %1465 = vmatpush1.xpose.msra.mxu0 0.0
        %1466 = vmatprep.subr.mxu0 0.0
        %1467 = vmatpush1.xpose.msra.mxu0 0.0
        %1468 = vmatprep.mubr.f32.mxu0 0.0
        %1469 = vmatmul.mubr.f32.gmra.mrb[0].mxu0 %v1381
        %v1470 = vpop.f32.mrb[0].mxu0
        %v1471 = vadd.f32 %v1027, %v1470
        %v1472 = vpop.f32.mrb[0].mxu0
        %1473 = vmatprep.mubr.f32.mxu0 0.0
        %1474 = vmatmul.mubr.f32.gmra.mrb[0].mxu0 %v1384
        %v1475 = vpop.f32.mrb[0].mxu0
        %v1476 = vadd.f32 %v1028, %v1475
        %v1477 = vpop.f32.mrb[0].mxu0
        %1478 = vmatprep.mubr.f32.mxu0 0.0
        %1479 = vmatmul.mubr.f32.gmra.mrb[0].mxu0 %v1387
        %v1480 = vpop.f32.mrb[0].mxu0
        %v1481 = vadd.f32 %v1029, %v1480
        %v1482 = vpop.f32.mrb[0].mxu0
        %1483 = vmatprep.mubr.f32.mxu0 0.0
        %1484 = vmatmul.mubr.f32.gmra.mrb[0].mxu0 %v1390
        %v1485 = vpop.f32.mrb[0].mxu0
        %v1486 = vadd.f32 %v1030, %v1485
        %v1487 = vpop.f32.mrb[0].mxu0
        %1488 = vdwg.mxu0
        %v1489 = vsel %vm1379, %v1471, -inf
        %1490 = vmax.xlane.f32.xlu0 %v1489
        %v1491 = vpop.xlane.xlu0 %1490
        %v1492 = vsel %vm1379, %v1476, -inf
        %1493 = vmax.xlane.f32.xlu0 %v1492
        %v1494 = vpop.xlane.xlu0 %1493
        %v1495 = vsel %vm1379, %v1481, -inf
        %1496 = vmax.xlane.f32.xlu0 %v1495
        %v1497 = vpop.xlane.xlu0 %1496
        %v1498 = vsel %vm1379, %v1486, -inf
        %1499 = vmax.xlane.f32.xlu0 %v1498
        %v1500 = vpop.xlane.xlu0 %1499
        %v1501 = vsub.f32 %v1471, %v1491
        %v1502 = vsub.f32 %v1476, %v1494
        %v1503 = vsub.f32 %v1481, %v1497
        %v1504 = vsub.f32 %v1486, %v1500
        %v1505 = vmul.f32 %v1501, 1.442695
        %v1506 = vpow.pop %v1505
        %v1507 = vmul.f32 %v1502, 1.442695
        %v1508 = vpow.pop %v1507
        %v1509 = vmul.f32 %v1503, 1.442695
        %v1510 = vpow.pop %v1509
        %v1511 = vmul.f32 %v1504, 1.442695
        %v1512 = vpow.pop %v1511
        %v1513 = vsel %vm1379, %v1506, 0.0
        %1514 = vadd.xlane.f32.xlu0 %v1513
        %v1515 = vpop.xlane.xlu0 %1514
        %v1516 = vsel %vm1379, %v1508, 0.0
        %1517 = vadd.xlane.f32.xlu0 %v1516
        %v1518 = vpop.xlane.xlu0 %1517
        %v1519 = vsel %vm1379, %v1510, 0.0
        %1520 = vadd.xlane.f32.xlu0 %v1519
        %v1521 = vpop.xlane.xlu0 %1520
        %v1522 = vsel %vm1379, %v1512, 0.0
        %1523 = vadd.xlane.f32.xlu0 %v1522
        %v1524 = vpop.xlane.xlu0 %1523
        %v1525 = vrcp.pop %v1515
        %v1526 = vrcp.pop %v1518
        %v1527 = vrcp.pop %v1521
        %v1528 = vrcp.pop %v1524
        %v1529 = vmul.f32 %v1506, %v1525
        %v1530 = vmul.f32 %v1508, %v1526
        %v1531 = vmul.f32 %v1510, %v1527
        %v1532 = vmul.f32 %v1512, %v1528
        %v1534 = vsel %vm1379, %v1529, 0
        %v1537 = vsel %vm1379, %v1530, 0
        %v1540 = vsel %vm1379, %v1531, 0
        %v1543 = vsel %vm1379, %v1532, 0
        %1545 = vmatprep.subr.mxu0 0.0
        %1546 = vmatpush1.msra.mxu0 %v1365
        %1547 = vmatprep.subr.mxu0 0.0
        %1548 = vmatpush1.msra.mxu0 %v1368
        %1549 = vmatprep.subr.mxu0 0.0
        %1550 = vmatpush1.msra.mxu0 %v1373
        %1551 = vmatprep.subr.mxu0 0.0
        %1552 = vmatpush1.msra.mxu0 %v1376
        %1553 = vmatprep.subr.mxu0 0.0
        %1554 = vmatpush1.msra.mxu0 0.0
        %1555 = vmatprep.subr.mxu0 0.0
        %1556 = vmatpush1.msra.mxu0 0.0
        %1557 = vmatprep.subr.mxu0 0.0
        %1558 = vmatpush1.msra.mxu0 0.0
        %1559 = vmatprep.subr.mxu0 0.0
        %1560 = vmatpush1.msra.mxu0 0.0
        %1561 = vmatprep.subr.mxu0 0.0
        %1562 = vmatpush1.msra.mxu0 0.0
        %1563 = vmatprep.subr.mxu0 0.0
        %1564 = vmatpush1.msra.mxu0 0.0
        %1565 = vmatprep.subr.mxu0 0.0
        %1566 = vmatpush1.msra.mxu0 0.0
        %1567 = vmatprep.subr.mxu0 0.0
        %1568 = vmatpush1.msra.mxu0 0.0
        %1569 = vmatprep.subr.mxu0 0.0
        %1570 = vmatpush1.msra.mxu0 0.0
        %1571 = vmatprep.subr.mxu0 0.0
        %1572 = vmatpush1.msra.mxu0 0.0
        %1573 = vmatprep.subr.mxu0 0.0
        %1574 = vmatpush1.msra.mxu0 0.0
        %1575 = vmatprep.subr.mxu0 0.0
        %1576 = vmatpush1.msra.mxu0 0.0
        %1577 = vmatprep.subr.mxu0 0.0
        %1578 = vmatpush1.msra.mxu0 0.0
        %1579 = vmatprep.subr.mxu0 0.0
        %1580 = vmatpush1.msra.mxu0 0.0
        %1581 = vmatprep.subr.mxu0 0.0
        %1582 = vmatpush1.msra.mxu0 0.0
        %1583 = vmatprep.subr.mxu0 0.0
        %1584 = vmatpush1.msra.mxu0 0.0
        %1585 = vmatprep.subr.mxu0 0.0
        %1586 = vmatpush1.msra.mxu0 0.0
        %1587 = vmatprep.subr.mxu0 0.0
        %1588 = vmatpush1.msra.mxu0 0.0
        %1589 = vmatprep.subr.mxu0 0.0
        %1590 = vmatpush1.msra.mxu0 0.0
        %1591 = vmatprep.subr.mxu0 0.0
        %1592 = vmatpush1.msra.mxu0 0.0
        %1593 = vmatprep.subr.mxu0 0.0
        %1594 = vmatpush1.msra.mxu0 0.0
        %1595 = vmatprep.subr.mxu0 0.0
        %1596 = vmatpush1.msra.mxu0 0.0
        %1597 = vmatprep.subr.mxu0 0.0
        %1598 = vmatpush1.msra.mxu0 0.0
        %1599 = vmatprep.subr.mxu0 0.0
        %1600 = vmatpush1.msra.mxu0 0.0
        %1601 = vmatprep.subr.mxu0 0.0
        %1602 = vmatpush1.msra.mxu0 0.0
        %1603 = vmatprep.subr.mxu0 0.0
        %1604 = vmatpush1.msra.mxu0 0.0
        %1605 = vmatprep.subr.mxu0 0.0
        %1606 = vmatpush1.msra.mxu0 0.0
        %1607 = vmatprep.subr.mxu0 0.0
        %1608 = vmatpush1.msra.mxu0 0.0
        %1609 = vmatprep.mubr.f32.mxu0 0.0
        %1610 = vmatmul.mubr.f32.gmra.mrb[0].mxu0 %v1534
        %v1611 = vpop.f32.mrb[0].mxu0
        %v1612 = vadd.f32 0.0, %v1611
        %v1613 = vpop.f32.mrb[0].mxu0
        %1614 = vmatprep.mubr.f32.mxu0 0.0
        %1615 = vmatmul.mubr.f32.gmra.mrb[0].mxu0 %v1537
        %v1616 = vpop.f32.mrb[0].mxu0
        %v1617 = vadd.f32 0.0, %v1616
        %v1618 = vpop.f32.mrb[0].mxu0
        %1619 = vmatprep.mubr.f32.mxu0 0.0
        %1620 = vmatmul.mubr.f32.gmra.mrb[0].mxu0 %v1540
        %v1621 = vpop.f32.mrb[0].mxu0
        %v1622 = vadd.f32 0.0, %v1621
        %v1623 = vpop.f32.mrb[0].mxu0
        %1624 = vmatprep.mubr.f32.mxu0 0.0
        %1625 = vmatmul.mubr.f32.gmra.mrb[0].mxu0 %v1543
        %v1626 = vpop.f32.mrb[0].mxu0
        %v1627 = vadd.f32 0.0, %v1626
        %v1628 = vpop.f32.mrb[0].mxu0
        %1629 = vdwg.mxu0
        %v1630 = vpack.c.bf16 %v1617, %v1612
        %v1631 = vpack.c.bf16 %v1627, %v1622
        %v1632 = vld [vmem:[%s878] sm:$0xf]
        %v1633 = vld [vmem:[%s878 + $0x4] sm:$0xf]
        %v1634 = vld [vmem:[%s878 + $0x8] sm:$0xf]
        %v1635 = vld [vmem:[%s878 + $0xc] sm:$0xf]
        %s1636 = scalar_lea.vmem %s851, 32
        %v1637 = vld [vmem:[%s1636] sm:$0xf]
        %v1638 = vld [vmem:[%s1636 + $0x4] sm:$0xf]
        %v1639 = vld [vmem:[%s1636 + $0x8] sm:$0xf]
        %v1640 = vld [vmem:[%s1636 + $0xc] sm:$0xf]
        %v1641 = vld [vmem:[%s1636 + $0x10] sm:$0xf]
        %v1642 = vld [vmem:[%s1636 + $0x14] sm:$0xf]
        %v1643 = vld [vmem:[%s1636 + $0x18] sm:$0xf]
        %v1644 = vld [vmem:[%s1636 + $0x1c] sm:$0xf]
        %s1645 = scalar_lea.vmem %s855, 1
        %v1646 = vld [vmem:[%s1645] sm:$0x1]
        %v1648 = vlaneseq
        %v1649 = vshrl.u32 %v1648, 7
        %v1650 = vsub.s32 0, %v1649
        %v1651 = vrot.slane %v1646, %v1650
        %v1661 = vunpack.c.l.b16 %v1637
        %v1662 = vunpack.c.l.b16 %v1638
        %v1663 = vunpack.c.l.b16 %v1639
        %v1664 = vunpack.c.l.b16 %v1640
        %v1665 = vunpack.c.l.b16 %v1641
        %v1666 = vunpack.c.l.b16 %v1642
        %v1667 = vunpack.c.l.b16 %v1643
        %v1668 = vunpack.c.l.b16 %v1644
        %v1669 = vpack.c.b16 %v1662, %v1661
        %v1670 = vpack.c.b16 %v1664, %v1663
        %v1671 = vpack.c.b16 %v1666, %v1665
        %v1672 = vpack.c.b16 %v1668, %v1667
        %1677 = vmatprep.subr.bf16.mxu0 0
        %1678 = vmatpush1.bf16.msra.mxu0 %v1669
        %1679 = vmatprep.subr.bf16.mxu0 0
        %1680 = vmatpush1.bf16.msra.mxu0 %v1670
        %1681 = vmatprep.subr.bf16.mxu0 0
        %1682 = vmatpush1.bf16.msra.mxu0 %v1671
        %1683 = vmatprep.subr.bf16.mxu0 0
        %1684 = vmatpush1.bf16.msra.mxu0 %v1672
        %1685 = vmatprep.subr.bf16.mxu0 0
        %1686 = vmatpush1.bf16.msra.mxu0 0
        %1687 = vmatprep.subr.bf16.mxu0 0
        %1688 = vmatpush1.bf16.msra.mxu0 0
        %1689 = vmatprep.subr.bf16.mxu0 0
        %1690 = vmatpush1.bf16.msra.mxu0 0
        %1691 = vmatprep.subr.bf16.mxu0 0
        %1692 = vmatpush1.bf16.msra.mxu0 0
        %1693 = vmatprep.subr.bf16.mxu0 0
        %1694 = vmatpush1.bf16.msra.mxu0 0
        %1695 = vmatprep.subr.bf16.mxu0 0
        %1696 = vmatpush1.bf16.msra.mxu0 0
        %1697 = vmatprep.subr.bf16.mxu0 0
        %1698 = vmatpush1.bf16.msra.mxu0 0
        %1699 = vmatprep.subr.bf16.mxu0 0
        %1700 = vmatpush1.bf16.msra.mxu0 0
        %1701 = vmatprep.subr.bf16.mxu0 0
        %1702 = vmatpush1.bf16.msra.mxu0 0
        %1703 = vmatprep.subr.bf16.mxu0 0
        %1704 = vmatpush1.bf16.msra.mxu0 0
        %1705 = vmatprep.subr.bf16.mxu0 0
        %1706 = vmatpush1.bf16.msra.mxu0 0
        %1707 = vmatprep.subr.bf16.mxu0 0
        %1708 = vmatpush1.bf16.msra.mxu0 0
        %1709 = vmatprep.mubr.bf16.mxu0 0
        %1710 = vmatmul.mubr.bf16.gmra.mrb[0].mxu0 %v1149
        %v1711 = vpop.f32.mrb[0].mxu0
        %v1712 = vadd.f32 %v1651, %v1711
        %v1713 = vpop.f32.mrb[0].mxu0
        %v1714 = vpop.f32.mrb[0].mxu0
        %v1715 = vadd.f32 %v1651, %v1714
        %v1716 = vpop.f32.mrb[0].mxu0
        %1717 = vmatprep.mubr.bf16.mxu0 0
        %1718 = vmatmul.mubr.bf16.gmra.mrb[0].mxu0 %v1152
        %v1719 = vpop.f32.mrb[0].mxu0
        %v1720 = vadd.f32 %v1651, %v1719
        %v1721 = vpop.f32.mrb[0].mxu0
        %v1722 = vpop.f32.mrb[0].mxu0
        %v1723 = vadd.f32 %v1651, %v1722
        %v1724 = vpop.f32.mrb[0].mxu0
        %1725 = vdwg.mxu0
        %s1726 = scalar_lea.vmem %s860, 32
        %v1727 = vld [vmem:[%s1726] sm:$0xf]
        %v1728 = vld [vmem:[%s1726 + $0x4] sm:$0xf]
        %v1729 = vld [vmem:[%s1726 + $0x8] sm:$0xf]
        %v1730 = vld [vmem:[%s1726 + $0xc] sm:$0xf]
        %v1731 = vld [vmem:[%s1726 + $0x10] sm:$0xf]
        %v1732 = vld [vmem:[%s1726 + $0x14] sm:$0xf]
        %v1733 = vld [vmem:[%s1726 + $0x18] sm:$0xf]
        %v1734 = vld [vmem:[%s1726 + $0x1c] sm:$0xf]
        %s1735 = scalar_lea.vmem %s864, 1
        %v1736 = vld [vmem:[%s1735] sm:$0x1]
        %v1738 = vlaneseq
        %v1739 = vshrl.u32 %v1738, 7
        %v1740 = vsub.s32 0, %v1739
        %v1741 = vrot.slane %v1736, %v1740
        %v1751 = vunpack.c.l.b16 %v1727
        %v1752 = vunpack.c.l.b16 %v1728
        %v1753 = vunpack.c.l.b16 %v1729
        %v1754 = vunpack.c.l.b16 %v1730
        %v1755 = vunpack.c.l.b16 %v1731
        %v1756 = vunpack.c.l.b16 %v1732
        %v1757 = vunpack.c.l.b16 %v1733
        %v1758 = vunpack.c.l.b16 %v1734
        %v1759 = vpack.c.b16 %v1752, %v1751
        %v1760 = vpack.c.b16 %v1754, %v1753
        %v1761 = vpack.c.b16 %v1756, %v1755
        %v1762 = vpack.c.b16 %v1758, %v1757
        %1767 = vmatprep.subr.bf16.mxu0 0
        %1768 = vmatpush1.bf16.msra.mxu0 %v1759
        %1769 = vmatprep.subr.bf16.mxu0 0
        %1770 = vmatpush1.bf16.msra.mxu0 %v1760
        %1771 = vmatprep.subr.bf16.mxu0 0
        %1772 = vmatpush1.bf16.msra.mxu0 %v1761
        %1773 = vmatprep.subr.bf16.mxu0 0
        %1774 = vmatpush1.bf16.msra.mxu0 %v1762
        %1775 = vmatprep.subr.bf16.mxu0 0
        %1776 = vmatpush1.bf16.msra.mxu0 0
        %1777 = vmatprep.subr.bf16.mxu0 0
        %1778 = vmatpush1.bf16.msra.mxu0 0
        %1779 = vmatprep.subr.bf16.mxu0 0
        %1780 = vmatpush1.bf16.msra.mxu0 0
        %1781 = vmatprep.subr.bf16.mxu0 0
        %1782 = vmatpush1.bf16.msra.mxu0 0
        %1783 = vmatprep.subr.bf16.mxu0 0
        %1784 = vmatpush1.bf16.msra.mxu0 0
        %1785 = vmatprep.subr.bf16.mxu0 0
        %1786 = vmatpush1.bf16.msra.mxu0 0
        %1787 = vmatprep.subr.bf16.mxu0 0
        %1788 = vmatpush1.bf16.msra.mxu0 0
        %1789 = vmatprep.subr.bf16.mxu0 0
        %1790 = vmatpush1.bf16.msra.mxu0 0
        %1791 = vmatprep.subr.bf16.mxu0 0
        %1792 = vmatpush1.bf16.msra.mxu0 0
        %1793 = vmatprep.subr.bf16.mxu0 0
        %1794 = vmatpush1.bf16.msra.mxu0 0
        %1795 = vmatprep.subr.bf16.mxu0 0
        %1796 = vmatpush1.bf16.msra.mxu0 0
        %1797 = vmatprep.subr.bf16.mxu0 0
        %1798 = vmatpush1.bf16.msra.mxu0 0
        %1799 = vmatprep.mubr.bf16.mxu0 0
        %1800 = vmatmul.mubr.bf16.gmra.mrb[0].mxu0 %v1149
        %v1801 = vpop.f32.mrb[0].mxu0
        %v1802 = vadd.f32 %v1741, %v1801
        %v1803 = vpop.f32.mrb[0].mxu0
        %v1804 = vpop.f32.mrb[0].mxu0
        %v1805 = vadd.f32 %v1741, %v1804
        %v1806 = vpop.f32.mrb[0].mxu0
        %1807 = vmatprep.mubr.bf16.mxu0 0
        %1808 = vmatmul.mubr.bf16.gmra.mrb[0].mxu0 %v1152
        %v1809 = vpop.f32.mrb[0].mxu0
        %v1810 = vadd.f32 %v1741, %v1809
        %v1811 = vpop.f32.mrb[0].mxu0
        %v1812 = vpop.f32.mrb[0].mxu0
        %v1813 = vadd.f32 %v1741, %v1812
        %v1814 = vpop.f32.mrb[0].mxu0
        %1815 = vdwg.mxu0
        %s1816 = scalar_lea.vmem %s869, 32
        %v1817 = vld [vmem:[%s1816] sm:$0xf]
        %v1818 = vld [vmem:[%s1816 + $0x4] sm:$0xf]
        %v1819 = vld [vmem:[%s1816 + $0x8] sm:$0xf]
        %v1820 = vld [vmem:[%s1816 + $0xc] sm:$0xf]
        %v1821 = vld [vmem:[%s1816 + $0x10] sm:$0xf]
        %v1822 = vld [vmem:[%s1816 + $0x14] sm:$0xf]
        %v1823 = vld [vmem:[%s1816 + $0x18] sm:$0xf]
        %v1824 = vld [vmem:[%s1816 + $0x1c] sm:$0xf]
        %s1825 = scalar_lea.vmem %s873, 1
        %v1826 = vld [vmem:[%s1825] sm:$0x1]
        %v1828 = vlaneseq
        %v1829 = vshrl.u32 %v1828, 7
        %v1830 = vsub.s32 0, %v1829
        %v1831 = vrot.slane %v1826, %v1830
        %v1841 = vunpack.c.l.b16 %v1817
        %v1842 = vunpack.c.l.b16 %v1818
        %v1843 = vunpack.c.l.b16 %v1819
        %v1844 = vunpack.c.l.b16 %v1820
        %v1845 = vunpack.c.l.b16 %v1821
        %v1846 = vunpack.c.l.b16 %v1822
        %v1847 = vunpack.c.l.b16 %v1823
        %v1848 = vunpack.c.l.b16 %v1824
        %v1849 = vpack.c.b16 %v1842, %v1841
        %v1850 = vpack.c.b16 %v1844, %v1843
        %v1851 = vpack.c.b16 %v1846, %v1845
        %v1852 = vpack.c.b16 %v1848, %v1847
        %1857 = vmatprep.subr.bf16.mxu0 0
        %1858 = vmatpush1.bf16.msra.mxu0 %v1849
        %1859 = vmatprep.subr.bf16.mxu0 0
        %1860 = vmatpush1.bf16.msra.mxu0 %v1850
        %1861 = vmatprep.subr.bf16.mxu0 0
        %1862 = vmatpush1.bf16.msra.mxu0 %v1851
        %1863 = vmatprep.subr.bf16.mxu0 0
        %1864 = vmatpush1.bf16.msra.mxu0 %v1852
        %1865 = vmatprep.subr.bf16.mxu0 0
        %1866 = vmatpush1.bf16.msra.mxu0 0
        %1867 = vmatprep.subr.bf16.mxu0 0
        %1868 = vmatpush1.bf16.msra.mxu0 0
        %1869 = vmatprep.subr.bf16.mxu0 0
        %1870 = vmatpush1.bf16.msra.mxu0 0
        %1871 = vmatprep.subr.bf16.mxu0 0
        %1872 = vmatpush1.bf16.msra.mxu0 0
        %1873 = vmatprep.subr.bf16.mxu0 0
        %1874 = vmatpush1.bf16.msra.mxu0 0
        %1875 = vmatprep.subr.bf16.mxu0 0
        %1876 = vmatpush1.bf16.msra.mxu0 0
        %1877 = vmatprep.subr.bf16.mxu0 0
        %1878 = vmatpush1.bf16.msra.mxu0 0
        %1879 = vmatprep.subr.bf16.mxu0 0
        %1880 = vmatpush1.bf16.msra.mxu0 0
        %1881 = vmatprep.subr.bf16.mxu0 0
        %1882 = vmatpush1.bf16.msra.mxu0 0
        %1883 = vmatprep.subr.bf16.mxu0 0
        %1884 = vmatpush1.bf16.msra.mxu0 0
        %1885 = vmatprep.subr.bf16.mxu0 0
        %1886 = vmatpush1.bf16.msra.mxu0 0
        %1887 = vmatprep.subr.bf16.mxu0 0
        %1888 = vmatpush1.bf16.msra.mxu0 0
        %1889 = vmatprep.mubr.bf16.mxu0 0
        %1890 = vmatmul.mubr.bf16.gmra.mrb[0].mxu0 %v1149
        %v1891 = vpop.f32.mrb[0].mxu0
        %v1892 = vadd.f32 %v1831, %v1891
        %v1893 = vpop.f32.mrb[0].mxu0
        %v1894 = vpop.f32.mrb[0].mxu0
        %v1895 = vadd.f32 %v1831, %v1894
        %v1896 = vpop.f32.mrb[0].mxu0
        %1897 = vmatprep.mubr.bf16.mxu0 0
        %1898 = vmatmul.mubr.bf16.gmra.mrb[0].mxu0 %v1152
        %v1899 = vpop.f32.mrb[0].mxu0
        %v1900 = vadd.f32 %v1831, %v1899
        %v1901 = vpop.f32.mrb[0].mxu0
        %v1902 = vpop.f32.mrb[0].mxu0
        %v1903 = vadd.f32 %v1831, %v1902
        %v1904 = vpop.f32.mrb[0].mxu0
        %1905 = vdwg.mxu0
        %v1907 = vsel %vm1379, %v1712, 0
        %v1910 = vsel %vm1379, %v1715, 0
        %v1913 = vsel %vm1379, %v1720, 0
        %v1916 = vsel %vm1379, %v1723, 0
        %v1919 = vsel %vm1379, %v1802, 0
        %v1922 = vsel %vm1379, %v1805, 0
        %v1925 = vsel %vm1379, %v1810, 0
        %v1928 = vsel %vm1379, %v1813, 0
        %1930 = vmatprep.subr.mxu0 0.0
        %1931 = vmatpush1.xpose.msra.mxu0 %v1919
        %1932 = vmatprep.subr.mxu0 0.0
        %1933 = vmatpush1.xpose.msra.mxu0 %v1922
        %1934 = vmatprep.subr.mxu0 0.0
        %1935 = vmatpush1.xpose.msra.mxu0 %v1925
        %1936 = vmatprep.subr.mxu0 0.0
        %1937 = vmatpush1.xpose.msra.mxu0 %v1928
        %1938 = vmatprep.subr.mxu0 0.0
        %1939 = vmatpush1.xpose.msra.mxu0 0.0
        %1940 = vmatprep.subr.mxu0 0.0
        %1941 = vmatpush1.xpose.msra.mxu0 0.0
        %1942 = vmatprep.subr.mxu0 0.0
        %1943 = vmatpush1.xpose.msra.mxu0 0.0
        %1944 = vmatprep.subr.mxu0 0.0
        %1945 = vmatpush1.xpose.msra.mxu0 0.0
        %1946 = vmatprep.subr.mxu0 0.0
        %1947 = vmatpush1.xpose.msra.mxu0 0.0
        %1948 = vmatprep.subr.mxu0 0.0
        %1949 = vmatpush1.xpose.msra.mxu0 0.0
        %1950 = vmatprep.subr.mxu0 0.0
        %1951 = vmatpush1.xpose.msra.mxu0 0.0
        %1952 = vmatprep.subr.mxu0 0.0
        %1953 = vmatpush1.xpose.msra.mxu0 0.0
        %1954 = vmatprep.subr.mxu0 0.0
        %1955 = vmatpush1.xpose.msra.mxu0 0.0
        %1956 = vmatprep.subr.mxu0 0.0
        %1957 = vmatpush1.xpose.msra.mxu0 0.0
        %1958 = vmatprep.subr.mxu0 0.0
        %1959 = vmatpush1.xpose.msra.mxu0 0.0
        %1960 = vmatprep.subr.mxu0 0.0
        %1961 = vmatpush1.xpose.msra.mxu0 0.0
        %1962 = vmatprep.subr.mxu0 0.0
        %1963 = vmatpush1.xpose.msra.mxu0 0.0
        %1964 = vmatprep.subr.mxu0 0.0
        %1965 = vmatpush1.xpose.msra.mxu0 0.0
        %1966 = vmatprep.subr.mxu0 0.0
        %1967 = vmatpush1.xpose.msra.mxu0 0.0
        %1968 = vmatprep.subr.mxu0 0.0
        %1969 = vmatpush1.xpose.msra.mxu0 0.0
        %1970 = vmatprep.subr.mxu0 0.0
        %1971 = vmatpush1.xpose.msra.mxu0 0.0
        %1972 = vmatprep.subr.mxu0 0.0
        %1973 = vmatpush1.xpose.msra.mxu0 0.0
        %1974 = vmatprep.subr.mxu0 0.0
        %1975 = vmatpush1.xpose.msra.mxu0 0.0
        %1976 = vmatprep.subr.mxu0 0.0
        %1977 = vmatpush1.xpose.msra.mxu0 0.0
        %1978 = vmatprep.subr.mxu0 0.0
        %1979 = vmatpush1.xpose.msra.mxu0 0.0
        %1980 = vmatprep.subr.mxu0 0.0
        %1981 = vmatpush1.xpose.msra.mxu0 0.0
        %1982 = vmatprep.subr.mxu0 0.0
        %1983 = vmatpush1.xpose.msra.mxu0 0.0
        %1984 = vmatprep.subr.mxu0 0.0
        %1985 = vmatpush1.xpose.msra.mxu0 0.0
        %1986 = vmatprep.subr.mxu0 0.0
        %1987 = vmatpush1.xpose.msra.mxu0 0.0
        %1988 = vmatprep.subr.mxu0 0.0
        %1989 = vmatpush1.xpose.msra.mxu0 0.0
        %1990 = vmatprep.subr.mxu0 0.0
        %1991 = vmatpush1.xpose.msra.mxu0 0.0
        %1992 = vmatprep.subr.mxu0 0.0
        %1993 = vmatpush1.xpose.msra.mxu0 0.0
        %1994 = vmatprep.mubr.f32.mxu0 0.0
        %1995 = vmatmul.mubr.f32.gmra.mrb[0].mxu0 %v1907
        %v1996 = vpop.f32.mrb[0].mxu0
        %v1997 = vadd.f32 %v1027, %v1996
        %v1998 = vpop.f32.mrb[0].mxu0
        %1999 = vmatprep.mubr.f32.mxu0 0.0
        %2000 = vmatmul.mubr.f32.gmra.mrb[0].mxu0 %v1910
        %v2001 = vpop.f32.mrb[0].mxu0
        %v2002 = vadd.f32 %v1028, %v2001
        %v2003 = vpop.f32.mrb[0].mxu0
        %2004 = vmatprep.mubr.f32.mxu0 0.0
        %2005 = vmatmul.mubr.f32.gmra.mrb[0].mxu0 %v1913
        %v2006 = vpop.f32.mrb[0].mxu0
        %v2007 = vadd.f32 %v1029, %v2006
        %v2008 = vpop.f32.mrb[0].mxu0
        %2009 = vmatprep.mubr.f32.mxu0 0.0
        %2010 = vmatmul.mubr.f32.gmra.mrb[0].mxu0 %v1916
        %v2011 = vpop.f32.mrb[0].mxu0
        %v2012 = vadd.f32 %v1030, %v2011
        %v2013 = vpop.f32.mrb[0].mxu0
        %2014 = vdwg.mxu0
        %v2015 = vsel %vm1379, %v1997, -inf
        %2016 = vmax.xlane.f32.xlu0 %v2015
        %v2017 = vpop.xlane.xlu0 %2016
        %v2018 = vsel %vm1379, %v2002, -inf
        %2019 = vmax.xlane.f32.xlu0 %v2018
        %v2020 = vpop.xlane.xlu0 %2019
        %v2021 = vsel %vm1379, %v2007, -inf
        %2022 = vmax.xlane.f32.xlu0 %v2021
        %v2023 = vpop.xlane.xlu0 %2022
        %v2024 = vsel %vm1379, %v2012, -inf
        %2025 = vmax.xlane.f32.xlu0 %v2024
        %v2026 = vpop.xlane.xlu0 %2025
        %v2027 = vsub.f32 %v1997, %v2017
        %v2028 = vsub.f32 %v2002, %v2020
        %v2029 = vsub.f32 %v2007, %v2023
        %v2030 = vsub.f32 %v2012, %v2026
        %v2031 = vmul.f32 %v2027, 1.442695
        %v2032 = vpow.pop %v2031
        %v2033 = vmul.f32 %v2028, 1.442695
        %v2034 = vpow.pop %v2033
        %v2035 = vmul.f32 %v2029, 1.442695
        %v2036 = vpow.pop %v2035
        %v2037 = vmul.f32 %v2030, 1.442695
        %v2038 = vpow.pop %v2037
        %v2039 = vsel %vm1379, %v2032, 0.0
        %2040 = vadd.xlane.f32.xlu0 %v2039
        %v2041 = vpop.xlane.xlu0 %2040
        %v2042 = vsel %vm1379, %v2034, 0.0
        %2043 = vadd.xlane.f32.xlu0 %v2042
        %v2044 = vpop.xlane.xlu0 %2043
        %v2045 = vsel %vm1379, %v2036, 0.0
        %2046 = vadd.xlane.f32.xlu0 %v2045
        %v2047 = vpop.xlane.xlu0 %2046
        %v2048 = vsel %vm1379, %v2038, 0.0
        %2049 = vadd.xlane.f32.xlu0 %v2048
        %v2050 = vpop.xlane.xlu0 %2049
        %v2051 = vrcp.pop %v2041
        %v2052 = vrcp.pop %v2044
        %v2053 = vrcp.pop %v2047
        %v2054 = vrcp.pop %v2050
        %v2055 = vmul.f32 %v2032, %v2051
        %v2056 = vmul.f32 %v2034, %v2052
        %v2057 = vmul.f32 %v2036, %v2053
        %v2058 = vmul.f32 %v2038, %v2054
        %v2060 = vsel %vm1379, %v2055, 0
        %v2063 = vsel %vm1379, %v2056, 0
        %v2066 = vsel %vm1379, %v2057, 0
        %v2069 = vsel %vm1379, %v2058, 0
        %2071 = vmatprep.subr.mxu0 0.0
        %2072 = vmatpush1.msra.mxu0 %v1892
        %2073 = vmatprep.subr.mxu0 0.0
        %2074 = vmatpush1.msra.mxu0 %v1895
        %2075 = vmatprep.subr.mxu0 0.0
        %2076 = vmatpush1.msra.mxu0 %v1900
        %2077 = vmatprep.subr.mxu0 0.0
        %2078 = vmatpush1.msra.mxu0 %v1903
        %2079 = vmatprep.subr.mxu0 0.0
        %2080 = vmatpush1.msra.mxu0 0.0
        %2081 = vmatprep.subr.mxu0 0.0
        %2082 = vmatpush1.msra.mxu0 0.0
        %2083 = vmatprep.subr.mxu0 0.0
        %2084 = vmatpush1.msra.mxu0 0.0
        %2085 = vmatprep.subr.mxu0 0.0
        %2086 = vmatpush1.msra.mxu0 0.0
        %2087 = vmatprep.subr.mxu0 0.0
        %2088 = vmatpush1.msra.mxu0 0.0
        %2089 = vmatprep.subr.mxu0 0.0
        %2090 = vmatpush1.msra.mxu0 0.0
        %2091 = vmatprep.subr.mxu0 0.0
        %2092 = vmatpush1.msra.mxu0 0.0
        %2093 = vmatprep.subr.mxu0 0.0
        %2094 = vmatpush1.msra.mxu0 0.0
        %2095 = vmatprep.subr.mxu0 0.0
        %2096 = vmatpush1.msra.mxu0 0.0
        %2097 = vmatprep.subr.mxu0 0.0
        %2098 = vmatpush1.msra.mxu0 0.0
        %2099 = vmatprep.subr.mxu0 0.0
        %2100 = vmatpush1.msra.mxu0 0.0
        %2101 = vmatprep.subr.mxu0 0.0
        %2102 = vmatpush1.msra.mxu0 0.0
        %2103 = vmatprep.subr.mxu0 0.0
        %2104 = vmatpush1.msra.mxu0 0.0
        %2105 = vmatprep.subr.mxu0 0.0
        %2106 = vmatpush1.msra.mxu0 0.0
        %2107 = vmatprep.subr.mxu0 0.0
        %2108 = vmatpush1.msra.mxu0 0.0
        %2109 = vmatprep.subr.mxu0 0.0
        %2110 = vmatpush1.msra.mxu0 0.0
        %2111 = vmatprep.subr.mxu0 0.0
        %2112 = vmatpush1.msra.mxu0 0.0
        %2113 = vmatprep.subr.mxu0 0.0
        %2114 = vmatpush1.msra.mxu0 0.0
        %2115 = vmatprep.subr.mxu0 0.0
        %2116 = vmatpush1.msra.mxu0 0.0
        %2117 = vmatprep.subr.mxu0 0.0
        %2118 = vmatpush1.msra.mxu0 0.0
        %2119 = vmatprep.subr.mxu0 0.0
        %2120 = vmatpush1.msra.mxu0 0.0
        %2121 = vmatprep.subr.mxu0 0.0
        %2122 = vmatpush1.msra.mxu0 0.0
        %2123 = vmatprep.subr.mxu0 0.0
        %2124 = vmatpush1.msra.mxu0 0.0
        %2125 = vmatprep.subr.mxu0 0.0
        %2126 = vmatpush1.msra.mxu0 0.0
        %2127 = vmatprep.subr.mxu0 0.0
        %2128 = vmatpush1.msra.mxu0 0.0
        %2129 = vmatprep.subr.mxu0 0.0
        %2130 = vmatpush1.msra.mxu0 0.0
        %2131 = vmatprep.subr.mxu0 0.0
        %2132 = vmatpush1.msra.mxu0 0.0
        %2133 = vmatprep.subr.mxu0 0.0
        %2134 = vmatpush1.msra.mxu0 0.0
        %2135 = vmatprep.mubr.f32.mxu0 0.0
        %2136 = vmatmul.mubr.f32.gmra.mrb[0].mxu0 %v2060
        %v2137 = vpop.f32.mrb[0].mxu0
        %v2138 = vadd.f32 0.0, %v2137
        %v2139 = vpop.f32.mrb[0].mxu0
        %2140 = vmatprep.mubr.f32.mxu0 0.0
        %2141 = vmatmul.mubr.f32.gmra.mrb[0].mxu0 %v2063
        %v2142 = vpop.f32.mrb[0].mxu0
        %v2143 = vadd.f32 0.0, %v2142
        %v2144 = vpop.f32.mrb[0].mxu0
        %2145 = vmatprep.mubr.f32.mxu0 0.0
        %2146 = vmatmul.mubr.f32.gmra.mrb[0].mxu0 %v2066
        %v2147 = vpop.f32.mrb[0].mxu0
        %v2148 = vadd.f32 0.0, %v2147
        %v2149 = vpop.f32.mrb[0].mxu0
        %2150 = vmatprep.mubr.f32.mxu0 0.0
        %2151 = vmatmul.mubr.f32.gmra.mrb[0].mxu0 %v2069
        %v2152 = vpop.f32.mrb[0].mxu0
        %v2153 = vadd.f32 0.0, %v2152
        %v2154 = vpop.f32.mrb[0].mxu0
        %2155 = vdwg.mxu0
        %v2156 = vpack.c.bf16 %v2143, %v2138
        %v2157 = vpack.c.bf16 %v2153, %v2148
        %s2158 = scalar_lea.vmem %s878, 16
        %v2159 = vld [vmem:[%s2158] sm:$0xf]
        %v2160 = vld [vmem:[%s2158 + $0x4] sm:$0xf]
        %v2161 = vld [vmem:[%s2158 + $0x8] sm:$0xf]
        %v2162 = vld [vmem:[%s2158 + $0xc] sm:$0xf]
        %v2167 = vunpack.c.l.b16 %v2159
        %v2168 = vunpack.c.l.b16 %v2160
        %v2169 = vunpack.c.l.b16 %v2161
        %v2170 = vunpack.c.l.b16 %v2162
        %v2171 = vpack.c.b16 %v2168, %v2167
        %v2172 = vpack.c.b16 %v2170, %v2169
        %v2176 = vsel %vm1379, %v2156, 0
        %v2179 = vsel %vm1379, %v2157, 0
        %2181 = vmatprep.subr.bf16.mxu0 0
        %2182 = vmatpush1.bf16.msra.mxu0 %v2171
        %2183 = vmatprep.subr.bf16.mxu0 0
        %2184 = vmatpush1.bf16.msra.mxu0 %v2172
        %2185 = vmatprep.subr.bf16.mxu0 0
        %2186 = vmatpush1.bf16.msra.mxu0 0
        %2187 = vmatprep.subr.bf16.mxu0 0
        %2188 = vmatpush1.bf16.msra.mxu0 0
        %2189 = vmatprep.subr.bf16.mxu0 0
        %2190 = vmatpush1.bf16.msra.mxu0 0
        %2191 = vmatprep.subr.bf16.mxu0 0
        %2192 = vmatpush1.bf16.msra.mxu0 0
        %2193 = vmatprep.subr.bf16.mxu0 0
        %2194 = vmatpush1.bf16.msra.mxu0 0
        %2195 = vmatprep.subr.bf16.mxu0 0
        %2196 = vmatpush1.bf16.msra.mxu0 0
        %2197 = vmatprep.subr.bf16.mxu0 0
        %2198 = vmatpush1.bf16.msra.mxu0 0
        %2199 = vmatprep.subr.bf16.mxu0 0
        %2200 = vmatpush1.bf16.msra.mxu0 0
        %2201 = vmatprep.subr.bf16.mxu0 0
        %2202 = vmatpush1.bf16.msra.mxu0 0
        %2203 = vmatprep.subr.bf16.mxu0 0
        %2204 = vmatpush1.bf16.msra.mxu0 0
        %2205 = vmatprep.subr.bf16.mxu0 0
        %2206 = vmatpush1.bf16.msra.mxu0 0
        %2207 = vmatprep.subr.bf16.mxu0 0
        %2208 = vmatpush1.bf16.msra.mxu0 0
        %2209 = vmatprep.subr.bf16.mxu0 0
        %2210 = vmatpush1.bf16.msra.mxu0 0
        %2211 = vmatprep.subr.bf16.mxu0 0
        %2212 = vmatpush1.bf16.msra.mxu0 0
        %2213 = vmatprep.mubr.bf16.mxu0 0
        %2214 = vmatmul.mubr.bf16.gmra.mrb[0].mxu0 %v2176
        %v2215 = vpop.f32.mrb[0].mxu0
        %v2216 = vadd.f32 0.0, %v2215
        %v2217 = vpop.f32.mrb[0].mxu0
        %v2218 = vpop.f32.mrb[0].mxu0
        %v2219 = vadd.f32 0.0, %v2218
        %v2220 = vpop.f32.mrb[0].mxu0
        %2221 = vmatprep.mubr.bf16.mxu0 0
        %2222 = vmatmul.mubr.bf16.gmra.mrb[0].mxu0 %v2179
        %v2223 = vpop.f32.mrb[0].mxu0
        %v2224 = vadd.f32 0.0, %v2223
        %v2225 = vpop.f32.mrb[0].mxu0
        %v2226 = vpop.f32.mrb[0].mxu0
        %v2227 = vadd.f32 0.0, %v2226
        %v2228 = vpop.f32.mrb[0].mxu0
        %2229 = vdwg.mxu0
        %v2234 = vunpack.c.l.b16 %v1632
        %v2235 = vunpack.c.l.b16 %v1633
        %v2236 = vunpack.c.l.b16 %v1634
        %v2237 = vunpack.c.l.b16 %v1635
        %v2238 = vpack.c.b16 %v2235, %v2234
        %v2239 = vpack.c.b16 %v2237, %v2236
        %v2243 = vsel %vm1379, %v1630, 0
        %v2246 = vsel %vm1379, %v1631, 0
        %2248 = vmatprep.subr.bf16.mxu0 0
        %2249 = vmatpush1.bf16.msra.mxu0 %v2238
        %2250 = vmatprep.subr.bf16.mxu0 0
        %2251 = vmatpush1.bf16.msra.mxu0 %v2239
        %2252 = vmatprep.subr.bf16.mxu0 0
        %2253 = vmatpush1.bf16.msra.mxu0 0
        %2254 = vmatprep.subr.bf16.mxu0 0
        %2255 = vmatpush1.bf16.msra.mxu0 0
        %2256 = vmatprep.subr.bf16.mxu0 0
        %2257 = vmatpush1.bf16.msra.mxu0 0
        %2258 = vmatprep.subr.bf16.mxu0 0
        %2259 = vmatpush1.bf16.msra.mxu0 0
        %2260 = vmatprep.subr.bf16.mxu0 0
        %2261 = vmatpush1.bf16.msra.mxu0 0
        %2262 = vmatprep.subr.bf16.mxu0 0
        %2263 = vmatpush1.bf16.msra.mxu0 0
        %2264 = vmatprep.subr.bf16.mxu0 0
        %2265 = vmatpush1.bf16.msra.mxu0 0
        %2266 = vmatprep.subr.bf16.mxu0 0
        %2267 = vmatpush1.bf16.msra.mxu0 0
        %2268 = vmatprep.subr.bf16.mxu0 0
        %2269 = vmatpush1.bf16.msra.mxu0 0
        %2270 = vmatprep.subr.bf16.mxu0 0
        %2271 = vmatpush1.bf16.msra.mxu0 0
        %2272 = vmatprep.subr.bf16.mxu0 0
        %2273 = vmatpush1.bf16.msra.mxu0 0
        %2274 = vmatprep.subr.bf16.mxu0 0
        %2275 = vmatpush1.bf16.msra.mxu0 0
        %2276 = vmatprep.subr.bf16.mxu0 0
        %2277 = vmatpush1.bf16.msra.mxu0 0
        %2278 = vmatprep.subr.bf16.mxu0 0
        %2279 = vmatpush1.bf16.msra.mxu0 0
        %2280 = vmatprep.mubr.bf16.mxu0 0
        %2281 = vmatmul.mubr.bf16.gmra.mrb[0].mxu0 %v2243
        %v2282 = vpop.f32.mrb[0].mxu0
        %v2283 = vadd.f32 %v2216, %v2282
        %v2284 = vpop.f32.mrb[0].mxu0
        %v2285 = vpop.f32.mrb[0].mxu0
        %v2286 = vadd.f32 %v2219, %v2285
        %v2287 = vpop.f32.mrb[0].mxu0
        %2288 = vmatprep.mubr.bf16.mxu0 0
        %2289 = vmatmul.mubr.bf16.gmra.mrb[0].mxu0 %v2246
        %v2290 = vpop.f32.mrb[0].mxu0
        %v2291 = vadd.f32 %v2224, %v2290
        %v2292 = vpop.f32.mrb[0].mxu0
        %v2293 = vpop.f32.mrb[0].mxu0
        %v2294 = vadd.f32 %v2227, %v2293
        %v2295 = vpop.f32.mrb[0].mxu0
        %2296 = vdwg.mxu0
        %v2297 = vadd.f32 %v1023, %v2283
        %v2298 = vadd.f32 %v1024, %v2286
        %v2299 = vadd.f32 %v1025, %v2291
        %v2300 = vadd.f32 %v1026, %v2294
        %v2301 = vld [vmem:[%s881] sm:$0x1]
        %v2303 = vlaneseq
        %v2304 = vshrl.u32 %v2303, 7
        %v2305 = vsub.s32 0, %v2304
        %v2306 = vrot.slane %v2301, %v2305
        %v2308 = vadd.f32 %v2297, %v2306
        %v2309 = vadd.f32 %v2298, %v2306
        %v2310 = vadd.f32 %v2299, %v2306
        %v2311 = vadd.f32 %v2300, %v2306
        %v2312 = vld [vmem:[%s884] sm:$0x1]
        %v2313 = vld [vmem:[%s887] sm:$0x1]
        %v2314 = vsel %vm1033, %v2308, 0.0
        %2315 = vadd.xlane.f32.xlu0 %v2314
        %v2316 = vpop.xlane.xlu0 %2315
        %v2317 = vsel %vm1033, %v2309, 0.0
        %2318 = vadd.xlane.f32.xlu0 %v2317
        %v2319 = vpop.xlane.xlu0 %2318
        %v2320 = vsel %vm1033, %v2310, 0.0
        %2321 = vadd.xlane.f32.xlu0 %v2320
        %v2322 = vpop.xlane.xlu0 %2321
        %v2323 = vsel %vm1033, %v2311, 0.0
        %2324 = vadd.xlane.f32.xlu0 %v2323
        %v2325 = vpop.xlane.xlu0 %2324
        %v2326 = vmul.f32 %v2316, %v1046
        %v2327 = vmul.f32 %v2319, %v1046
        %v2328 = vmul.f32 %v2322, %v1046
        %v2329 = vmul.f32 %v2325, %v1046
        %v2330 = vsub.f32 %v2308, %v2326
        %v2331 = vsub.f32 %v2309, %v2327
        %v2332 = vsub.f32 %v2310, %v2328
        %v2333 = vsub.f32 %v2311, %v2329
        %v2334 = vmul.f32 %v2330, %v2330
        %v2335 = vmul.f32 %v2331, %v2331
        %v2336 = vmul.f32 %v2332, %v2332
        %v2337 = vmul.f32 %v2333, %v2333
        %v2338 = vsel %vm1033, %v2334, 0.0
        %2339 = vadd.xlane.f32.xlu0 %v2338
        %v2340 = vpop.xlane.xlu0 %2339
        %v2341 = vsel %vm1033, %v2335, 0.0
        %2342 = vadd.xlane.f32.xlu0 %v2341
        %v2343 = vpop.xlane.xlu0 %2342
        %v2344 = vsel %vm1033, %v2336, 0.0
        %2345 = vadd.xlane.f32.xlu0 %v2344
        %v2346 = vpop.xlane.xlu0 %2345
        %v2347 = vsel %vm1033, %v2337, 0.0
        %2348 = vadd.xlane.f32.xlu0 %v2347
        %v2349 = vpop.xlane.xlu0 %2348
        %v2350 = vmul.f32 %v2340, %v1046
        %v2351 = vmul.f32 %v2343, %v1046
        %v2352 = vmul.f32 %v2346, %v1046
        %v2353 = vmul.f32 %v2349, %v1046
        %v2354 = vadd.f32 %v2350, 1e-06
        %v2355 = vadd.f32 %v2351, 1e-06
        %v2356 = vadd.f32 %v2352, 1e-06
        %v2357 = vadd.f32 %v2353, 1e-06
        %v2358 = vrsqrt.pop %v2354
        %v2359 = vrsqrt.pop %v2355
        %v2360 = vrsqrt.pop %v2356
        %v2361 = vrsqrt.pop %v2357
        %v2362 = vmul.f32 %v2330, %v2358
        %v2363 = vmul.f32 %v2331, %v2359
        %v2364 = vmul.f32 %v2332, %v2360
        %v2365 = vmul.f32 %v2333, %v2361
        %v2367 = vlaneseq
        %v2368 = vshrl.u32 %v2367, 7
        %v2369 = vsub.s32 0, %v2368
        %v2370 = vrot.slane %v2312, %v2369
        %v2372 = vmul.f32 %v2362, %v2370
        %v2373 = vmul.f32 %v2363, %v2370
        %v2374 = vmul.f32 %v2364, %v2370
        %v2375 = vmul.f32 %v2365, %v2370
        %v2377 = vlaneseq
        %v2378 = vshrl.u32 %v2377, 7
        %v2379 = vsub.s32 0, %v2378
        %v2380 = vrot.slane %v2313, %v2379
        %v2382 = vadd.f32 %v2372, %v2380
        %v2383 = vadd.f32 %v2373, %v2380
        %v2384 = vadd.f32 %v2374, %v2380
        %v2385 = vadd.f32 %v2375, %v2380
        %v2386 = vpack.c.bf16 %v2383, %v2382
        %v2387 = vpack.c.bf16 %v2385, %v2384
        %v2388 = vld [vmem:[%s892] sm:$0xf]
        %v2389 = vld [vmem:[%s892 + $0x4] sm:$0xf]
        %v2390 = vld [vmem:[%s892 + $0x8] sm:$0xf]
        %v2391 = vld [vmem:[%s892 + $0xc] sm:$0xf]
        %v2392 = vld [vmem:[%s892 + $0x10] sm:$0xf]
        %v2393 = vld [vmem:[%s892 + $0x14] sm:$0xf]
        %v2394 = vld [vmem:[%s892 + $0x18] sm:$0xf]
        %v2395 = vld [vmem:[%s892 + $0x1c] sm:$0xf]
        %v2396 = vld [vmem:[%s895] sm:$0x1]
        %v2398 = vlaneseq
        %v2399 = vshrl.u32 %v2398, 7
        %v2400 = vsub.s32 0, %v2399
        %v2401 = vrot.slane %v2396, %v2400
        %v2411 = vunpack.c.l.b16 %v2388
        %v2412 = vunpack.c.l.b16 %v2389
        %v2413 = vunpack.c.l.b16 %v2390
        %v2414 = vunpack.c.l.b16 %v2391
        %v2415 = vunpack.c.l.b16 %v2392
        %v2416 = vunpack.c.l.b16 %v2393
        %v2417 = vunpack.c.l.b16 %v2394
        %v2418 = vunpack.c.l.b16 %v2395
        %v2419 = vpack.c.b16 %v2412, %v2411
        %v2420 = vpack.c.b16 %v2414, %v2413
        %v2421 = vpack.c.b16 %v2416, %v2415
        %v2422 = vpack.c.b16 %v2418, %v2417
        %v2428 = vsel %vm1033, %v2386, 0
        %v2431 = vsel %vm1033, %v2387, 0
        %2433 = vmatprep.subr.bf16.mxu0 0
        %2434 = vmatpush1.bf16.msra.mxu0 %v2419
        %2435 = vmatprep.subr.bf16.mxu0 0
        %2436 = vmatpush1.bf16.msra.mxu0 %v2420
        %2437 = vmatprep.subr.bf16.mxu0 0
        %2438 = vmatpush1.bf16.msra.mxu0 %v2421
        %2439 = vmatprep.subr.bf16.mxu0 0
        %2440 = vmatpush1.bf16.msra.mxu0 %v2422
        %2441 = vmatprep.subr.bf16.mxu0 0
        %2442 = vmatpush1.bf16.msra.mxu0 0
        %2443 = vmatprep.subr.bf16.mxu0 0
        %2444 = vmatpush1.bf16.msra.mxu0 0
        %2445 = vmatprep.subr.bf16.mxu0 0
        %2446 = vmatpush1.bf16.msra.mxu0 0
        %2447 = vmatprep.subr.bf16.mxu0 0
        %2448 = vmatpush1.bf16.msra.mxu0 0
        %2449 = vmatprep.subr.bf16.mxu0 0
        %2450 = vmatpush1.bf16.msra.mxu0 0
        %2451 = vmatprep.subr.bf16.mxu0 0
        %2452 = vmatpush1.bf16.msra.mxu0 0
        %2453 = vmatprep.subr.bf16.mxu0 0
        %2454 = vmatpush1.bf16.msra.mxu0 0
        %2455 = vmatprep.subr.bf16.mxu0 0
        %2456 = vmatpush1.bf16.msra.mxu0 0
        %2457 = vmatprep.subr.bf16.mxu0 0
        %2458 = vmatpush1.bf16.msra.mxu0 0
        %2459 = vmatprep.subr.bf16.mxu0 0
        %2460 = vmatpush1.bf16.msra.mxu0 0
        %2461 = vmatprep.subr.bf16.mxu0 0
        %2462 = vmatpush1.bf16.msra.mxu0 0
        %2463 = vmatprep.subr.bf16.mxu0 0
        %2464 = vmatpush1.bf16.msra.mxu0 0
        %2465 = vmatprep.mubr.bf16.mxu0 0
        %2466 = vmatmul.mubr.bf16.gmra.mrb[0].mxu0 %v2428
        %v2467 = vpop.f32.mrb[0].mxu0
        %v2468 = vadd.f32 %v2401, %v2467
        %v2469 = vpop.f32.mrb[0].mxu0
        %v2470 = vpop.f32.mrb[0].mxu0
        %v2471 = vadd.f32 %v2401, %v2470
        %v2472 = vpop.f32.mrb[0].mxu0
        %2473 = vmatprep.mubr.bf16.mxu0 0
        %2474 = vmatmul.mubr.bf16.gmra.mrb[0].mxu0 %v2431
        %v2475 = vpop.f32.mrb[0].mxu0
        %v2476 = vadd.f32 %v2401, %v2475
        %v2477 = vpop.f32.mrb[0].mxu0
        %v2478 = vpop.f32.mrb[0].mxu0
        %v2479 = vadd.f32 %v2401, %v2478
        %v2480 = vpop.f32.mrb[0].mxu0
        %2481 = vdwg.mxu0
        %v2482 = vmul.f32 %v2468, 0.5
        %v2483 = vmul.f32 %v2471, 0.5
        %v2484 = vmul.f32 %v2476, 0.5
        %v2485 = vmul.f32 %v2479, 0.5
        %v2486 = vmul.f32 %v2468, 0.044715
        %v2487 = vmul.f32 %v2471, 0.044715
        %v2488 = vmul.f32 %v2476, 0.044715
        %v2489 = vmul.f32 %v2479, 0.044715
        %v2490 = vmul.f32 %v2486, %v2468
        %v2491 = vmul.f32 %v2487, %v2471
        %v2492 = vmul.f32 %v2488, %v2476
        %v2493 = vmul.f32 %v2489, %v2479
        %v2494 = vmul.f32 %v2490, %v2468
        %v2495 = vmul.f32 %v2491, %v2471
        %v2496 = vmul.f32 %v2492, %v2476
        %v2497 = vmul.f32 %v2493, %v2479
        %v2498 = vadd.f32 %v2468, %v2494
        %v2499 = vadd.f32 %v2471, %v2495
        %v2500 = vadd.f32 %v2476, %v2496
        %v2501 = vadd.f32 %v2479, %v2497
        %v2502 = vmul.f32 %v2498, 0.7978846
        %v2503 = vmul.f32 %v2499, 0.7978846
        %v2504 = vmul.f32 %v2500, 0.7978846
        %v2505 = vmul.f32 %v2501, 0.7978846
        %v2506 = vtanh.pop %v2502
        %v2507 = vtanh.pop %v2503
        %v2508 = vtanh.pop %v2504
        %v2509 = vtanh.pop %v2505
        %v2510 = vadd.f32 %v2506, 1.0
        %v2511 = vadd.f32 %v2507, 1.0
        %v2512 = vadd.f32 %v2508, 1.0
        %v2513 = vadd.f32 %v2509, 1.0
        %v2514 = vmul.f32 %v2482, %v2510
        %v2515 = vmul.f32 %v2483, %v2511
        %v2516 = vmul.f32 %v2484, %v2512
        %v2517 = vmul.f32 %v2485, %v2513
        %v2518 = vpack.c.bf16 %v2515, %v2514
        %v2519 = vpack.c.bf16 %v2517, %v2516
        %v2520 = vld [vmem:[%s900] sm:$0xf]
        %v2521 = vld [vmem:[%s900 + $0x4] sm:$0xf]
        %v2522 = vld [vmem:[%s900 + $0x8] sm:$0xf]
        %v2523 = vld [vmem:[%s900 + $0xc] sm:$0xf]
        %v2524 = vld [vmem:[%s900 + $0x10] sm:$0xf]
        %v2525 = vld [vmem:[%s900 + $0x14] sm:$0xf]
        %v2526 = vld [vmem:[%s900 + $0x18] sm:$0xf]
        %v2527 = vld [vmem:[%s900 + $0x1c] sm:$0xf]
        %v2528 = vld [vmem:[%s900 + $0x20] sm:$0xf]
        %v2529 = vld [vmem:[%s900 + $0x24] sm:$0xf]
        %v2530 = vld [vmem:[%s900 + $0x28] sm:$0xf]
        %v2531 = vld [vmem:[%s900 + $0x2c] sm:$0xf]
        %v2532 = vld [vmem:[%s900 + $0x30] sm:$0xf]
        %v2533 = vld [vmem:[%s900 + $0x34] sm:$0xf]
        %v2534 = vld [vmem:[%s900 + $0x38] sm:$0xf]
        %v2535 = vld [vmem:[%s900 + $0x3c] sm:$0xf]
        %v2552 = vunpack.c.l.b16 %v2520
        %v2553 = vunpack.c.l.b16 %v2521
        %v2554 = vunpack.c.l.b16 %v2522
        %v2555 = vunpack.c.l.b16 %v2523
        %v2556 = vunpack.c.l.b16 %v2524
        %v2557 = vunpack.c.l.b16 %v2525
        %v2558 = vunpack.c.l.b16 %v2526
        %v2559 = vunpack.c.l.b16 %v2527
        %v2560 = vunpack.c.l.b16 %v2528
        %v2561 = vunpack.c.l.b16 %v2529
        %v2562 = vunpack.c.l.b16 %v2530
        %v2563 = vunpack.c.l.b16 %v2531
        %v2564 = vunpack.c.l.b16 %v2532
        %v2565 = vunpack.c.l.b16 %v2533
        %v2566 = vunpack.c.l.b16 %v2534
        %v2567 = vunpack.c.l.b16 %v2535
        %v2568 = vpack.c.b16 %v2553, %v2552
        %v2569 = vpack.c.b16 %v2555, %v2554
        %v2570 = vpack.c.b16 %v2557, %v2556
        %v2571 = vpack.c.b16 %v2559, %v2558
        %v2572 = vpack.c.b16 %v2561, %v2560
        %v2573 = vpack.c.b16 %v2563, %v2562
        %v2574 = vpack.c.b16 %v2565, %v2564
        %v2575 = vpack.c.b16 %v2567, %v2566
        %2584 = vmatprep.subr.bf16.mxu0 0
        %2585 = vmatpush1.bf16.msra.mxu0 %v2568
        %2586 = vmatprep.subr.bf16.mxu0 0
        %2587 = vmatpush1.bf16.msra.mxu0 %v2569
        %2588 = vmatprep.subr.bf16.mxu0 0
        %2589 = vmatpush1.bf16.msra.mxu0 %v2570
        %2590 = vmatprep.subr.bf16.mxu0 0
        %2591 = vmatpush1.bf16.msra.mxu0 %v2571
        %2592 = vmatprep.subr.bf16.mxu0 0
        %2593 = vmatpush1.bf16.msra.mxu0 %v2572
        %2594 = vmatprep.subr.bf16.mxu0 0
        %2595 = vmatpush1.bf16.msra.mxu0 %v2573
        %2596 = vmatprep.subr.bf16.mxu0 0
        %2597 = vmatpush1.bf16.msra.mxu0 %v2574
        %2598 = vmatprep.subr.bf16.mxu0 0
        %2599 = vmatpush1.bf16.msra.mxu0 %v2575
        %2600 = vmatprep.subr.bf16.mxu0 0
        %2601 = vmatpush1.bf16.msra.mxu0 0
        %2602 = vmatprep.subr.bf16.mxu0 0
        %2603 = vmatpush1.bf16.msra.mxu0 0
        %2604 = vmatprep.subr.bf16.mxu0 0
        %2605 = vmatpush1.bf16.msra.mxu0 0
        %2606 = vmatprep.subr.bf16.mxu0 0
        %2607 = vmatpush1.bf16.msra.mxu0 0
        %2608 = vmatprep.subr.bf16.mxu0 0
        %2609 = vmatpush1.bf16.msra.mxu0 0
        %2610 = vmatprep.subr.bf16.mxu0 0
        %2611 = vmatpush1.bf16.msra.mxu0 0
        %2612 = vmatprep.subr.bf16.mxu0 0
        %2613 = vmatpush1.bf16.msra.mxu0 0
        %2614 = vmatprep.subr.bf16.mxu0 0
        %2615 = vmatpush1.bf16.msra.mxu0 0
        %2616 = vmatprep.mubr.bf16.mxu0 0
        %2617 = vmatmul.mubr.bf16.gmra.mrb[0].mxu0 %v2518
        %v2618 = vpop.f32.mrb[0].mxu0
        %v2619 = vadd.f32 0.0, %v2618
        %v2620 = vpop.f32.mrb[0].mxu0
        %v2621 = vpop.f32.mrb[0].mxu0
        %v2622 = vadd.f32 0.0, %v2621
        %v2623 = vpop.f32.mrb[0].mxu0
        %2624 = vmatprep.mubr.bf16.mxu0 0
        %2625 = vmatmul.mubr.bf16.gmra.mrb[0].mxu0 %v2519
        %v2626 = vpop.f32.mrb[0].mxu0
        %v2627 = vadd.f32 0.0, %v2626
        %v2628 = vpop.f32.mrb[0].mxu0
        %v2629 = vpop.f32.mrb[0].mxu0
        %v2630 = vadd.f32 0.0, %v2629
        %v2631 = vpop.f32.mrb[0].mxu0
        %2632 = vdwg.mxu0
        %v2633 = vadd.f32 %v2308, %v2619
        %v2634 = vadd.f32 %v2309, %v2622
        %v2635 = vadd.f32 %v2310, %v2627
        %v2636 = vadd.f32 %v2311, %v2630
        %v2637 = vld [vmem:[%s903] sm:$0x1]
        %v2639 = vlaneseq
        %v2640 = vshrl.u32 %v2639, 7
        %v2641 = vsub.s32 0, %v2640
        %v2642 = vrot.slane %v2637, %v2641
        %v2644 = vadd.f32 %v2633, %v2642
        %v2645 = vadd.f32 %v2634, %v2642
        %v2646 = vadd.f32 %v2635, %v2642
        %v2647 = vadd.f32 %v2636, %v2642
        %2648 = vst.msk [vmem:[#allocation2] sm:$0xff] %vm1033, %v2644
        %2649 = vst.msk [vmem:[#allocation2 + $0x8] sm:$0xff] %vm1033, %v2645
        %2650 = vst.msk [vmem:[#allocation2 + $0x10] sm:$0xff] %vm1033, %v2646
        %2651 = vst.msk [vmem:[#allocation2 + $0x18] sm:$0xff] %vm1033, %v2647
        %2652 = vst.msk [vmem:[%s840] sm:$0xff] %vm1033, %v2644
        %2653 = vst.msk [vmem:[%s840 + $0x8] sm:$0xff] %vm1033, %v2645
        %2654 = vst.msk [vmem:[%s840 + $0x10] sm:$0xff] %vm1033, %v2646
        %2655 = vst.msk [vmem:[%s840 + $0x18] sm:$0xff] %vm1033, %v2647
        %s2656 = sand.u32 %s564, 1
        %s2657 = scalar_lea.sflag [#allocation4], %s2656
        %s2658 = sand.u32 %s564, 1
        %s2659 = smul.addr %s2658, 32
        %s2660 = scalar_lea.vmem [#allocation3], %s2659
        // Predicated region
        $region109: #{tpu_custom_call.1} parent=103 // pred_check
          %p2661 = pneg %p574
        $region110: #{tpu_custom_call.1} parent=103 // pred_check_branch
          %2663 = sbr.rel (%p2661) target = $region112
        $region111: #{tpu_custom_call.1} parent=103 // pred_region
          %s2665 = ssub.s32 512, 512
          %2666 = vsyncadd %s2657, %s2665
          %s2667 = smul.addr %s35, 4
          %s2668 = smul.addr %s2667, 128
          %s2669 = scalar_lea.hbm %s21, %s2668
          %s2670 = sshll.u32 %s2660, 4
          %s2671 = int_to_ptr.vmem [resolvable:$true] %s2670
          %2676 = dma.vmem_to_hbm [thread:$0]  %s2671, 512, %s2669, %s2657, 128, 128, 8
        $region112: #{tpu_custom_call.1} parent=103 // pred_fallthru
          _
      $region104: #{tpu_custom_call.1} parent=5 // pred_fallthru
        _
      %p2677 = scmp.le.s32.totalorder 2, %s30
      // Predicated region
      $region113: #{tpu_custom_call.1} parent=5 // pred_check
        %p2678 = pneg %p2677
      $region114: #{tpu_custom_call.1} parent=5 // pred_check_branch
        %2680 = sbr.rel (%p2678) target = $region116
      $region115: #{tpu_custom_call.1} parent=5 // pred_region
        %s2681 = ssub.s32 %s30, 2
        // Predicated region
        $region117: #{tpu_custom_call.1} parent=115 // pred_check
          %p2682 = pneg %p580
        $region118: #{tpu_custom_call.1} parent=115 // pred_check_branch
          %2684 = sbr.rel (%p2682) target = $region120
        $region119: #{tpu_custom_call.1} parent=115 // pred_region
          %s2685 = sand.u32 %s565, 1
          %s2686 = scalar_lea.sflag [#allocation4], %s2685
          %s2687 = sand.u32 %s565, 1
          %s2688 = smul.addr %s2687, 32
          %s2689 = scalar_lea.vmem [#allocation3], %s2688
          %2690 = dma.done %s2686, 512
        $region120: #{tpu_custom_call.1} parent=115 // pred_fallthru
          _
      $region116: #{tpu_custom_call.1} parent=5 // pred_fallthru
        _
    $region6: #{tpu_custom_call.1} parent=1 // loop_footer
      %s34 = sadd.s32 1, %s30
    $region7: #{tpu_custom_call.1} parent=1 // loop_footer_branch
      %29 = sbr.rel target = $region3
    $region8: #{tpu_custom_call.1} parent=1 // loop_exit
      _
    %2691 = vsyncpa [#allocation4], 1
    %s2692 = scalar_lea.sflag [#allocation4], 1
    %2693 = vsyncpa %s2692, 1

</llo_original>
